<compile_context>
chip_gen: v5e
topology: v5e:2x2
jax: 0.10.0
libtpu: 0.0.40
codegen_flags: <defaults>
</compile_context>

<pallas_src>
import functools
import math

import jax
import jax.numpy as jnp
from jax.experimental import pallas as pl
from jax.experimental.pallas import tpu as pltpu


# -----------------------------------------------------------------------------
# Fused kernel
# -----------------------------------------------------------------------------

def _layernorm(x, gamma, beta, eps=1e-5):
    mean = jnp.mean(x, axis=-1, keepdims=True)
    var = jnp.mean(jnp.square(x - mean), axis=-1, keepdims=True)
    return (x - mean) * jax.lax.rsqrt(var + eps) * gamma + beta


def _fused_obs_transformer_kernel(
    x_ref,                       # (1, S, IN)  bf16
    enc_w_ref, enc_b_ref,        # (IN, D) bf16, (1, D) f32
    w_in_ref, b_in_ref,          # (L, D, 3D) bf16, (L, 1, 3D) f32
    w_o_ref, b_o_ref,            # (L, D, D)  bf16, (L, 1, D)  f32
    w1_ref, b1_ref,              # (L, D, F)  bf16, (L, 1, F)  f32
    w2_ref, b2_ref,              # (L, F, D)  bf16, (L, 1, D)  f32
    g1_ref, be1_ref,             # (L, 1, D) f32
    g2_ref, be2_ref,             # (L, 1, D) f32
    dec_w_ref, dec_b_ref,        # (D, O) bf16, (1, O) f32
    o_ref,                       # (1, 1, O) f32
    *, nhead, num_layers):
    S = x_ref.shape[1]
    D = enc_w_ref.shape[1]
    Dh = D // nhead
    scale = 1.0 / math.sqrt(Dh)

    def linear(x, w_bf16, b_f32, relu=False):
        y = jnp.dot(x.astype(jnp.bfloat16), w_bf16,
                    preferred_element_type=jnp.float32) + b_f32
        if relu:
            y = jnp.maximum(y, 0.0)
        return y

    # ---- encoder: Flatten + Linear ------------------------------------------
    h = linear(x_ref[0], enc_w_ref[...], enc_b_ref[...])          # (S, D) f32

    # ---- transformer encoder layers (post-norm, ReLU FFN) --------------------
    for li in range(num_layers):
        w_in = w_in_ref[li]                                        # (D, 3D) bf16
        w_o = w_o_ref[li]                                          # (D, D)  bf16
        qkv = linear(h, w_in, b_in_ref[li])                        # (S, 3D) f32

        # per-head attention; out-projection folded into the head loop so the
        # head outputs are never concatenated (stays lane-dense at width D).
        attn_acc = jnp.zeros((S, D), jnp.float32)
        for hd in range(nhead):
            lo = hd * Dh
            qh = qkv[:, lo:lo + Dh]                                # (S, Dh)
            kh = qkv[:, D + lo:D + lo + Dh]                        # (S, Dh)
            vh = qkv[:, 2 * D + lo:2 * D + lo + Dh]                # (S, Dh)
            s = jnp.dot(qh, kh.T,
                        preferred_element_type=jnp.float32) * scale  # (S, S)
            m = jnp.max(s, axis=-1, keepdims=True)
            p = jnp.exp(s - m)
            l = jnp.sum(p, axis=-1, keepdims=True)
            p = p * pl.reciprocal(l, approx=True)
            ctx = jnp.dot(p, vh, preferred_element_type=jnp.float32)  # (S, Dh)
            attn_acc = attn_acc + jnp.dot(
                ctx.astype(jnp.bfloat16), w_o[lo:lo + Dh, :],
                preferred_element_type=jnp.float32)                # (S, D)
        attn_out = attn_acc + b_o_ref[li]

        h = _layernorm(h + attn_out, g1_ref[li], be1_ref[li])      # residual + LN1

        ff = linear(h, w1_ref[li], b1_ref[li], relu=True)          # (S, F)
        ff = linear(ff, w2_ref[li], b2_ref[li])                    # (S, D)
        h = _layernorm(h + ff, g2_ref[li], be2_ref[li])            # residual + LN2

    # ---- decoder + mean over sequence (fused, no HBM intermediate) ----------
    dec = linear(h, dec_w_ref[...], dec_b_ref[...])                # (S, O)
    o_ref[0] = jnp.mean(dec, axis=0, keepdims=True)                # (1, O)


# -----------------------------------------------------------------------------
# Wrapper
# -----------------------------------------------------------------------------

def _replicated_spec(shape):
    zeros = (0,) * len(shape)
    return pl.BlockSpec(shape, lambda b: zeros)


def observation_transformer_forward(x, params, *, nhead):
    B, S, C, R, R2 = x.shape
    assert R == R2
    in_features = C * R * R
    D = params["enc_w"].shape[1]
    O = params["dec_w"].shape[1]
    num_layers = params["w_in"].shape[0]
    assert D % nhead == 0

    # layout: NCHW frame flattened channel-major == torch .reshape of NCHW
    tokens = x.reshape(B, S, in_features).astype(jnp.bfloat16)

    weight_names = ["enc_w", "enc_b", "w_in", "b_in", "w_o", "b_o",
                    "w1", "b1", "w2", "b2", "g1", "be1", "g2", "be2",
                    "dec_w", "dec_b"]
    weight_args = [params[n] for n in weight_names]

    in_specs = [pl.BlockSpec((1, S, in_features), lambda b: (b, 0, 0))]
    in_specs += [_replicated_spec(w.shape) for w in weight_args]

    kernel = functools.partial(_fused_obs_transformer_kernel,
                               nhead=nhead, num_layers=num_layers)

    out = pl.pallas_call(
        kernel,
        out_shape=jax.ShapeDtypeStruct((B, 1, O), jnp.float32),
        grid_spec=pltpu.PrefetchScalarGridSpec(
            num_scalar_prefetch=0,
            grid=(B,),
            in_specs=in_specs,
            out_specs=pl.BlockSpec((1, 1, O), lambda b: (b, 0, 0)),
        ),
        compiler_params=pltpu.CompilerParams(
            dimension_semantics=("parallel",)),
    )(tokens, *weight_args)
    return out.reshape(B, O)


# -----------------------------------------------------------------------------
# Parameter init (weights bf16 for the MXU, biases / LN params f32)
# -----------------------------------------------------------------------------

def init_params(key, in_features, feature_dim, ff_dim, output_size,
                num_layers=3):
    D, F, O, L = feature_dim, ff_dim, output_size, num_layers

    def w(k, shape):
        return (jax.random.normal(k, shape, jnp.float32) * 0.02).astype(
            jnp.bfloat16)

    k_enc, k_dec, k_in, k_o, k_1, k_2 = jax.random.split(key, 6)
    return dict(
        enc_w=w(k_enc, (in_features, D)),
        enc_b=jnp.zeros((1, D), jnp.float32),
        dec_w=w(k_dec, (D, O)),
        dec_b=jnp.zeros((1, O), jnp.float32),
        w_in=w(k_in, (L, D, 3 * D)),          # fused QKV projection per layer
        b_in=jnp.zeros((L, 1, 3 * D), jnp.float32),
        w_o=w(k_o, (L, D, D)),
        b_o=jnp.zeros((L, 1, D), jnp.float32),
        w1=w(k_1, (L, D, F)),
        b1=jnp.zeros((L, 1, F), jnp.float32),
        w2=w(k_2, (L, F, D)),
        b2=jnp.zeros((L, 1, D), jnp.float32),
        g1=jnp.ones((L, 1, D), jnp.float32),
        be1=jnp.zeros((L, 1, D), jnp.float32),
        g2=jnp.ones((L, 1, D), jnp.float32),
        be2=jnp.zeros((L, 1, D), jnp.float32),
    )


# -----------------------------------------------------------------------------
# Demo
# -----------------------------------------------------------------------------

if __name__ == "__main__":
    # Small, TPU-friendly hyper-params (module defaults 1000/10/2048 are scaled
    # down & 128-aligned; the forward math is identical).
    B, S, C, R = 2, 8, 4, 16
    feature_dim, nhead, ff_dim, output_size = 128, 4, 256, 128

    key = jax.random.PRNGKey(0)
    kx, kp = jax.random.split(key)
    x = jax.random.normal(kx, (B, S, C, R, R), jnp.float32)

    params = init_params(kp, C * R * R, feature_dim, ff_dim, output_size)

    fwd = jax.jit(functools.partial(observation_transformer_forward,
                                    nhead=nhead))

    out = fwd(x, params)
    jax.block_until_ready(out)
    assert out.shape == (B, output_size), out.shape
    assert jnp.all(jnp.isfinite(out))
    print("KERNEL_OK")
</pallas_src>

<mosaic_0001>
module attributes {stable_mosaic.version = 11 : i64} {
  func.func @_fused_obs_transformer_kernel(%arg0: i32, %arg1: memref<1x8x1024xbf16, #tpu.memory_space<vmem>>, %arg2: memref<1024x128xbf16, #tpu.memory_space<vmem>>, %arg3: memref<1x128xf32, #tpu.memory_space<vmem>>, %arg4: memref<3x128x384xbf16, #tpu.memory_space<vmem>>, %arg5: memref<3x1x384xf32, #tpu.memory_space<vmem>>, %arg6: memref<3x128x128xbf16, #tpu.memory_space<vmem>>, %arg7: memref<3x1x128xf32, #tpu.memory_space<vmem>>, %arg8: memref<3x128x256xbf16, #tpu.memory_space<vmem>>, %arg9: memref<3x1x256xf32, #tpu.memory_space<vmem>>, %arg10: memref<3x256x128xbf16, #tpu.memory_space<vmem>>, %arg11: memref<3x1x128xf32, #tpu.memory_space<vmem>>, %arg12: memref<3x1x128xf32, #tpu.memory_space<vmem>>, %arg13: memref<3x1x128xf32, #tpu.memory_space<vmem>>, %arg14: memref<3x1x128xf32, #tpu.memory_space<vmem>>, %arg15: memref<3x1x128xf32, #tpu.memory_space<vmem>>, %arg16: memref<128x128xbf16, #tpu.memory_space<vmem>>, %arg17: memref<1x128xf32, #tpu.memory_space<vmem>>, %arg18: memref<1x1x128xf32, #tpu.memory_space<vmem>>) attributes {dimension_semantics = [#tpu.dimension_semantics<parallel>], iteration_bounds = array<i64: 2>, scalar_prefetch = 0 : i64, scratch_operands = 0 : i64, tpu.core_type = #tpu.core_type<tc>, window_params = [{transform_indices = @transform_0, window_bounds = array<i64: 1, 8, 1024>}, {pipeline_mode = #tpu.pipeline_mode<synchronous>, transform_indices = @transform_1, window_bounds = array<i64: 1024, 128>}, {pipeline_mode = #tpu.pipeline_mode<synchronous>, transform_indices = @transform_2, window_bounds = array<i64: 1, 128>}, {pipeline_mode = #tpu.pipeline_mode<synchronous>, transform_indices = @transform_3, window_bounds = array<i64: 3, 128, 384>}, {pipeline_mode = #tpu.pipeline_mode<synchronous>, transform_indices = @transform_4, window_bounds = array<i64: 3, 1, 384>}, {pipeline_mode = #tpu.pipeline_mode<synchronous>, transform_indices = @transform_5, window_bounds = array<i64: 3, 128, 128>}, {pipeline_mode = #tpu.pipeline_mode<synchronous>, transform_indices = @transform_6, window_bounds = array<i64: 3, 1, 128>}, {pipeline_mode = #tpu.pipeline_mode<synchronous>, transform_indices = @transform_7, window_bounds = array<i64: 3, 128, 256>}, {pipeline_mode = #tpu.pipeline_mode<synchronous>, transform_indices = @transform_8, window_bounds = array<i64: 3, 1, 256>}, {pipeline_mode = #tpu.pipeline_mode<synchronous>, transform_indices = @transform_9, window_bounds = array<i64: 3, 256, 128>}, {pipeline_mode = #tpu.pipeline_mode<synchronous>, transform_indices = @transform_10, window_bounds = array<i64: 3, 1, 128>}, {pipeline_mode = #tpu.pipeline_mode<synchronous>, transform_indices = @transform_11, window_bounds = array<i64: 3, 1, 128>}, {pipeline_mode = #tpu.pipeline_mode<synchronous>, transform_indices = @transform_12, window_bounds = array<i64: 3, 1, 128>}, {pipeline_mode = #tpu.pipeline_mode<synchronous>, transform_indices = @transform_13, window_bounds = array<i64: 3, 1, 128>}, {pipeline_mode = #tpu.pipeline_mode<synchronous>, transform_indices = @transform_14, window_bounds = array<i64: 3, 1, 128>}, {pipeline_mode = #tpu.pipeline_mode<synchronous>, transform_indices = @transform_15, window_bounds = array<i64: 128, 128>}, {pipeline_mode = #tpu.pipeline_mode<synchronous>, transform_indices = @transform_16, window_bounds = array<i64: 1, 128>}, {transform_indices = @transform_17, window_bounds = array<i64: 1, 1, 128>}]} {
    %c0 = arith.constant 0 : index
    %c0_0 = arith.constant 0 : index
    %c0_1 = arith.constant 0 : index
    %0 = vector.load %arg1[%c0, %c0_0, %c0_1] : memref<1x8x1024xbf16, #tpu.memory_space<vmem>>, vector<1x8x1024xbf16>
    %1 = vector.shape_cast %0 : vector<1x8x1024xbf16> to vector<8x1024xbf16>
    %c0_2 = arith.constant 0 : index
    %c0_3 = arith.constant 0 : index
    %2 = vector.load %arg2[%c0_2, %c0_3] : memref<1024x128xbf16, #tpu.memory_space<vmem>>, vector<1024x128xbf16>
    %c0_4 = arith.constant 0 : index
    %c0_5 = arith.constant 0 : index
    %3 = vector.load %arg3[%c0_4, %c0_5] : memref<1x128xf32, #tpu.memory_space<vmem>>, vector<1x128xf32>
    %cst = arith.constant dense<0.000000e+00> : vector<8x128xf32>
    %4 = tpu.matmul %1, %2, %cst {dimension_numbers = #tpu.dot_dimension_numbers<[1], [0], [0], [1], [0, 0, 1, 1], [], []>} : vector<8x1024xbf16>, vector<1024x128xbf16>, vector<8x128xf32> -> vector<8x128xf32>
    %5 = vector.broadcast %3 : vector<1x128xf32> to vector<8x128xf32>
    %6 = arith.addf %4, %5 : vector<8x128xf32>
    %c0_6 = arith.constant 0 : index
    %c0_7 = arith.constant 0 : index
    %c0_8 = arith.constant 0 : index
    %7 = vector.load %arg4[%c0_6, %c0_7, %c0_8] : memref<3x128x384xbf16, #tpu.memory_space<vmem>>, vector<1x128x384xbf16>
    %8 = vector.shape_cast %7 : vector<1x128x384xbf16> to vector<128x384xbf16>
    %c0_9 = arith.constant 0 : index
    %c0_10 = arith.constant 0 : index
    %c0_11 = arith.constant 0 : index
    %9 = vector.load %arg6[%c0_9, %c0_10, %c0_11] : memref<3x128x128xbf16, #tpu.memory_space<vmem>>, vector<1x128x128xbf16>
    %10 = vector.shape_cast %9 : vector<1x128x128xbf16> to vector<128x128xbf16>
    %c0_12 = arith.constant 0 : index
    %c0_13 = arith.constant 0 : index
    %c0_14 = arith.constant 0 : index
    %11 = vector.load %arg5[%c0_12, %c0_13, %c0_14] : memref<3x1x384xf32, #tpu.memory_space<vmem>>, vector<1x1x384xf32>
    %12 = vector.shape_cast %11 : vector<1x1x384xf32> to vector<1x384xf32>
    %13 = arith.truncf %6 : vector<8x128xf32> to vector<8x128xbf16>
    %cst_15 = arith.constant dense<0.000000e+00> : vector<8x384xf32>
    %14 = tpu.matmul %13, %8, %cst_15 {dimension_numbers = #tpu.dot_dimension_numbers<[1], [0], [0], [1], [0, 0, 1, 1], [], []>} : vector<8x128xbf16>, vector<128x384xbf16>, vector<8x384xf32> -> vector<8x384xf32>
    %15 = vector.broadcast %12 : vector<1x384xf32> to vector<8x384xf32>
    %16 = arith.addf %14, %15 : vector<8x384xf32>
    %cst_16 = arith.constant 0.000000e+00 : f32
    %17 = vector.broadcast %cst_16 : f32 to vector<8x128xf32>
    %18 = vector.extract_strided_slice %16 {offsets = [0, 0], sizes = [8, 32], strides = [1, 1]} : vector<8x384xf32> to vector<8x32xf32>
    %19 = vector.extract_strided_slice %16 {offsets = [0, 128], sizes = [8, 32], strides = [1, 1]} : vector<8x384xf32> to vector<8x32xf32>
    %20 = vector.extract_strided_slice %16 {offsets = [0, 256], sizes = [8, 32], strides = [1, 1]} : vector<8x384xf32> to vector<8x32xf32>
    %21 = tpu.transpose %19, [1, 0] : vector<8x32xf32> -> vector<32x8xf32>
    %cst_17 = arith.constant dense<0.000000e+00> : vector<8x8xf32>
    %22 = tpu.matmul %18, %21, %cst_17 {dimension_numbers = #tpu.dot_dimension_numbers<[1], [0], [0], [1], [0, 0, 1, 1], [], []>} : vector<8x32xf32>, vector<32x8xf32>, vector<8x8xf32> -> vector<8x8xf32>
    %cst_18 = arith.constant 0.176776692 : f32
    %23 = vector.broadcast %cst_18 : f32 to vector<8x8xf32>
    %24 = arith.mulf %22, %23 : vector<8x8xf32>
    %cst_19 = arith.constant dense<0xFF800000> : vector<8xf32>
    %25 = vector.multi_reduction <maximumf>, %24, %cst_19 [1] : vector<8x8xf32> to vector<8xf32>
    %26 = vector.shape_cast %25 : vector<8xf32> to vector<8x1xf32>
    %27 = vector.broadcast %26 : vector<8x1xf32> to vector<8x8xf32>
    %28 = arith.subf %24, %27 : vector<8x8xf32>
    %29 = math.exp %28 : vector<8x8xf32>
    %cst_20 = arith.constant dense<0.000000e+00> : vector<8xf32>
    %30 = vector.multi_reduction <add>, %29, %cst_20 [1] : vector<8x8xf32> to vector<8xf32>
    %31 = vector.shape_cast %30 : vector<8xf32> to vector<8x1xf32>
    %32 = tpu.reciprocal %31 {approx = true} : vector<8x1xf32> -> vector<8x1xf32>
    %33 = vector.broadcast %32 : vector<8x1xf32> to vector<8x8xf32>
    %34 = arith.mulf %29, %33 : vector<8x8xf32>
    %cst_21 = arith.constant dense<0.000000e+00> : vector<8x32xf32>
    %35 = tpu.matmul %34, %20, %cst_21 {dimension_numbers = #tpu.dot_dimension_numbers<[1], [0], [0], [1], [0, 0, 1, 1], [], []>} : vector<8x8xf32>, vector<8x32xf32>, vector<8x32xf32> -> vector<8x32xf32>
    %36 = arith.truncf %35 : vector<8x32xf32> to vector<8x32xbf16>
    %37 = vector.extract_strided_slice %10 {offsets = [0, 0], sizes = [32, 128], strides = [1, 1]} : vector<128x128xbf16> to vector<32x128xbf16>
    %cst_22 = arith.constant dense<0.000000e+00> : vector<8x128xf32>
    %38 = tpu.matmul %36, %37, %cst_22 {dimension_numbers = #tpu.dot_dimension_numbers<[1], [0], [0], [1], [0, 0, 1, 1], [], []>} : vector<8x32xbf16>, vector<32x128xbf16>, vector<8x128xf32> -> vector<8x128xf32>
    %39 = arith.addf %17, %38 : vector<8x128xf32>
    %40 = vector.extract_strided_slice %16 {offsets = [0, 32], sizes = [8, 32], strides = [1, 1]} : vector<8x384xf32> to vector<8x32xf32>
    %41 = vector.extract_strided_slice %16 {offsets = [0, 160], sizes = [8, 32], strides = [1, 1]} : vector<8x384xf32> to vector<8x32xf32>
    %42 = vector.extract_strided_slice %16 {offsets = [0, 288], sizes = [8, 32], strides = [1, 1]} : vector<8x384xf32> to vector<8x32xf32>
    %43 = tpu.transpose %41, [1, 0] : vector<8x32xf32> -> vector<32x8xf32>
    %cst_23 = arith.constant dense<0.000000e+00> : vector<8x8xf32>
    %44 = tpu.matmul %40, %43, %cst_23 {dimension_numbers = #tpu.dot_dimension_numbers<[1], [0], [0], [1], [0, 0, 1, 1], [], []>} : vector<8x32xf32>, vector<32x8xf32>, vector<8x8xf32> -> vector<8x8xf32>
    %cst_24 = arith.constant 0.176776692 : f32
    %45 = vector.broadcast %cst_24 : f32 to vector<8x8xf32>
    %46 = arith.mulf %44, %45 : vector<8x8xf32>
    %cst_25 = arith.constant dense<0xFF800000> : vector<8xf32>
    %47 = vector.multi_reduction <maximumf>, %46, %cst_25 [1] : vector<8x8xf32> to vector<8xf32>
    %48 = vector.shape_cast %47 : vector<8xf32> to vector<8x1xf32>
    %49 = vector.broadcast %48 : vector<8x1xf32> to vector<8x8xf32>
    %50 = arith.subf %46, %49 : vector<8x8xf32>
    %51 = math.exp %50 : vector<8x8xf32>
    %cst_26 = arith.constant dense<0.000000e+00> : vector<8xf32>
    %52 = vector.multi_reduction <add>, %51, %cst_26 [1] : vector<8x8xf32> to vector<8xf32>
    %53 = vector.shape_cast %52 : vector<8xf32> to vector<8x1xf32>
    %54 = tpu.reciprocal %53 {approx = true} : vector<8x1xf32> -> vector<8x1xf32>
    %55 = vector.broadcast %54 : vector<8x1xf32> to vector<8x8xf32>
    %56 = arith.mulf %51, %55 : vector<8x8xf32>
    %cst_27 = arith.constant dense<0.000000e+00> : vector<8x32xf32>
    %57 = tpu.matmul %56, %42, %cst_27 {dimension_numbers = #tpu.dot_dimension_numbers<[1], [0], [0], [1], [0, 0, 1, 1], [], []>} : vector<8x8xf32>, vector<8x32xf32>, vector<8x32xf32> -> vector<8x32xf32>
    %58 = arith.truncf %57 : vector<8x32xf32> to vector<8x32xbf16>
    %59 = vector.extract_strided_slice %10 {offsets = [32, 0], sizes = [32, 128], strides = [1, 1]} : vector<128x128xbf16> to vector<32x128xbf16>
    %cst_28 = arith.constant dense<0.000000e+00> : vector<8x128xf32>
    %60 = tpu.matmul %58, %59, %cst_28 {dimension_numbers = #tpu.dot_dimension_numbers<[1], [0], [0], [1], [0, 0, 1, 1], [], []>} : vector<8x32xbf16>, vector<32x128xbf16>, vector<8x128xf32> -> vector<8x128xf32>
    %61 = arith.addf %39, %60 : vector<8x128xf32>
    %62 = vector.extract_strided_slice %16 {offsets = [0, 64], sizes = [8, 32], strides = [1, 1]} : vector<8x384xf32> to vector<8x32xf32>
    %63 = vector.extract_strided_slice %16 {offsets = [0, 192], sizes = [8, 32], strides = [1, 1]} : vector<8x384xf32> to vector<8x32xf32>
    %64 = vector.extract_strided_slice %16 {offsets = [0, 320], sizes = [8, 32], strides = [1, 1]} : vector<8x384xf32> to vector<8x32xf32>
    %65 = tpu.transpose %63, [1, 0] : vector<8x32xf32> -> vector<32x8xf32>
    %cst_29 = arith.constant dense<0.000000e+00> : vector<8x8xf32>
    %66 = tpu.matmul %62, %65, %cst_29 {dimension_numbers = #tpu.dot_dimension_numbers<[1], [0], [0], [1], [0, 0, 1, 1], [], []>} : vector<8x32xf32>, vector<32x8xf32>, vector<8x8xf32> -> vector<8x8xf32>
    %cst_30 = arith.constant 0.176776692 : f32
    %67 = vector.broadcast %cst_30 : f32 to vector<8x8xf32>
    %68 = arith.mulf %66, %67 : vector<8x8xf32>
    %cst_31 = arith.constant dense<0xFF800000> : vector<8xf32>
    %69 = vector.multi_reduction <maximumf>, %68, %cst_31 [1] : vector<8x8xf32> to vector<8xf32>
    %70 = vector.shape_cast %69 : vector<8xf32> to vector<8x1xf32>
    %71 = vector.broadcast %70 : vector<8x1xf32> to vector<8x8xf32>
    %72 = arith.subf %68, %71 : vector<8x8xf32>
    %73 = math.exp %72 : vector<8x8xf32>
    %cst_32 = arith.constant dense<0.000000e+00> : vector<8xf32>
    %74 = vector.multi_reduction <add>, %73, %cst_32 [1] : vector<8x8xf32> to vector<8xf32>
    %75 = vector.shape_cast %74 : vector<8xf32> to vector<8x1xf32>
    %76 = tpu.reciprocal %75 {approx = true} : vector<8x1xf32> -> vector<8x1xf32>
    %77 = vector.broadcast %76 : vector<8x1xf32> to vector<8x8xf32>
    %78 = arith.mulf %73, %77 : vector<8x8xf32>
    %cst_33 = arith.constant dense<0.000000e+00> : vector<8x32xf32>
    %79 = tpu.matmul %78, %64, %cst_33 {dimension_numbers = #tpu.dot_dimension_numbers<[1], [0], [0], [1], [0, 0, 1, 1], [], []>} : vector<8x8xf32>, vector<8x32xf32>, vector<8x32xf32> -> vector<8x32xf32>
    %80 = arith.truncf %79 : vector<8x32xf32> to vector<8x32xbf16>
    %81 = vector.extract_strided_slice %10 {offsets = [64, 0], sizes = [32, 128], strides = [1, 1]} : vector<128x128xbf16> to vector<32x128xbf16>
    %cst_34 = arith.constant dense<0.000000e+00> : vector<8x128xf32>
    %82 = tpu.matmul %80, %81, %cst_34 {dimension_numbers = #tpu.dot_dimension_numbers<[1], [0], [0], [1], [0, 0, 1, 1], [], []>} : vector<8x32xbf16>, vector<32x128xbf16>, vector<8x128xf32> -> vector<8x128xf32>
    %83 = arith.addf %61, %82 : vector<8x128xf32>
    %84 = vector.extract_strided_slice %16 {offsets = [0, 96], sizes = [8, 32], strides = [1, 1]} : vector<8x384xf32> to vector<8x32xf32>
    %85 = vector.extract_strided_slice %16 {offsets = [0, 224], sizes = [8, 32], strides = [1, 1]} : vector<8x384xf32> to vector<8x32xf32>
    %86 = vector.extract_strided_slice %16 {offsets = [0, 352], sizes = [8, 32], strides = [1, 1]} : vector<8x384xf32> to vector<8x32xf32>
    %87 = tpu.transpose %85, [1, 0] : vector<8x32xf32> -> vector<32x8xf32>
    %cst_35 = arith.constant dense<0.000000e+00> : vector<8x8xf32>
    %88 = tpu.matmul %84, %87, %cst_35 {dimension_numbers = #tpu.dot_dimension_numbers<[1], [0], [0], [1], [0, 0, 1, 1], [], []>} : vector<8x32xf32>, vector<32x8xf32>, vector<8x8xf32> -> vector<8x8xf32>
    %cst_36 = arith.constant 0.176776692 : f32
    %89 = vector.broadcast %cst_36 : f32 to vector<8x8xf32>
    %90 = arith.mulf %88, %89 : vector<8x8xf32>
    %cst_37 = arith.constant dense<0xFF800000> : vector<8xf32>
    %91 = vector.multi_reduction <maximumf>, %90, %cst_37 [1] : vector<8x8xf32> to vector<8xf32>
    %92 = vector.shape_cast %91 : vector<8xf32> to vector<8x1xf32>
    %93 = vector.broadcast %92 : vector<8x1xf32> to vector<8x8xf32>
    %94 = arith.subf %90, %93 : vector<8x8xf32>
    %95 = math.exp %94 : vector<8x8xf32>
    %cst_38 = arith.constant dense<0.000000e+00> : vector<8xf32>
    %96 = vector.multi_reduction <add>, %95, %cst_38 [1] : vector<8x8xf32> to vector<8xf32>
    %97 = vector.shape_cast %96 : vector<8xf32> to vector<8x1xf32>
    %98 = tpu.reciprocal %97 {approx = true} : vector<8x1xf32> -> vector<8x1xf32>
    %99 = vector.broadcast %98 : vector<8x1xf32> to vector<8x8xf32>
    %100 = arith.mulf %95, %99 : vector<8x8xf32>
    %cst_39 = arith.constant dense<0.000000e+00> : vector<8x32xf32>
    %101 = tpu.matmul %100, %86, %cst_39 {dimension_numbers = #tpu.dot_dimension_numbers<[1], [0], [0], [1], [0, 0, 1, 1], [], []>} : vector<8x8xf32>, vector<8x32xf32>, vector<8x32xf32> -> vector<8x32xf32>
    %102 = arith.truncf %101 : vector<8x32xf32> to vector<8x32xbf16>
    %103 = vector.extract_strided_slice %10 {offsets = [96, 0], sizes = [32, 128], strides = [1, 1]} : vector<128x128xbf16> to vector<32x128xbf16>
    %cst_40 = arith.constant dense<0.000000e+00> : vector<8x128xf32>
    %104 = tpu.matmul %102, %103, %cst_40 {dimension_numbers = #tpu.dot_dimension_numbers<[1], [0], [0], [1], [0, 0, 1, 1], [], []>} : vector<8x32xbf16>, vector<32x128xbf16>, vector<8x128xf32> -> vector<8x128xf32>
    %105 = arith.addf %83, %104 : vector<8x128xf32>
    %c0_41 = arith.constant 0 : index
    %c0_42 = arith.constant 0 : index
    %c0_43 = arith.constant 0 : index
    %106 = vector.load %arg7[%c0_41, %c0_42, %c0_43] : memref<3x1x128xf32, #tpu.memory_space<vmem>>, vector<1x1x128xf32>
    %107 = vector.shape_cast %106 : vector<1x1x128xf32> to vector<1x128xf32>
    %108 = vector.broadcast %107 : vector<1x128xf32> to vector<8x128xf32>
    %109 = arith.addf %105, %108 : vector<8x128xf32>
    %110 = arith.addf %6, %109 : vector<8x128xf32>
    %c0_44 = arith.constant 0 : index
    %c0_45 = arith.constant 0 : index
    %c0_46 = arith.constant 0 : index
    %111 = vector.load %arg12[%c0_44, %c0_45, %c0_46] : memref<3x1x128xf32, #tpu.memory_space<vmem>>, vector<1x1x128xf32>
    %112 = vector.shape_cast %111 : vector<1x1x128xf32> to vector<1x128xf32>
    %c0_47 = arith.constant 0 : index
    %c0_48 = arith.constant 0 : index
    %c0_49 = arith.constant 0 : index
    %113 = vector.load %arg13[%c0_47, %c0_48, %c0_49] : memref<3x1x128xf32, #tpu.memory_space<vmem>>, vector<1x1x128xf32>
    %114 = vector.shape_cast %113 : vector<1x1x128xf32> to vector<1x128xf32>
    %cst_50 = arith.constant dense<0.000000e+00> : vector<8xf32>
    %115 = vector.multi_reduction <add>, %110, %cst_50 [1] : vector<8x128xf32> to vector<8xf32>
    %116 = vector.shape_cast %115 : vector<8xf32> to vector<8x1xf32>
    %cst_51 = arith.constant 1.280000e+02 : f32
    %117 = vector.broadcast %cst_51 : f32 to vector<8x1xf32>
    %118 = arith.divf %116, %117 : vector<8x1xf32>
    %119 = vector.broadcast %118 : vector<8x1xf32> to vector<8x128xf32>
    %120 = arith.subf %110, %119 : vector<8x128xf32>
    %121 = arith.mulf %120, %120 : vector<8x128xf32>
    %cst_52 = arith.constant dense<0.000000e+00> : vector<8xf32>
    %122 = vector.multi_reduction <add>, %121, %cst_52 [1] : vector<8x128xf32> to vector<8xf32>
    %123 = vector.shape_cast %122 : vector<8xf32> to vector<8x1xf32>
    %cst_53 = arith.constant 1.280000e+02 : f32
    %124 = vector.broadcast %cst_53 : f32 to vector<8x1xf32>
    %125 = arith.divf %123, %124 : vector<8x1xf32>
    %126 = vector.broadcast %118 : vector<8x1xf32> to vector<8x128xf32>
    %127 = arith.subf %110, %126 : vector<8x128xf32>
    %cst_54 = arith.constant 9.99999974E-6 : f32
    %128 = vector.broadcast %cst_54 : f32 to vector<8x1xf32>
    %129 = arith.addf %125, %128 : vector<8x1xf32>
    %130 = math.rsqrt %129 : vector<8x1xf32>
    %131 = vector.broadcast %130 : vector<8x1xf32> to vector<8x128xf32>
    %132 = arith.mulf %127, %131 : vector<8x128xf32>
    %133 = vector.broadcast %112 : vector<1x128xf32> to vector<8x128xf32>
    %134 = arith.mulf %132, %133 : vector<8x128xf32>
    %135 = vector.broadcast %114 : vector<1x128xf32> to vector<8x128xf32>
    %136 = arith.addf %134, %135 : vector<8x128xf32>
    %c0_55 = arith.constant 0 : index
    %c0_56 = arith.constant 0 : index
    %c0_57 = arith.constant 0 : index
    %137 = vector.load %arg8[%c0_55, %c0_56, %c0_57] : memref<3x128x256xbf16, #tpu.memory_space<vmem>>, vector<1x128x256xbf16>
    %138 = vector.shape_cast %137 : vector<1x128x256xbf16> to vector<128x256xbf16>
    %c0_58 = arith.constant 0 : index
    %c0_59 = arith.constant 0 : index
    %c0_60 = arith.constant 0 : index
    %139 = vector.load %arg9[%c0_58, %c0_59, %c0_60] : memref<3x1x256xf32, #tpu.memory_space<vmem>>, vector<1x1x256xf32>
    %140 = vector.shape_cast %139 : vector<1x1x256xf32> to vector<1x256xf32>
    %141 = arith.truncf %136 : vector<8x128xf32> to vector<8x128xbf16>
    %cst_61 = arith.constant dense<0.000000e+00> : vector<8x256xf32>
    %142 = tpu.matmul %141, %138, %cst_61 {dimension_numbers = #tpu.dot_dimension_numbers<[1], [0], [0], [1], [0, 0, 1, 1], [], []>} : vector<8x128xbf16>, vector<128x256xbf16>, vector<8x256xf32> -> vector<8x256xf32>
    %143 = vector.broadcast %140 : vector<1x256xf32> to vector<8x256xf32>
    %144 = arith.addf %142, %143 : vector<8x256xf32>
    %cst_62 = arith.constant 0.000000e+00 : f32
    %145 = vector.broadcast %cst_62 : f32 to vector<8x256xf32>
    %146 = arith.maximumf %144, %145 : vector<8x256xf32>
    %c0_63 = arith.constant 0 : index
    %c0_64 = arith.constant 0 : index
    %c0_65 = arith.constant 0 : index
    %147 = vector.load %arg10[%c0_63, %c0_64, %c0_65] : memref<3x256x128xbf16, #tpu.memory_space<vmem>>, vector<1x256x128xbf16>
    %148 = vector.shape_cast %147 : vector<1x256x128xbf16> to vector<256x128xbf16>
    %c0_66 = arith.constant 0 : index
    %c0_67 = arith.constant 0 : index
    %c0_68 = arith.constant 0 : index
    %149 = vector.load %arg11[%c0_66, %c0_67, %c0_68] : memref<3x1x128xf32, #tpu.memory_space<vmem>>, vector<1x1x128xf32>
    %150 = vector.shape_cast %149 : vector<1x1x128xf32> to vector<1x128xf32>
    %151 = arith.truncf %146 : vector<8x256xf32> to vector<8x256xbf16>
    %cst_69 = arith.constant dense<0.000000e+00> : vector<8x128xf32>
    %152 = tpu.matmul %151, %148, %cst_69 {dimension_numbers = #tpu.dot_dimension_numbers<[1], [0], [0], [1], [0, 0, 1, 1], [], []>} : vector<8x256xbf16>, vector<256x128xbf16>, vector<8x128xf32> -> vector<8x128xf32>
    %153 = vector.broadcast %150 : vector<1x128xf32> to vector<8x128xf32>
    %154 = arith.addf %152, %153 : vector<8x128xf32>
    %155 = arith.addf %136, %154 : vector<8x128xf32>
    %c0_70 = arith.constant 0 : index
    %c0_71 = arith.constant 0 : index
    %c0_72 = arith.constant 0 : index
    %156 = vector.load %arg14[%c0_70, %c0_71, %c0_72] : memref<3x1x128xf32, #tpu.memory_space<vmem>>, vector<1x1x128xf32>
    %157 = vector.shape_cast %156 : vector<1x1x128xf32> to vector<1x128xf32>
    %c0_73 = arith.constant 0 : index
    %c0_74 = arith.constant 0 : index
    %c0_75 = arith.constant 0 : index
    %158 = vector.load %arg15[%c0_73, %c0_74, %c0_75] : memref<3x1x128xf32, #tpu.memory_space<vmem>>, vector<1x1x128xf32>
    %159 = vector.shape_cast %158 : vector<1x1x128xf32> to vector<1x128xf32>
    %cst_76 = arith.constant dense<0.000000e+00> : vector<8xf32>
    %160 = vector.multi_reduction <add>, %155, %cst_76 [1] : vector<8x128xf32> to vector<8xf32>
    %161 = vector.shape_cast %160 : vector<8xf32> to vector<8x1xf32>
    %cst_77 = arith.constant 1.280000e+02 : f32
    %162 = vector.broadcast %cst_77 : f32 to vector<8x1xf32>
    %163 = arith.divf %161, %162 : vector<8x1xf32>
    %164 = vector.broadcast %163 : vector<8x1xf32> to vector<8x128xf32>
    %165 = arith.subf %155, %164 : vector<8x128xf32>
    %166 = arith.mulf %165, %165 : vector<8x128xf32>
    %cst_78 = arith.constant dense<0.000000e+00> : vector<8xf32>
    %167 = vector.multi_reduction <add>, %166, %cst_78 [1] : vector<8x128xf32> to vector<8xf32>
    %168 = vector.shape_cast %167 : vector<8xf32> to vector<8x1xf32>
    %cst_79 = arith.constant 1.280000e+02 : f32
    %169 = vector.broadcast %cst_79 : f32 to vector<8x1xf32>
    %170 = arith.divf %168, %169 : vector<8x1xf32>
    %171 = vector.broadcast %163 : vector<8x1xf32> to vector<8x128xf32>
    %172 = arith.subf %155, %171 : vector<8x128xf32>
    %cst_80 = arith.constant 9.99999974E-6 : f32
    %173 = vector.broadcast %cst_80 : f32 to vector<8x1xf32>
    %174 = arith.addf %170, %173 : vector<8x1xf32>
    %175 = math.rsqrt %174 : vector<8x1xf32>
    %176 = vector.broadcast %175 : vector<8x1xf32> to vector<8x128xf32>
    %177 = arith.mulf %172, %176 : vector<8x128xf32>
    %178 = vector.broadcast %157 : vector<1x128xf32> to vector<8x128xf32>
    %179 = arith.mulf %177, %178 : vector<8x128xf32>
    %180 = vector.broadcast %159 : vector<1x128xf32> to vector<8x128xf32>
    %181 = arith.addf %179, %180 : vector<8x128xf32>
    %c1 = arith.constant 1 : index
    %c0_81 = arith.constant 0 : index
    %c0_82 = arith.constant 0 : index
    %182 = vector.load %arg4[%c1, %c0_81, %c0_82] : memref<3x128x384xbf16, #tpu.memory_space<vmem>>, vector<1x128x384xbf16>
    %183 = vector.shape_cast %182 : vector<1x128x384xbf16> to vector<128x384xbf16>
    %c1_83 = arith.constant 1 : index
    %c0_84 = arith.constant 0 : index
    %c0_85 = arith.constant 0 : index
    %184 = vector.load %arg6[%c1_83, %c0_84, %c0_85] : memref<3x128x128xbf16, #tpu.memory_space<vmem>>, vector<1x128x128xbf16>
    %185 = vector.shape_cast %184 : vector<1x128x128xbf16> to vector<128x128xbf16>
    %c1_86 = arith.constant 1 : index
    %c0_87 = arith.constant 0 : index
    %c0_88 = arith.constant 0 : index
    %186 = vector.load %arg5[%c1_86, %c0_87, %c0_88] : memref<3x1x384xf32, #tpu.memory_space<vmem>>, vector<1x1x384xf32>
    %187 = vector.shape_cast %186 : vector<1x1x384xf32> to vector<1x384xf32>
    %188 = arith.truncf %181 : vector<8x128xf32> to vector<8x128xbf16>
    %cst_89 = arith.constant dense<0.000000e+00> : vector<8x384xf32>
    %189 = tpu.matmul %188, %183, %cst_89 {dimension_numbers = #tpu.dot_dimension_numbers<[1], [0], [0], [1], [0, 0, 1, 1], [], []>} : vector<8x128xbf16>, vector<128x384xbf16>, vector<8x384xf32> -> vector<8x384xf32>
    %190 = vector.broadcast %187 : vector<1x384xf32> to vector<8x384xf32>
    %191 = arith.addf %189, %190 : vector<8x384xf32>
    %cst_90 = arith.constant 0.000000e+00 : f32
    %192 = vector.broadcast %cst_90 : f32 to vector<8x128xf32>
    %193 = vector.extract_strided_slice %191 {offsets = [0, 0], sizes = [8, 32], strides = [1, 1]} : vector<8x384xf32> to vector<8x32xf32>
    %194 = vector.extract_strided_slice %191 {offsets = [0, 128], sizes = [8, 32], strides = [1, 1]} : vector<8x384xf32> to vector<8x32xf32>
    %195 = vector.extract_strided_slice %191 {offsets = [0, 256], sizes = [8, 32], strides = [1, 1]} : vector<8x384xf32> to vector<8x32xf32>
    %196 = tpu.transpose %194, [1, 0] : vector<8x32xf32> -> vector<32x8xf32>
    %cst_91 = arith.constant dense<0.000000e+00> : vector<8x8xf32>
    %197 = tpu.matmul %193, %196, %cst_91 {dimension_numbers = #tpu.dot_dimension_numbers<[1], [0], [0], [1], [0, 0, 1, 1], [], []>} : vector<8x32xf32>, vector<32x8xf32>, vector<8x8xf32> -> vector<8x8xf32>
    %cst_92 = arith.constant 0.176776692 : f32
    %198 = vector.broadcast %cst_92 : f32 to vector<8x8xf32>
    %199 = arith.mulf %197, %198 : vector<8x8xf32>
    %cst_93 = arith.constant dense<0xFF800000> : vector<8xf32>
    %200 = vector.multi_reduction <maximumf>, %199, %cst_93 [1] : vector<8x8xf32> to vector<8xf32>
    %201 = vector.shape_cast %200 : vector<8xf32> to vector<8x1xf32>
    %202 = vector.broadcast %201 : vector<8x1xf32> to vector<8x8xf32>
    %203 = arith.subf %199, %202 : vector<8x8xf32>
    %204 = math.exp %203 : vector<8x8xf32>
    %cst_94 = arith.constant dense<0.000000e+00> : vector<8xf32>
    %205 = vector.multi_reduction <add>, %204, %cst_94 [1] : vector<8x8xf32> to vector<8xf32>
    %206 = vector.shape_cast %205 : vector<8xf32> to vector<8x1xf32>
    %207 = tpu.reciprocal %206 {approx = true} : vector<8x1xf32> -> vector<8x1xf32>
    %208 = vector.broadcast %207 : vector<8x1xf32> to vector<8x8xf32>
    %209 = arith.mulf %204, %208 : vector<8x8xf32>
    %cst_95 = arith.constant dense<0.000000e+00> : vector<8x32xf32>
    %210 = tpu.matmul %209, %195, %cst_95 {dimension_numbers = #tpu.dot_dimension_numbers<[1], [0], [0], [1], [0, 0, 1, 1], [], []>} : vector<8x8xf32>, vector<8x32xf32>, vector<8x32xf32> -> vector<8x32xf32>
    %211 = arith.truncf %210 : vector<8x32xf32> to vector<8x32xbf16>
    %212 = vector.extract_strided_slice %185 {offsets = [0, 0], sizes = [32, 128], strides = [1, 1]} : vector<128x128xbf16> to vector<32x128xbf16>
    %cst_96 = arith.constant dense<0.000000e+00> : vector<8x128xf32>
    %213 = tpu.matmul %211, %212, %cst_96 {dimension_numbers = #tpu.dot_dimension_numbers<[1], [0], [0], [1], [0, 0, 1, 1], [], []>} : vector<8x32xbf16>, vector<32x128xbf16>, vector<8x128xf32> -> vector<8x128xf32>
    %214 = arith.addf %192, %213 : vector<8x128xf32>
    %215 = vector.extract_strided_slice %191 {offsets = [0, 32], sizes = [8, 32], strides = [1, 1]} : vector<8x384xf32> to vector<8x32xf32>
    %216 = vector.extract_strided_slice %191 {offsets = [0, 160], sizes = [8, 32], strides = [1, 1]} : vector<8x384xf32> to vector<8x32xf32>
    %217 = vector.extract_strided_slice %191 {offsets = [0, 288], sizes = [8, 32], strides = [1, 1]} : vector<8x384xf32> to vector<8x32xf32>
    %218 = tpu.transpose %216, [1, 0] : vector<8x32xf32> -> vector<32x8xf32>
    %cst_97 = arith.constant dense<0.000000e+00> : vector<8x8xf32>
    %219 = tpu.matmul %215, %218, %cst_97 {dimension_numbers = #tpu.dot_dimension_numbers<[1], [0], [0], [1], [0, 0, 1, 1], [], []>} : vector<8x32xf32>, vector<32x8xf32>, vector<8x8xf32> -> vector<8x8xf32>
    %cst_98 = arith.constant 0.176776692 : f32
    %220 = vector.broadcast %cst_98 : f32 to vector<8x8xf32>
    %221 = arith.mulf %219, %220 : vector<8x8xf32>
    %cst_99 = arith.constant dense<0xFF800000> : vector<8xf32>
    %222 = vector.multi_reduction <maximumf>, %221, %cst_99 [1] : vector<8x8xf32> to vector<8xf32>
    %223 = vector.shape_cast %222 : vector<8xf32> to vector<8x1xf32>
    %224 = vector.broadcast %223 : vector<8x1xf32> to vector<8x8xf32>
    %225 = arith.subf %221, %224 : vector<8x8xf32>
    %226 = math.exp %225 : vector<8x8xf32>
    %cst_100 = arith.constant dense<0.000000e+00> : vector<8xf32>
    %227 = vector.multi_reduction <add>, %226, %cst_100 [1] : vector<8x8xf32> to vector<8xf32>
    %228 = vector.shape_cast %227 : vector<8xf32> to vector<8x1xf32>
    %229 = tpu.reciprocal %228 {approx = true} : vector<8x1xf32> -> vector<8x1xf32>
    %230 = vector.broadcast %229 : vector<8x1xf32> to vector<8x8xf32>
    %231 = arith.mulf %226, %230 : vector<8x8xf32>
    %cst_101 = arith.constant dense<0.000000e+00> : vector<8x32xf32>
    %232 = tpu.matmul %231, %217, %cst_101 {dimension_numbers = #tpu.dot_dimension_numbers<[1], [0], [0], [1], [0, 0, 1, 1], [], []>} : vector<8x8xf32>, vector<8x32xf32>, vector<8x32xf32> -> vector<8x32xf32>
    %233 = arith.truncf %232 : vector<8x32xf32> to vector<8x32xbf16>
    %234 = vector.extract_strided_slice %185 {offsets = [32, 0], sizes = [32, 128], strides = [1, 1]} : vector<128x128xbf16> to vector<32x128xbf16>
    %cst_102 = arith.constant dense<0.000000e+00> : vector<8x128xf32>
    %235 = tpu.matmul %233, %234, %cst_102 {dimension_numbers = #tpu.dot_dimension_numbers<[1], [0], [0], [1], [0, 0, 1, 1], [], []>} : vector<8x32xbf16>, vector<32x128xbf16>, vector<8x128xf32> -> vector<8x128xf32>
    %236 = arith.addf %214, %235 : vector<8x128xf32>
    %237 = vector.extract_strided_slice %191 {offsets = [0, 64], sizes = [8, 32], strides = [1, 1]} : vector<8x384xf32> to vector<8x32xf32>
    %238 = vector.extract_strided_slice %191 {offsets = [0, 192], sizes = [8, 32], strides = [1, 1]} : vector<8x384xf32> to vector<8x32xf32>
    %239 = vector.extract_strided_slice %191 {offsets = [0, 320], sizes = [8, 32], strides = [1, 1]} : vector<8x384xf32> to vector<8x32xf32>
    %240 = tpu.transpose %238, [1, 0] : vector<8x32xf32> -> vector<32x8xf32>
    %cst_103 = arith.constant dense<0.000000e+00> : vector<8x8xf32>
    %241 = tpu.matmul %237, %240, %cst_103 {dimension_numbers = #tpu.dot_dimension_numbers<[1], [0], [0], [1], [0, 0, 1, 1], [], []>} : vector<8x32xf32>, vector<32x8xf32>, vector<8x8xf32> -> vector<8x8xf32>
    %cst_104 = arith.constant 0.176776692 : f32
    %242 = vector.broadcast %cst_104 : f32 to vector<8x8xf32>
    %243 = arith.mulf %241, %242 : vector<8x8xf32>
    %cst_105 = arith.constant dense<0xFF800000> : vector<8xf32>
    %244 = vector.multi_reduction <maximumf>, %243, %cst_105 [1] : vector<8x8xf32> to vector<8xf32>
    %245 = vector.shape_cast %244 : vector<8xf32> to vector<8x1xf32>
    %246 = vector.broadcast %245 : vector<8x1xf32> to vector<8x8xf32>
    %247 = arith.subf %243, %246 : vector<8x8xf32>
    %248 = math.exp %247 : vector<8x8xf32>
    %cst_106 = arith.constant dense<0.000000e+00> : vector<8xf32>
    %249 = vector.multi_reduction <add>, %248, %cst_106 [1] : vector<8x8xf32> to vector<8xf32>
    %250 = vector.shape_cast %249 : vector<8xf32> to vector<8x1xf32>
    %251 = tpu.reciprocal %250 {approx = true} : vector<8x1xf32> -> vector<8x1xf32>
    %252 = vector.broadcast %251 : vector<8x1xf32> to vector<8x8xf32>
    %253 = arith.mulf %248, %252 : vector<8x8xf32>
    %cst_107 = arith.constant dense<0.000000e+00> : vector<8x32xf32>
    %254 = tpu.matmul %253, %239, %cst_107 {dimension_numbers = #tpu.dot_dimension_numbers<[1], [0], [0], [1], [0, 0, 1, 1], [], []>} : vector<8x8xf32>, vector<8x32xf32>, vector<8x32xf32> -> vector<8x32xf32>
    %255 = arith.truncf %254 : vector<8x32xf32> to vector<8x32xbf16>
    %256 = vector.extract_strided_slice %185 {offsets = [64, 0], sizes = [32, 128], strides = [1, 1]} : vector<128x128xbf16> to vector<32x128xbf16>
    %cst_108 = arith.constant dense<0.000000e+00> : vector<8x128xf32>
    %257 = tpu.matmul %255, %256, %cst_108 {dimension_numbers = #tpu.dot_dimension_numbers<[1], [0], [0], [1], [0, 0, 1, 1], [], []>} : vector<8x32xbf16>, vector<32x128xbf16>, vector<8x128xf32> -> vector<8x128xf32>
    %258 = arith.addf %236, %257 : vector<8x128xf32>
    %259 = vector.extract_strided_slice %191 {offsets = [0, 96], sizes = [8, 32], strides = [1, 1]} : vector<8x384xf32> to vector<8x32xf32>
    %260 = vector.extract_strided_slice %191 {offsets = [0, 224], sizes = [8, 32], strides = [1, 1]} : vector<8x384xf32> to vector<8x32xf32>
    %261 = vector.extract_strided_slice %191 {offsets = [0, 352], sizes = [8, 32], strides = [1, 1]} : vector<8x384xf32> to vector<8x32xf32>
    %262 = tpu.transpose %260, [1, 0] : vector<8x32xf32> -> vector<32x8xf32>
    %cst_109 = arith.constant dense<0.000000e+00> : vector<8x8xf32>
    %263 = tpu.matmul %259, %262, %cst_109 {dimension_numbers = #tpu.dot_dimension_numbers<[1], [0], [0], [1], [0, 0, 1, 1], [], []>} : vector<8x32xf32>, vector<32x8xf32>, vector<8x8xf32> -> vector<8x8xf32>
    %cst_110 = arith.constant 0.176776692 : f32
    %264 = vector.broadcast %cst_110 : f32 to vector<8x8xf32>
    %265 = arith.mulf %263, %264 : vector<8x8xf32>
    %cst_111 = arith.constant dense<0xFF800000> : vector<8xf32>
    %266 = vector.multi_reduction <maximumf>, %265, %cst_111 [1] : vector<8x8xf32> to vector<8xf32>
    %267 = vector.shape_cast %266 : vector<8xf32> to vector<8x1xf32>
    %268 = vector.broadcast %267 : vector<8x1xf32> to vector<8x8xf32>
    %269 = arith.subf %265, %268 : vector<8x8xf32>
    %270 = math.exp %269 : vector<8x8xf32>
    %cst_112 = arith.constant dense<0.000000e+00> : vector<8xf32>
    %271 = vector.multi_reduction <add>, %270, %cst_112 [1] : vector<8x8xf32> to vector<8xf32>
    %272 = vector.shape_cast %271 : vector<8xf32> to vector<8x1xf32>
    %273 = tpu.reciprocal %272 {approx = true} : vector<8x1xf32> -> vector<8x1xf32>
    %274 = vector.broadcast %273 : vector<8x1xf32> to vector<8x8xf32>
    %275 = arith.mulf %270, %274 : vector<8x8xf32>
    %cst_113 = arith.constant dense<0.000000e+00> : vector<8x32xf32>
    %276 = tpu.matmul %275, %261, %cst_113 {dimension_numbers = #tpu.dot_dimension_numbers<[1], [0], [0], [1], [0, 0, 1, 1], [], []>} : vector<8x8xf32>, vector<8x32xf32>, vector<8x32xf32> -> vector<8x32xf32>
    %277 = arith.truncf %276 : vector<8x32xf32> to vector<8x32xbf16>
    %278 = vector.extract_strided_slice %185 {offsets = [96, 0], sizes = [32, 128], strides = [1, 1]} : vector<128x128xbf16> to vector<32x128xbf16>
    %cst_114 = arith.constant dense<0.000000e+00> : vector<8x128xf32>
    %279 = tpu.matmul %277, %278, %cst_114 {dimension_numbers = #tpu.dot_dimension_numbers<[1], [0], [0], [1], [0, 0, 1, 1], [], []>} : vector<8x32xbf16>, vector<32x128xbf16>, vector<8x128xf32> -> vector<8x128xf32>
    %280 = arith.addf %258, %279 : vector<8x128xf32>
    %c1_115 = arith.constant 1 : index
    %c0_116 = arith.constant 0 : index
    %c0_117 = arith.constant 0 : index
    %281 = vector.load %arg7[%c1_115, %c0_116, %c0_117] : memref<3x1x128xf32, #tpu.memory_space<vmem>>, vector<1x1x128xf32>
    %282 = vector.shape_cast %281 : vector<1x1x128xf32> to vector<1x128xf32>
    %283 = vector.broadcast %282 : vector<1x128xf32> to vector<8x128xf32>
    %284 = arith.addf %280, %283 : vector<8x128xf32>
    %285 = arith.addf %181, %284 : vector<8x128xf32>
    %c1_118 = arith.constant 1 : index
    %c0_119 = arith.constant 0 : index
    %c0_120 = arith.constant 0 : index
    %286 = vector.load %arg12[%c1_118, %c0_119, %c0_120] : memref<3x1x128xf32, #tpu.memory_space<vmem>>, vector<1x1x128xf32>
    %287 = vector.shape_cast %286 : vector<1x1x128xf32> to vector<1x128xf32>
    %c1_121 = arith.constant 1 : index
    %c0_122 = arith.constant 0 : index
    %c0_123 = arith.constant 0 : index
    %288 = vector.load %arg13[%c1_121, %c0_122, %c0_123] : memref<3x1x128xf32, #tpu.memory_space<vmem>>, vector<1x1x128xf32>
    %289 = vector.shape_cast %288 : vector<1x1x128xf32> to vector<1x128xf32>
    %cst_124 = arith.constant dense<0.000000e+00> : vector<8xf32>
    %290 = vector.multi_reduction <add>, %285, %cst_124 [1] : vector<8x128xf32> to vector<8xf32>
    %291 = vector.shape_cast %290 : vector<8xf32> to vector<8x1xf32>
    %cst_125 = arith.constant 1.280000e+02 : f32
    %292 = vector.broadcast %cst_125 : f32 to vector<8x1xf32>
    %293 = arith.divf %291, %292 : vector<8x1xf32>
    %294 = vector.broadcast %293 : vector<8x1xf32> to vector<8x128xf32>
    %295 = arith.subf %285, %294 : vector<8x128xf32>
    %296 = arith.mulf %295, %295 : vector<8x128xf32>
    %cst_126 = arith.constant dense<0.000000e+00> : vector<8xf32>
    %297 = vector.multi_reduction <add>, %296, %cst_126 [1] : vector<8x128xf32> to vector<8xf32>
    %298 = vector.shape_cast %297 : vector<8xf32> to vector<8x1xf32>
    %cst_127 = arith.constant 1.280000e+02 : f32
    %299 = vector.broadcast %cst_127 : f32 to vector<8x1xf32>
    %300 = arith.divf %298, %299 : vector<8x1xf32>
    %301 = vector.broadcast %293 : vector<8x1xf32> to vector<8x128xf32>
    %302 = arith.subf %285, %301 : vector<8x128xf32>
    %cst_128 = arith.constant 9.99999974E-6 : f32
    %303 = vector.broadcast %cst_128 : f32 to vector<8x1xf32>
    %304 = arith.addf %300, %303 : vector<8x1xf32>
    %305 = math.rsqrt %304 : vector<8x1xf32>
    %306 = vector.broadcast %305 : vector<8x1xf32> to vector<8x128xf32>
    %307 = arith.mulf %302, %306 : vector<8x128xf32>
    %308 = vector.broadcast %287 : vector<1x128xf32> to vector<8x128xf32>
    %309 = arith.mulf %307, %308 : vector<8x128xf32>
    %310 = vector.broadcast %289 : vector<1x128xf32> to vector<8x128xf32>
    %311 = arith.addf %309, %310 : vector<8x128xf32>
    %c1_129 = arith.constant 1 : index
    %c0_130 = arith.constant 0 : index
    %c0_131 = arith.constant 0 : index
    %312 = vector.load %arg8[%c1_129, %c0_130, %c0_131] : memref<3x128x256xbf16, #tpu.memory_space<vmem>>, vector<1x128x256xbf16>
    %313 = vector.shape_cast %312 : vector<1x128x256xbf16> to vector<128x256xbf16>
    %c1_132 = arith.constant 1 : index
    %c0_133 = arith.constant 0 : index
    %c0_134 = arith.constant 0 : index
    %314 = vector.load %arg9[%c1_132, %c0_133, %c0_134] : memref<3x1x256xf32, #tpu.memory_space<vmem>>, vector<1x1x256xf32>
    %315 = vector.shape_cast %314 : vector<1x1x256xf32> to vector<1x256xf32>
    %316 = arith.truncf %311 : vector<8x128xf32> to vector<8x128xbf16>
    %cst_135 = arith.constant dense<0.000000e+00> : vector<8x256xf32>
    %317 = tpu.matmul %316, %313, %cst_135 {dimension_numbers = #tpu.dot_dimension_numbers<[1], [0], [0], [1], [0, 0, 1, 1], [], []>} : vector<8x128xbf16>, vector<128x256xbf16>, vector<8x256xf32> -> vector<8x256xf32>
    %318 = vector.broadcast %315 : vector<1x256xf32> to vector<8x256xf32>
    %319 = arith.addf %317, %318 : vector<8x256xf32>
    %cst_136 = arith.constant 0.000000e+00 : f32
    %320 = vector.broadcast %cst_136 : f32 to vector<8x256xf32>
    %321 = arith.maximumf %319, %320 : vector<8x256xf32>
    %c1_137 = arith.constant 1 : index
    %c0_138 = arith.constant 0 : index
    %c0_139 = arith.constant 0 : index
    %322 = vector.load %arg10[%c1_137, %c0_138, %c0_139] : memref<3x256x128xbf16, #tpu.memory_space<vmem>>, vector<1x256x128xbf16>
    %323 = vector.shape_cast %322 : vector<1x256x128xbf16> to vector<256x128xbf16>
    %c1_140 = arith.constant 1 : index
    %c0_141 = arith.constant 0 : index
    %c0_142 = arith.constant 0 : index
    %324 = vector.load %arg11[%c1_140, %c0_141, %c0_142] : memref<3x1x128xf32, #tpu.memory_space<vmem>>, vector<1x1x128xf32>
    %325 = vector.shape_cast %324 : vector<1x1x128xf32> to vector<1x128xf32>
    %326 = arith.truncf %321 : vector<8x256xf32> to vector<8x256xbf16>
    %cst_143 = arith.constant dense<0.000000e+00> : vector<8x128xf32>
    %327 = tpu.matmul %326, %323, %cst_143 {dimension_numbers = #tpu.dot_dimension_numbers<[1], [0], [0], [1], [0, 0, 1, 1], [], []>} : vector<8x256xbf16>, vector<256x128xbf16>, vector<8x128xf32> -> vector<8x128xf32>
    %328 = vector.broadcast %325 : vector<1x128xf32> to vector<8x128xf32>
    %329 = arith.addf %327, %328 : vector<8x128xf32>
    %330 = arith.addf %311, %329 : vector<8x128xf32>
    %c1_144 = arith.constant 1 : index
    %c0_145 = arith.constant 0 : index
    %c0_146 = arith.constant 0 : index
    %331 = vector.load %arg14[%c1_144, %c0_145, %c0_146] : memref<3x1x128xf32, #tpu.memory_space<vmem>>, vector<1x1x128xf32>
    %332 = vector.shape_cast %331 : vector<1x1x128xf32> to vector<1x128xf32>
    %c1_147 = arith.constant 1 : index
    %c0_148 = arith.constant 0 : index
    %c0_149 = arith.constant 0 : index
    %333 = vector.load %arg15[%c1_147, %c0_148, %c0_149] : memref<3x1x128xf32, #tpu.memory_space<vmem>>, vector<1x1x128xf32>
    %334 = vector.shape_cast %333 : vector<1x1x128xf32> to vector<1x128xf32>
    %cst_150 = arith.constant dense<0.000000e+00> : vector<8xf32>
    %335 = vector.multi_reduction <add>, %330, %cst_150 [1] : vector<8x128xf32> to vector<8xf32>
    %336 = vector.shape_cast %335 : vector<8xf32> to vector<8x1xf32>
    %cst_151 = arith.constant 1.280000e+02 : f32
    %337 = vector.broadcast %cst_151 : f32 to vector<8x1xf32>
    %338 = arith.divf %336, %337 : vector<8x1xf32>
    %339 = vector.broadcast %338 : vector<8x1xf32> to vector<8x128xf32>
    %340 = arith.subf %330, %339 : vector<8x128xf32>
    %341 = arith.mulf %340, %340 : vector<8x128xf32>
    %cst_152 = arith.constant dense<0.000000e+00> : vector<8xf32>
    %342 = vector.multi_reduction <add>, %341, %cst_152 [1] : vector<8x128xf32> to vector<8xf32>
    %343 = vector.shape_cast %342 : vector<8xf32> to vector<8x1xf32>
    %cst_153 = arith.constant 1.280000e+02 : f32
    %344 = vector.broadcast %cst_153 : f32 to vector<8x1xf32>
    %345 = arith.divf %343, %344 : vector<8x1xf32>
    %346 = vector.broadcast %338 : vector<8x1xf32> to vector<8x128xf32>
    %347 = arith.subf %330, %346 : vector<8x128xf32>
    %cst_154 = arith.constant 9.99999974E-6 : f32
    %348 = vector.broadcast %cst_154 : f32 to vector<8x1xf32>
    %349 = arith.addf %345, %348 : vector<8x1xf32>
    %350 = math.rsqrt %349 : vector<8x1xf32>
    %351 = vector.broadcast %350 : vector<8x1xf32> to vector<8x128xf32>
    %352 = arith.mulf %347, %351 : vector<8x128xf32>
    %353 = vector.broadcast %332 : vector<1x128xf32> to vector<8x128xf32>
    %354 = arith.mulf %352, %353 : vector<8x128xf32>
    %355 = vector.broadcast %334 : vector<1x128xf32> to vector<8x128xf32>
    %356 = arith.addf %354, %355 : vector<8x128xf32>
    %c2 = arith.constant 2 : index
    %c0_155 = arith.constant 0 : index
    %c0_156 = arith.constant 0 : index
    %357 = vector.load %arg4[%c2, %c0_155, %c0_156] : memref<3x128x384xbf16, #tpu.memory_space<vmem>>, vector<1x128x384xbf16>
    %358 = vector.shape_cast %357 : vector<1x128x384xbf16> to vector<128x384xbf16>
    %c2_157 = arith.constant 2 : index
    %c0_158 = arith.constant 0 : index
    %c0_159 = arith.constant 0 : index
    %359 = vector.load %arg6[%c2_157, %c0_158, %c0_159] : memref<3x128x128xbf16, #tpu.memory_space<vmem>>, vector<1x128x128xbf16>
    %360 = vector.shape_cast %359 : vector<1x128x128xbf16> to vector<128x128xbf16>
    %c2_160 = arith.constant 2 : index
    %c0_161 = arith.constant 0 : index
    %c0_162 = arith.constant 0 : index
    %361 = vector.load %arg5[%c2_160, %c0_161, %c0_162] : memref<3x1x384xf32, #tpu.memory_space<vmem>>, vector<1x1x384xf32>
    %362 = vector.shape_cast %361 : vector<1x1x384xf32> to vector<1x384xf32>
    %363 = arith.truncf %356 : vector<8x128xf32> to vector<8x128xbf16>
    %cst_163 = arith.constant dense<0.000000e+00> : vector<8x384xf32>
    %364 = tpu.matmul %363, %358, %cst_163 {dimension_numbers = #tpu.dot_dimension_numbers<[1], [0], [0], [1], [0, 0, 1, 1], [], []>} : vector<8x128xbf16>, vector<128x384xbf16>, vector<8x384xf32> -> vector<8x384xf32>
    %365 = vector.broadcast %362 : vector<1x384xf32> to vector<8x384xf32>
    %366 = arith.addf %364, %365 : vector<8x384xf32>
    %cst_164 = arith.constant 0.000000e+00 : f32
    %367 = vector.broadcast %cst_164 : f32 to vector<8x128xf32>
    %368 = vector.extract_strided_slice %366 {offsets = [0, 0], sizes = [8, 32], strides = [1, 1]} : vector<8x384xf32> to vector<8x32xf32>
    %369 = vector.extract_strided_slice %366 {offsets = [0, 128], sizes = [8, 32], strides = [1, 1]} : vector<8x384xf32> to vector<8x32xf32>
    %370 = vector.extract_strided_slice %366 {offsets = [0, 256], sizes = [8, 32], strides = [1, 1]} : vector<8x384xf32> to vector<8x32xf32>
    %371 = tpu.transpose %369, [1, 0] : vector<8x32xf32> -> vector<32x8xf32>
    %cst_165 = arith.constant dense<0.000000e+00> : vector<8x8xf32>
    %372 = tpu.matmul %368, %371, %cst_165 {dimension_numbers = #tpu.dot_dimension_numbers<[1], [0], [0], [1], [0, 0, 1, 1], [], []>} : vector<8x32xf32>, vector<32x8xf32>, vector<8x8xf32> -> vector<8x8xf32>
    %cst_166 = arith.constant 0.176776692 : f32
    %373 = vector.broadcast %cst_166 : f32 to vector<8x8xf32>
    %374 = arith.mulf %372, %373 : vector<8x8xf32>
    %cst_167 = arith.constant dense<0xFF800000> : vector<8xf32>
    %375 = vector.multi_reduction <maximumf>, %374, %cst_167 [1] : vector<8x8xf32> to vector<8xf32>
    %376 = vector.shape_cast %375 : vector<8xf32> to vector<8x1xf32>
    %377 = vector.broadcast %376 : vector<8x1xf32> to vector<8x8xf32>
    %378 = arith.subf %374, %377 : vector<8x8xf32>
    %379 = math.exp %378 : vector<8x8xf32>
    %cst_168 = arith.constant dense<0.000000e+00> : vector<8xf32>
    %380 = vector.multi_reduction <add>, %379, %cst_168 [1] : vector<8x8xf32> to vector<8xf32>
    %381 = vector.shape_cast %380 : vector<8xf32> to vector<8x1xf32>
    %382 = tpu.reciprocal %381 {approx = true} : vector<8x1xf32> -> vector<8x1xf32>
    %383 = vector.broadcast %382 : vector<8x1xf32> to vector<8x8xf32>
    %384 = arith.mulf %379, %383 : vector<8x8xf32>
    %cst_169 = arith.constant dense<0.000000e+00> : vector<8x32xf32>
    %385 = tpu.matmul %384, %370, %cst_169 {dimension_numbers = #tpu.dot_dimension_numbers<[1], [0], [0], [1], [0, 0, 1, 1], [], []>} : vector<8x8xf32>, vector<8x32xf32>, vector<8x32xf32> -> vector<8x32xf32>
    %386 = arith.truncf %385 : vector<8x32xf32> to vector<8x32xbf16>
    %387 = vector.extract_strided_slice %360 {offsets = [0, 0], sizes = [32, 128], strides = [1, 1]} : vector<128x128xbf16> to vector<32x128xbf16>
    %cst_170 = arith.constant dense<0.000000e+00> : vector<8x128xf32>
    %388 = tpu.matmul %386, %387, %cst_170 {dimension_numbers = #tpu.dot_dimension_numbers<[1], [0], [0], [1], [0, 0, 1, 1], [], []>} : vector<8x32xbf16>, vector<32x128xbf16>, vector<8x128xf32> -> vector<8x128xf32>
    %389 = arith.addf %367, %388 : vector<8x128xf32>
    %390 = vector.extract_strided_slice %366 {offsets = [0, 32], sizes = [8, 32], strides = [1, 1]} : vector<8x384xf32> to vector<8x32xf32>
    %391 = vector.extract_strided_slice %366 {offsets = [0, 160], sizes = [8, 32], strides = [1, 1]} : vector<8x384xf32> to vector<8x32xf32>
    %392 = vector.extract_strided_slice %366 {offsets = [0, 288], sizes = [8, 32], strides = [1, 1]} : vector<8x384xf32> to vector<8x32xf32>
    %393 = tpu.transpose %391, [1, 0] : vector<8x32xf32> -> vector<32x8xf32>
    %cst_171 = arith.constant dense<0.000000e+00> : vector<8x8xf32>
    %394 = tpu.matmul %390, %393, %cst_171 {dimension_numbers = #tpu.dot_dimension_numbers<[1], [0], [0], [1], [0, 0, 1, 1], [], []>} : vector<8x32xf32>, vector<32x8xf32>, vector<8x8xf32> -> vector<8x8xf32>
    %cst_172 = arith.constant 0.176776692 : f32
    %395 = vector.broadcast %cst_172 : f32 to vector<8x8xf32>
    %396 = arith.mulf %394, %395 : vector<8x8xf32>
    %cst_173 = arith.constant dense<0xFF800000> : vector<8xf32>
    %397 = vector.multi_reduction <maximumf>, %396, %cst_173 [1] : vector<8x8xf32> to vector<8xf32>
    %398 = vector.shape_cast %397 : vector<8xf32> to vector<8x1xf32>
    %399 = vector.broadcast %398 : vector<8x1xf32> to vector<8x8xf32>
    %400 = arith.subf %396, %399 : vector<8x8xf32>
    %401 = math.exp %400 : vector<8x8xf32>
    %cst_174 = arith.constant dense<0.000000e+00> : vector<8xf32>
    %402 = vector.multi_reduction <add>, %401, %cst_174 [1] : vector<8x8xf32> to vector<8xf32>
    %403 = vector.shape_cast %402 : vector<8xf32> to vector<8x1xf32>
    %404 = tpu.reciprocal %403 {approx = true} : vector<8x1xf32> -> vector<8x1xf32>
    %405 = vector.broadcast %404 : vector<8x1xf32> to vector<8x8xf32>
    %406 = arith.mulf %401, %405 : vector<8x8xf32>
    %cst_175 = arith.constant dense<0.000000e+00> : vector<8x32xf32>
    %407 = tpu.matmul %406, %392, %cst_175 {dimension_numbers = #tpu.dot_dimension_numbers<[1], [0], [0], [1], [0, 0, 1, 1], [], []>} : vector<8x8xf32>, vector<8x32xf32>, vector<8x32xf32> -> vector<8x32xf32>
    %408 = arith.truncf %407 : vector<8x32xf32> to vector<8x32xbf16>
    %409 = vector.extract_strided_slice %360 {offsets = [32, 0], sizes = [32, 128], strides = [1, 1]} : vector<128x128xbf16> to vector<32x128xbf16>
    %cst_176 = arith.constant dense<0.000000e+00> : vector<8x128xf32>
    %410 = tpu.matmul %408, %409, %cst_176 {dimension_numbers = #tpu.dot_dimension_numbers<[1], [0], [0], [1], [0, 0, 1, 1], [], []>} : vector<8x32xbf16>, vector<32x128xbf16>, vector<8x128xf32> -> vector<8x128xf32>
    %411 = arith.addf %389, %410 : vector<8x128xf32>
    %412 = vector.extract_strided_slice %366 {offsets = [0, 64], sizes = [8, 32], strides = [1, 1]} : vector<8x384xf32> to vector<8x32xf32>
    %413 = vector.extract_strided_slice %366 {offsets = [0, 192], sizes = [8, 32], strides = [1, 1]} : vector<8x384xf32> to vector<8x32xf32>
    %414 = vector.extract_strided_slice %366 {offsets = [0, 320], sizes = [8, 32], strides = [1, 1]} : vector<8x384xf32> to vector<8x32xf32>
    %415 = tpu.transpose %413, [1, 0] : vector<8x32xf32> -> vector<32x8xf32>
    %cst_177 = arith.constant dense<0.000000e+00> : vector<8x8xf32>
    %416 = tpu.matmul %412, %415, %cst_177 {dimension_numbers = #tpu.dot_dimension_numbers<[1], [0], [0], [1], [0, 0, 1, 1], [], []>} : vector<8x32xf32>, vector<32x8xf32>, vector<8x8xf32> -> vector<8x8xf32>
    %cst_178 = arith.constant 0.176776692 : f32
    %417 = vector.broadcast %cst_178 : f32 to vector<8x8xf32>
    %418 = arith.mulf %416, %417 : vector<8x8xf32>
    %cst_179 = arith.constant dense<0xFF800000> : vector<8xf32>
    %419 = vector.multi_reduction <maximumf>, %418, %cst_179 [1] : vector<8x8xf32> to vector<8xf32>
    %420 = vector.shape_cast %419 : vector<8xf32> to vector<8x1xf32>
    %421 = vector.broadcast %420 : vector<8x1xf32> to vector<8x8xf32>
    %422 = arith.subf %418, %421 : vector<8x8xf32>
    %423 = math.exp %422 : vector<8x8xf32>
    %cst_180 = arith.constant dense<0.000000e+00> : vector<8xf32>
    %424 = vector.multi_reduction <add>, %423, %cst_180 [1] : vector<8x8xf32> to vector<8xf32>
    %425 = vector.shape_cast %424 : vector<8xf32> to vector<8x1xf32>
    %426 = tpu.reciprocal %425 {approx = true} : vector<8x1xf32> -> vector<8x1xf32>
    %427 = vector.broadcast %426 : vector<8x1xf32> to vector<8x8xf32>
    %428 = arith.mulf %423, %427 : vector<8x8xf32>
    %cst_181 = arith.constant dense<0.000000e+00> : vector<8x32xf32>
    %429 = tpu.matmul %428, %414, %cst_181 {dimension_numbers = #tpu.dot_dimension_numbers<[1], [0], [0], [1], [0, 0, 1, 1], [], []>} : vector<8x8xf32>, vector<8x32xf32>, vector<8x32xf32> -> vector<8x32xf32>
    %430 = arith.truncf %429 : vector<8x32xf32> to vector<8x32xbf16>
    %431 = vector.extract_strided_slice %360 {offsets = [64, 0], sizes = [32, 128], strides = [1, 1]} : vector<128x128xbf16> to vector<32x128xbf16>
    %cst_182 = arith.constant dense<0.000000e+00> : vector<8x128xf32>
    %432 = tpu.matmul %430, %431, %cst_182 {dimension_numbers = #tpu.dot_dimension_numbers<[1], [0], [0], [1], [0, 0, 1, 1], [], []>} : vector<8x32xbf16>, vector<32x128xbf16>, vector<8x128xf32> -> vector<8x128xf32>
    %433 = arith.addf %411, %432 : vector<8x128xf32>
    %434 = vector.extract_strided_slice %366 {offsets = [0, 96], sizes = [8, 32], strides = [1, 1]} : vector<8x384xf32> to vector<8x32xf32>
    %435 = vector.extract_strided_slice %366 {offsets = [0, 224], sizes = [8, 32], strides = [1, 1]} : vector<8x384xf32> to vector<8x32xf32>
    %436 = vector.extract_strided_slice %366 {offsets = [0, 352], sizes = [8, 32], strides = [1, 1]} : vector<8x384xf32> to vector<8x32xf32>
    %437 = tpu.transpose %435, [1, 0] : vector<8x32xf32> -> vector<32x8xf32>
    %cst_183 = arith.constant dense<0.000000e+00> : vector<8x8xf32>
    %438 = tpu.matmul %434, %437, %cst_183 {dimension_numbers = #tpu.dot_dimension_numbers<[1], [0], [0], [1], [0, 0, 1, 1], [], []>} : vector<8x32xf32>, vector<32x8xf32>, vector<8x8xf32> -> vector<8x8xf32>
    %cst_184 = arith.constant 0.176776692 : f32
    %439 = vector.broadcast %cst_184 : f32 to vector<8x8xf32>
    %440 = arith.mulf %438, %439 : vector<8x8xf32>
    %cst_185 = arith.constant dense<0xFF800000> : vector<8xf32>
    %441 = vector.multi_reduction <maximumf>, %440, %cst_185 [1] : vector<8x8xf32> to vector<8xf32>
    %442 = vector.shape_cast %441 : vector<8xf32> to vector<8x1xf32>
    %443 = vector.broadcast %442 : vector<8x1xf32> to vector<8x8xf32>
    %444 = arith.subf %440, %443 : vector<8x8xf32>
    %445 = math.exp %444 : vector<8x8xf32>
    %cst_186 = arith.constant dense<0.000000e+00> : vector<8xf32>
    %446 = vector.multi_reduction <add>, %445, %cst_186 [1] : vector<8x8xf32> to vector<8xf32>
    %447 = vector.shape_cast %446 : vector<8xf32> to vector<8x1xf32>
    %448 = tpu.reciprocal %447 {approx = true} : vector<8x1xf32> -> vector<8x1xf32>
    %449 = vector.broadcast %448 : vector<8x1xf32> to vector<8x8xf32>
    %450 = arith.mulf %445, %449 : vector<8x8xf32>
    %cst_187 = arith.constant dense<0.000000e+00> : vector<8x32xf32>
    %451 = tpu.matmul %450, %436, %cst_187 {dimension_numbers = #tpu.dot_dimension_numbers<[1], [0], [0], [1], [0, 0, 1, 1], [], []>} : vector<8x8xf32>, vector<8x32xf32>, vector<8x32xf32> -> vector<8x32xf32>
    %452 = arith.truncf %451 : vector<8x32xf32> to vector<8x32xbf16>
    %453 = vector.extract_strided_slice %360 {offsets = [96, 0], sizes = [32, 128], strides = [1, 1]} : vector<128x128xbf16> to vector<32x128xbf16>
    %cst_188 = arith.constant dense<0.000000e+00> : vector<8x128xf32>
    %454 = tpu.matmul %452, %453, %cst_188 {dimension_numbers = #tpu.dot_dimension_numbers<[1], [0], [0], [1], [0, 0, 1, 1], [], []>} : vector<8x32xbf16>, vector<32x128xbf16>, vector<8x128xf32> -> vector<8x128xf32>
    %455 = arith.addf %433, %454 : vector<8x128xf32>
    %c2_189 = arith.constant 2 : index
    %c0_190 = arith.constant 0 : index
    %c0_191 = arith.constant 0 : index
    %456 = vector.load %arg7[%c2_189, %c0_190, %c0_191] : memref<3x1x128xf32, #tpu.memory_space<vmem>>, vector<1x1x128xf32>
    %457 = vector.shape_cast %456 : vector<1x1x128xf32> to vector<1x128xf32>
    %458 = vector.broadcast %457 : vector<1x128xf32> to vector<8x128xf32>
    %459 = arith.addf %455, %458 : vector<8x128xf32>
    %460 = arith.addf %356, %459 : vector<8x128xf32>
    %c2_192 = arith.constant 2 : index
    %c0_193 = arith.constant 0 : index
    %c0_194 = arith.constant 0 : index
    %461 = vector.load %arg12[%c2_192, %c0_193, %c0_194] : memref<3x1x128xf32, #tpu.memory_space<vmem>>, vector<1x1x128xf32>
    %462 = vector.shape_cast %461 : vector<1x1x128xf32> to vector<1x128xf32>
    %c2_195 = arith.constant 2 : index
    %c0_196 = arith.constant 0 : index
    %c0_197 = arith.constant 0 : index
    %463 = vector.load %arg13[%c2_195, %c0_196, %c0_197] : memref<3x1x128xf32, #tpu.memory_space<vmem>>, vector<1x1x128xf32>
    %464 = vector.shape_cast %463 : vector<1x1x128xf32> to vector<1x128xf32>
    %cst_198 = arith.constant dense<0.000000e+00> : vector<8xf32>
    %465 = vector.multi_reduction <add>, %460, %cst_198 [1] : vector<8x128xf32> to vector<8xf32>
    %466 = vector.shape_cast %465 : vector<8xf32> to vector<8x1xf32>
    %cst_199 = arith.constant 1.280000e+02 : f32
    %467 = vector.broadcast %cst_199 : f32 to vector<8x1xf32>
    %468 = arith.divf %466, %467 : vector<8x1xf32>
    %469 = vector.broadcast %468 : vector<8x1xf32> to vector<8x128xf32>
    %470 = arith.subf %460, %469 : vector<8x128xf32>
    %471 = arith.mulf %470, %470 : vector<8x128xf32>
    %cst_200 = arith.constant dense<0.000000e+00> : vector<8xf32>
    %472 = vector.multi_reduction <add>, %471, %cst_200 [1] : vector<8x128xf32> to vector<8xf32>
    %473 = vector.shape_cast %472 : vector<8xf32> to vector<8x1xf32>
    %cst_201 = arith.constant 1.280000e+02 : f32
    %474 = vector.broadcast %cst_201 : f32 to vector<8x1xf32>
    %475 = arith.divf %473, %474 : vector<8x1xf32>
    %476 = vector.broadcast %468 : vector<8x1xf32> to vector<8x128xf32>
    %477 = arith.subf %460, %476 : vector<8x128xf32>
    %cst_202 = arith.constant 9.99999974E-6 : f32
    %478 = vector.broadcast %cst_202 : f32 to vector<8x1xf32>
    %479 = arith.addf %475, %478 : vector<8x1xf32>
    %480 = math.rsqrt %479 : vector<8x1xf32>
    %481 = vector.broadcast %480 : vector<8x1xf32> to vector<8x128xf32>
    %482 = arith.mulf %477, %481 : vector<8x128xf32>
    %483 = vector.broadcast %462 : vector<1x128xf32> to vector<8x128xf32>
    %484 = arith.mulf %482, %483 : vector<8x128xf32>
    %485 = vector.broadcast %464 : vector<1x128xf32> to vector<8x128xf32>
    %486 = arith.addf %484, %485 : vector<8x128xf32>
    %c2_203 = arith.constant 2 : index
    %c0_204 = arith.constant 0 : index
    %c0_205 = arith.constant 0 : index
    %487 = vector.load %arg8[%c2_203, %c0_204, %c0_205] : memref<3x128x256xbf16, #tpu.memory_space<vmem>>, vector<1x128x256xbf16>
    %488 = vector.shape_cast %487 : vector<1x128x256xbf16> to vector<128x256xbf16>
    %c2_206 = arith.constant 2 : index
    %c0_207 = arith.constant 0 : index
    %c0_208 = arith.constant 0 : index
    %489 = vector.load %arg9[%c2_206, %c0_207, %c0_208] : memref<3x1x256xf32, #tpu.memory_space<vmem>>, vector<1x1x256xf32>
    %490 = vector.shape_cast %489 : vector<1x1x256xf32> to vector<1x256xf32>
    %491 = arith.truncf %486 : vector<8x128xf32> to vector<8x128xbf16>
    %cst_209 = arith.constant dense<0.000000e+00> : vector<8x256xf32>
    %492 = tpu.matmul %491, %488, %cst_209 {dimension_numbers = #tpu.dot_dimension_numbers<[1], [0], [0], [1], [0, 0, 1, 1], [], []>} : vector<8x128xbf16>, vector<128x256xbf16>, vector<8x256xf32> -> vector<8x256xf32>
    %493 = vector.broadcast %490 : vector<1x256xf32> to vector<8x256xf32>
    %494 = arith.addf %492, %493 : vector<8x256xf32>
    %cst_210 = arith.constant 0.000000e+00 : f32
    %495 = vector.broadcast %cst_210 : f32 to vector<8x256xf32>
    %496 = arith.maximumf %494, %495 : vector<8x256xf32>
    %c2_211 = arith.constant 2 : index
    %c0_212 = arith.constant 0 : index
    %c0_213 = arith.constant 0 : index
    %497 = vector.load %arg10[%c2_211, %c0_212, %c0_213] : memref<3x256x128xbf16, #tpu.memory_space<vmem>>, vector<1x256x128xbf16>
    %498 = vector.shape_cast %497 : vector<1x256x128xbf16> to vector<256x128xbf16>
    %c2_214 = arith.constant 2 : index
    %c0_215 = arith.constant 0 : index
    %c0_216 = arith.constant 0 : index
    %499 = vector.load %arg11[%c2_214, %c0_215, %c0_216] : memref<3x1x128xf32, #tpu.memory_space<vmem>>, vector<1x1x128xf32>
    %500 = vector.shape_cast %499 : vector<1x1x128xf32> to vector<1x128xf32>
    %501 = arith.truncf %496 : vector<8x256xf32> to vector<8x256xbf16>
    %cst_217 = arith.constant dense<0.000000e+00> : vector<8x128xf32>
    %502 = tpu.matmul %501, %498, %cst_217 {dimension_numbers = #tpu.dot_dimension_numbers<[1], [0], [0], [1], [0, 0, 1, 1], [], []>} : vector<8x256xbf16>, vector<256x128xbf16>, vector<8x128xf32> -> vector<8x128xf32>
    %503 = vector.broadcast %500 : vector<1x128xf32> to vector<8x128xf32>
    %504 = arith.addf %502, %503 : vector<8x128xf32>
    %505 = arith.addf %486, %504 : vector<8x128xf32>
    %c2_218 = arith.constant 2 : index
    %c0_219 = arith.constant 0 : index
    %c0_220 = arith.constant 0 : index
    %506 = vector.load %arg14[%c2_218, %c0_219, %c0_220] : memref<3x1x128xf32, #tpu.memory_space<vmem>>, vector<1x1x128xf32>
    %507 = vector.shape_cast %506 : vector<1x1x128xf32> to vector<1x128xf32>
    %c2_221 = arith.constant 2 : index
    %c0_222 = arith.constant 0 : index
    %c0_223 = arith.constant 0 : index
    %508 = vector.load %arg15[%c2_221, %c0_222, %c0_223] : memref<3x1x128xf32, #tpu.memory_space<vmem>>, vector<1x1x128xf32>
    %509 = vector.shape_cast %508 : vector<1x1x128xf32> to vector<1x128xf32>
    %cst_224 = arith.constant dense<0.000000e+00> : vector<8xf32>
    %510 = vector.multi_reduction <add>, %505, %cst_224 [1] : vector<8x128xf32> to vector<8xf32>
    %511 = vector.shape_cast %510 : vector<8xf32> to vector<8x1xf32>
    %cst_225 = arith.constant 1.280000e+02 : f32
    %512 = vector.broadcast %cst_225 : f32 to vector<8x1xf32>
    %513 = arith.divf %511, %512 : vector<8x1xf32>
    %514 = vector.broadcast %513 : vector<8x1xf32> to vector<8x128xf32>
    %515 = arith.subf %505, %514 : vector<8x128xf32>
    %516 = arith.mulf %515, %515 : vector<8x128xf32>
    %cst_226 = arith.constant dense<0.000000e+00> : vector<8xf32>
    %517 = vector.multi_reduction <add>, %516, %cst_226 [1] : vector<8x128xf32> to vector<8xf32>
    %518 = vector.shape_cast %517 : vector<8xf32> to vector<8x1xf32>
    %cst_227 = arith.constant 1.280000e+02 : f32
    %519 = vector.broadcast %cst_227 : f32 to vector<8x1xf32>
    %520 = arith.divf %518, %519 : vector<8x1xf32>
    %521 = vector.broadcast %513 : vector<8x1xf32> to vector<8x128xf32>
    %522 = arith.subf %505, %521 : vector<8x128xf32>
    %cst_228 = arith.constant 9.99999974E-6 : f32
    %523 = vector.broadcast %cst_228 : f32 to vector<8x1xf32>
    %524 = arith.addf %520, %523 : vector<8x1xf32>
    %525 = math.rsqrt %524 : vector<8x1xf32>
    %526 = vector.broadcast %525 : vector<8x1xf32> to vector<8x128xf32>
    %527 = arith.mulf %522, %526 : vector<8x128xf32>
    %528 = vector.broadcast %507 : vector<1x128xf32> to vector<8x128xf32>
    %529 = arith.mulf %527, %528 : vector<8x128xf32>
    %530 = vector.broadcast %509 : vector<1x128xf32> to vector<8x128xf32>
    %531 = arith.addf %529, %530 : vector<8x128xf32>
    %c0_229 = arith.constant 0 : index
    %c0_230 = arith.constant 0 : index
    %532 = vector.load %arg16[%c0_229, %c0_230] : memref<128x128xbf16, #tpu.memory_space<vmem>>, vector<128x128xbf16>
    %c0_231 = arith.constant 0 : index
    %c0_232 = arith.constant 0 : index
    %533 = vector.load %arg17[%c0_231, %c0_232] : memref<1x128xf32, #tpu.memory_space<vmem>>, vector<1x128xf32>
    %534 = arith.truncf %531 : vector<8x128xf32> to vector<8x128xbf16>
    %cst_233 = arith.constant dense<0.000000e+00> : vector<8x128xf32>
    %535 = tpu.matmul %534, %532, %cst_233 {dimension_numbers = #tpu.dot_dimension_numbers<[1], [0], [0], [1], [0, 0, 1, 1], [], []>} : vector<8x128xbf16>, vector<128x128xbf16>, vector<8x128xf32> -> vector<8x128xf32>
    %536 = vector.broadcast %533 : vector<1x128xf32> to vector<8x128xf32>
    %537 = arith.addf %535, %536 : vector<8x128xf32>
    %cst_234 = arith.constant dense<0.000000e+00> : vector<128xf32>
    %538 = vector.multi_reduction <add>, %537, %cst_234 [0] : vector<8x128xf32> to vector<128xf32>
    %539 = vector.shape_cast %538 : vector<128xf32> to vector<1x128xf32>
    %cst_235 = arith.constant 8.000000e+00 : f32
    %540 = vector.broadcast %cst_235 : f32 to vector<1x128xf32>
    %541 = arith.divf %539, %540 : vector<1x128xf32>
    %c0_236 = arith.constant 0 : index
    %c0_237 = arith.constant 0 : index
    %c0_238 = arith.constant 0 : index
    %542 = vector.load %arg18[%c0_236, %c0_237, %c0_238] : memref<1x1x128xf32, #tpu.memory_space<vmem>>, vector<1x1x128xf32>
    %543 = vector.shape_cast %542 : vector<1x1x128xf32> to vector<1x128xf32>
    %544 = vector.shape_cast %541 : vector<1x128xf32> to vector<1x1x128xf32>
    tpu.vector_store %arg18[%c0_236, %c0_237, %c0_238], %544 {strides = array<i32>} : memref<1x1x128xf32, #tpu.memory_space<vmem>>, vector<1x1x128xf32>,
    return
  }
  func.func @transform_0(%arg0: i32) -> (i32, i32, i32) {
    %c0_i32 = arith.constant 0 : i32
    %c0_i32_0 = arith.constant 0 : i32
    %c0_i32_1 = arith.constant 0 : i32
    return %arg0, %c0_i32, %c0_i32_0 : i32, i32, i32
  }
  func.func @transform_1(%arg0: i32) -> (i32, i32) {
    %c0_i32 = arith.constant 0 : i32
    %c0_i32_0 = arith.constant 0 : i32
    %c0_i32_1 = arith.constant 0 : i32
    return %c0_i32, %c0_i32_0 : i32, i32
  }
  func.func @transform_2(%arg0: i32) -> (i32, i32) {
    %c0_i32 = arith.constant 0 : i32
    %c0_i32_0 = arith.constant 0 : i32
    %c0_i32_1 = arith.constant 0 : i32
    return %c0_i32, %c0_i32_0 : i32, i32
  }
  func.func @transform_3(%arg0: i32) -> (i32, i32, i32) {
    %c0_i32 = arith.constant 0 : i32
    %c0_i32_0 = arith.constant 0 : i32
    %c0_i32_1 = arith.constant 0 : i32
    %c0_i32_2 = arith.constant 0 : i32
    return %c0_i32, %c0_i32_0, %c0_i32_1 : i32, i32, i32
  }
  func.func @transform_4(%arg0: i32) -> (i32, i32, i32) {
    %c0_i32 = arith.constant 0 : i32
    %c0_i32_0 = arith.constant 0 : i32
    %c0_i32_1 = arith.constant 0 : i32
    %c0_i32_2 = arith.constant 0 : i32
    return %c0_i32, %c0_i32_0, %c0_i32_1 : i32, i32, i32
  }
  func.func @transform_5(%arg0: i32) -> (i32, i32, i32) {
    %c0_i32 = arith.constant 0 : i32
    %c0_i32_0 = arith.constant 0 : i32
    %c0_i32_1 = arith.constant 0 : i32
    %c0_i32_2 = arith.constant 0 : i32
    return %c0_i32, %c0_i32_0, %c0_i32_1 : i32, i32, i32
  }
  func.func @transform_6(%arg0: i32) -> (i32, i32, i32) {
    %c0_i32 = arith.constant 0 : i32
    %c0_i32_0 = arith.constant 0 : i32
    %c0_i32_1 = arith.constant 0 : i32
    %c0_i32_2 = arith.constant 0 : i32
    return %c0_i32, %c0_i32_0, %c0_i32_1 : i32, i32, i32
  }
  func.func @transform_7(%arg0: i32) -> (i32, i32, i32) {
    %c0_i32 = arith.constant 0 : i32
    %c0_i32_0 = arith.constant 0 : i32
    %c0_i32_1 = arith.constant 0 : i32
    %c0_i32_2 = arith.constant 0 : i32
    return %c0_i32, %c0_i32_0, %c0_i32_1 : i32, i32, i32
  }
  func.func @transform_8(%arg0: i32) -> (i32, i32, i32) {
    %c0_i32 = arith.constant 0 : i32
    %c0_i32_0 = arith.constant 0 : i32
    %c0_i32_1 = arith.constant 0 : i32
    %c0_i32_2 = arith.constant 0 : i32
    return %c0_i32, %c0_i32_0, %c0_i32_1 : i32, i32, i32
  }
  func.func @transform_9(%arg0: i32) -> (i32, i32, i32) {
    %c0_i32 = arith.constant 0 : i32
    %c0_i32_0 = arith.constant 0 : i32
    %c0_i32_1 = arith.constant 0 : i32
    %c0_i32_2 = arith.constant 0 : i32
    return %c0_i32, %c0_i32_0, %c0_i32_1 : i32, i32, i32
  }
  func.func @transform_10(%arg0: i32) -> (i32, i32, i32) {
    %c0_i32 = arith.constant 0 : i32
    %c0_i32_0 = arith.constant 0 : i32
    %c0_i32_1 = arith.constant 0 : i32
    %c0_i32_2 = arith.constant 0 : i32
    return %c0_i32, %c0_i32_0, %c0_i32_1 : i32, i32, i32
  }
  func.func @transform_11(%arg0: i32) -> (i32, i32, i32) {
    %c0_i32 = arith.constant 0 : i32
    %c0_i32_0 = arith.constant 0 : i32
    %c0_i32_1 = arith.constant 0 : i32
    %c0_i32_2 = arith.constant 0 : i32
    return %c0_i32, %c0_i32_0, %c0_i32_1 : i32, i32, i32
  }
  func.func @transform_12(%arg0: i32) -> (i32, i32, i32) {
    %c0_i32 = arith.constant 0 : i32
    %c0_i32_0 = arith.constant 0 : i32
    %c0_i32_1 = arith.constant 0 : i32
    %c0_i32_2 = arith.constant 0 : i32
    return %c0_i32, %c0_i32_0, %c0_i32_1 : i32, i32, i32
  }
  func.func @transform_13(%arg0: i32) -> (i32, i32, i32) {
    %c0_i32 = arith.constant 0 : i32
    %c0_i32_0 = arith.constant 0 : i32
    %c0_i32_1 = arith.constant 0 : i32
    %c0_i32_2 = arith.constant 0 : i32
    return %c0_i32, %c0_i32_0, %c0_i32_1 : i32, i32, i32
  }
  func.func @transform_14(%arg0: i32) -> (i32, i32, i32) {
    %c0_i32 = arith.constant 0 : i32
    %c0_i32_0 = arith.constant 0 : i32
    %c0_i32_1 = arith.constant 0 : i32
    %c0_i32_2 = arith.constant 0 : i32
    return %c0_i32, %c0_i32_0, %c0_i32_1 : i32, i32, i32
  }
  func.func @transform_15(%arg0: i32) -> (i32, i32) {
    %c0_i32 = arith.constant 0 : i32
    %c0_i32_0 = arith.constant 0 : i32
    %c0_i32_1 = arith.constant 0 : i32
    return %c0_i32, %c0_i32_0 : i32, i32
  }
  func.func @transform_16(%arg0: i32) -> (i32, i32) {
    %c0_i32 = arith.constant 0 : i32
    %c0_i32_0 = arith.constant 0 : i32
    %c0_i32_1 = arith.constant 0 : i32
    return %c0_i32, %c0_i32_0 : i32, i32
  }
  func.func @transform_17(%arg0: i32) -> (i32, i32, i32) {
    %c0_i32 = arith.constant 0 : i32
    %c0_i32_0 = arith.constant 0 : i32
    %c0_i32_1 = arith.constant 0 : i32
    return %arg0, %c0_i32, %c0_i32_0 : i32, i32, i32
  }
}

</mosaic_0001>

<llo_original>
// kernel: observation_transformer_forward.1
$region0: #{observation_transformer_forward.1}
  #allocation0 [shape = 'u32[]', space=smem, size = 0x4, offset = 0x4, fixed_abs, tag = 'smem constant byte address 0x4 - core index']
  #allocation1 [shape = 'u32[72,128]{1,0:T(1,128)}', space=vmem, size = 0x9000, scoped, tag = 'internal scratch']
  %s0 = inlined_call_operand.vmem [shape: bf16[2,8,1024], index: 0, kind: input, shape index: {}]
  %s1 = inlined_call_operand.vmem [shape: bf16[1024,128], index: 1, kind: input, shape index: {}]
  %s2 = inlined_call_operand.hbm [shape: f32[1,128], index: 2, kind: input, shape index: {}]
  %s3 = inlined_call_operand.vmem [shape: bf16[3,128,384], index: 3, kind: input, shape index: {}]
  %s4 = inlined_call_operand.hbm [shape: f32[3,1,384], index: 4, kind: input, shape index: {}]
  %s5 = inlined_call_operand.vmem [shape: bf16[3,128,128], index: 5, kind: input, shape index: {}]
  %s6 = inlined_call_operand.hbm [shape: f32[3,1,128], index: 6, kind: input, shape index: {}]
  %s7 = inlined_call_operand.vmem [shape: bf16[3,128,256], index: 7, kind: input, shape index: {}]
  %s8 = inlined_call_operand.hbm [shape: f32[3,1,256], index: 8, kind: input, shape index: {}]
  %s9 = inlined_call_operand.vmem [shape: bf16[3,256,128], index: 9, kind: input, shape index: {}]
  %s10 = inlined_call_operand.hbm [shape: f32[3,1,128], index: 10, kind: input, shape index: {}]
  %s11 = inlined_call_operand.hbm [shape: f32[3,1,128], index: 11, kind: input, shape index: {}]
  %s12 = inlined_call_operand.hbm [shape: f32[3,1,128], index: 12, kind: input, shape index: {}]
  %s13 = inlined_call_operand.hbm [shape: f32[3,1,128], index: 13, kind: input, shape index: {}]
  %s14 = inlined_call_operand.hbm [shape: f32[3,1,128], index: 14, kind: input, shape index: {}]
  %s15 = inlined_call_operand.vmem [shape: bf16[128,128], index: 15, kind: input, shape index: {}]
  %s16 = inlined_call_operand.hbm [shape: f32[1,128], index: 16, kind: input, shape index: {}]
  %s17 = inlined_call_operand.hbm [shape: f32[2,1,128], index: 17, kind: output, shape index: {}]
  %s18 = sld [smem:[#allocation0]]
  $region141: #{observation_transformer_forward.1} parent=0
    _
  %s20 = ssub.s32 1, %s18
  %s21 = scalar_select 0, %s20, %s18
  $region1: #{observation_transformer_forward.1} parent=0
    #allocation2 [shape = 'u8[512]{0}', space=vmem, size = 0x400, scoped, tag = 'input window, operand 2, single buffered']
    #allocation3 [shape = 's32[2]{0}', space=sflag, size = 0x8, scoped, tag = 'scoped memory for observation_transformer_forward.1']
    #allocation4 [shape = 's32[2]{0}', space=sflag, size = 0x8, scoped, tag = 'scoped memory for observation_transformer_forward.1']
    #allocation5 [shape = 'u8[4608]{0}', space=vmem, size = 0x1400, scoped, tag = 'input window, operand 4, single buffered']
    #allocation6 [shape = 's32[1]{0}', space=sflag, size = 0x4, scoped, tag = 'scoped memory for observation_transformer_forward.1']
    #allocation7 [shape = 'u8[1536]{0}', space=vmem, size = 0x800, scoped, tag = 'input window, operand 6, single buffered']
    #allocation8 [shape = 'u8[3072]{0}', space=vmem, size = 0xc00, scoped, tag = 'input window, operand 8, single buffered']
    #allocation9 [shape = 's32[1]{0}', space=sflag, size = 0x4, scoped, tag = 'scoped memory for observation_transformer_forward.1']
    #allocation10 [shape = 'u8[1536]{0}', space=vmem, size = 0x800, scoped, tag = 'input window, operand 10, single buffered']
    #allocation11 [shape = 'u8[1536]{0}', space=vmem, size = 0x800, scoped, tag = 'input window, operand 11, single buffered']
    #allocation12 [shape = 's32[1]{0}', space=sflag, size = 0x4, scoped, tag = 'scoped memory for observation_transformer_forward.1']
    #allocation13 [shape = 'u8[1536]{0}', space=vmem, size = 0x800, scoped, tag = 'input window, operand 12, single buffered']
    #allocation14 [shape = 'u8[1536]{0}', space=vmem, size = 0x800, scoped, tag = 'input window, operand 13, single buffered']
    #allocation15 [shape = 's32[1]{0}', space=sflag, size = 0x4, scoped, tag = 'scoped memory for observation_transformer_forward.1']
    #allocation16 [shape = 'u8[1536]{0}', space=vmem, size = 0x800, scoped, tag = 'input window, operand 14, single buffered']
    #allocation17 [shape = 'u8[512]{0}', space=vmem, size = 0x400, scoped, tag = 'input window, operand 16, single buffered']
    #allocation18 [shape = 's32[1]{0}', space=sflag, size = 0x4, scoped, tag = 'scoped memory for observation_transformer_forward.1']
    #allocation19 [shape = 'u8[1024]{0}', space=vmem, size = 0x400, scoped, tag = 'output window, operand 0']
    %22 = vsyncpa [#allocation3], 0
    %23 = vsyncpa [#allocation6], 0
    %24 = vsyncpa [#allocation9], 0
    %25 = vsyncpa [#allocation12], 0
    %26 = vsyncpa [#allocation15], 0
    %27 = vsyncpa [#allocation18], 0
    %28 = vsyncpa [#allocation4], 0
    %s29 = scalar_lea.sflag [#allocation4], 1
    %30 = vsyncpa %s29, 0
    loop: start=0, step=1, limit=4
    $region2: #{observation_transformer_forward.1} parent=1 // loop_pre_header
      _
    $region3: #{observation_transformer_forward.1} parent=1 // loop_header
      %s32 = sphi 0, %s36
      %p33 = scmp.ge.s32.totalorder %s32, 4
      %s42 = sphi 0, %s44
      %s45 = sphi 0, %s42
      %s46 = sphi 0, %s45
      %s62 = sphi 0, %s46
      %s66 = sphi 0, %s66
      %s68 = sphi 0, %s66
      %s69 = sphi 0, %s68
      %s83 = sphi 0, %s69
      %s87 = sphi 0, %s87
      %s89 = sphi 0, %s87
      %s90 = sphi 0, %s89
      %s104 = sphi 0, %s90
      %s108 = sphi 0, %s108
      %s110 = sphi 0, %s108
      %s111 = sphi 0, %s110
      %s125 = sphi 0, %s111
      %s129 = sphi 0, %s129
      %s131 = sphi 0, %s129
      %s132 = sphi 0, %s131
      %s146 = sphi 0, %s132
      %s150 = sphi 0, %s150
      %s152 = sphi 0, %s150
      %s153 = sphi 0, %s152
      %s167 = sphi 0, %s153
      %s171 = sphi 0, %s171
      %s173 = sphi 0, %s171
      %s174 = sphi 0, %s173
      %s188 = sphi 0, %s174
      %s192 = sphi 0, %s192
      %s194 = sphi 0, %s192
      %s195 = sphi 0, %s194
      %s209 = sphi 0, %s195
      %s213 = sphi 0, %s213
      %s215 = sphi 0, %s213
      %s216 = sphi 0, %s215
      %s230 = sphi 0, %s216
      %s234 = sphi 0, %s234
      %s236 = sphi 0, %s234
      %s237 = sphi 0, %s236
      %s251 = sphi 0, %s237
      %s255 = sphi 0, %s255
      %s257 = sphi 0, %s255
      %s258 = sphi 0, %s257
      %s272 = sphi 0, %s258
      %s276 = sphi 0, %s276
      %s278 = sphi 0, %s276
      %s279 = sphi 0, %s278
      %s293 = sphi 0, %s279
      %s297 = sphi 0, %s297
      %s299 = sphi 0, %s297
      %s300 = sphi 0, %s299
      %s314 = sphi 0, %s300
      %s318 = sphi 0, %s318
      %s320 = sphi 0, %s318
      %s321 = sphi 0, %s320
      %s335 = sphi 0, %s321
      %s339 = sphi 0, %s339
      %s341 = sphi 0, %s339
      %s342 = sphi 0, %s341
      %s356 = sphi 0, %s342
      %s360 = sphi 0, %s360
      %s362 = sphi 0, %s360
      %s363 = sphi 0, %s362
      %s377 = sphi 0, %s363
      %s381 = sphi 0, %s381
      %s383 = sphi 0, %s381
      %s384 = sphi 0, %s383
      %s398 = sphi 0, %s384
      %s404 = sphi 0, %s406
      %s407 = sphi 0, %s404
      %s408 = sphi 0, %s407
      %s424 = sphi 0, %s408
    $region4: #{observation_transformer_forward.1} parent=1 // loop_header_branch
      %35 = sbr.rel (%p33) target = $region8
    $region5: #{observation_transformer_forward.1} parent=1 // loop_body
      %s37 = ssub.s32 %s32, 1
      %s38 = ssub.s32 %s32, 2
      %s39 = sadd.s32 %s32, 1
      %s40 = ssub.s32 %s32, %s39
      %p41 = scmp.eq.s32.totalorder %s40, 0
      %s43 = sadd.s32 %s42, 1
      %s44 = scalar_select %p41, %s42, %s43
      %p47 = pneg %p41
      %p48 = scmp.eq.s32.totalorder %s32, 1
      %p49 = por %p47, %p48
      %p50 = scmp.ne.s32.totalorder %s42, %s45
      %p51 = scmp.eq.s32.totalorder %s32, 0
      %p52 = por %p50, %p51
      %p53 = scmp.ne.s32.totalorder %s42, %s45
      %p54 = scmp.eq.s32.totalorder %s37, 1
      %p55 = por %p53, %p54
      %p56 = scmp.ne.s32.totalorder %s45, %s46
      %p57 = scmp.eq.s32.totalorder %s37, 0
      %p58 = por %p56, %p57
      %p59 = scmp.ne.s32.totalorder %s45, %s46
      %p60 = scmp.eq.s32.totalorder %s38, 1
      %p61 = por %p59, %p60
      %p63 = scmp.ne.s32.totalorder %s46, %s62
      %p64 = scmp.eq.s32.totalorder %s38, 0
      %p65 = por %p63, %p64
      %s67 = sadd.s32 %s66, 1
      %p70 = scmp.eq.s32.totalorder %s32, 1
      %p71 = scmp.ne.s32.totalorder %s66, %s68
      %p72 = scmp.eq.s32.totalorder %s32, 0
      %p73 = por %p71, %p72
      %p74 = scmp.ne.s32.totalorder %s66, %s68
      %p75 = scmp.eq.s32.totalorder %s37, 1
      %p76 = por %p74, %p75
      %p77 = scmp.ne.s32.totalorder %s68, %s69
      %p78 = scmp.eq.s32.totalorder %s37, 0
      %p79 = por %p77, %p78
      %p80 = scmp.ne.s32.totalorder %s68, %s69
      %p81 = scmp.eq.s32.totalorder %s38, 1
      %p82 = por %p80, %p81
      %p84 = scmp.ne.s32.totalorder %s69, %s83
      %p85 = scmp.eq.s32.totalorder %s38, 0
      %p86 = por %p84, %p85
      %s88 = sadd.s32 %s87, 1
      %p91 = scmp.eq.s32.totalorder %s32, 1
      %p92 = scmp.ne.s32.totalorder %s87, %s89
      %p93 = scmp.eq.s32.totalorder %s32, 0
      %p94 = por %p92, %p93
      %p95 = scmp.ne.s32.totalorder %s87, %s89
      %p96 = scmp.eq.s32.totalorder %s37, 1
      %p97 = por %p95, %p96
      %p98 = scmp.ne.s32.totalorder %s89, %s90
      %p99 = scmp.eq.s32.totalorder %s37, 0
      %p100 = por %p98, %p99
      %p101 = scmp.ne.s32.totalorder %s89, %s90
      %p102 = scmp.eq.s32.totalorder %s38, 1
      %p103 = por %p101, %p102
      %p105 = scmp.ne.s32.totalorder %s90, %s104
      %p106 = scmp.eq.s32.totalorder %s38, 0
      %p107 = por %p105, %p106
      %s109 = sadd.s32 %s108, 1
      %p112 = scmp.eq.s32.totalorder %s32, 1
      %p113 = scmp.ne.s32.totalorder %s108, %s110
      %p114 = scmp.eq.s32.totalorder %s32, 0
      %p115 = por %p113, %p114
      %p116 = scmp.ne.s32.totalorder %s108, %s110
      %p117 = scmp.eq.s32.totalorder %s37, 1
      %p118 = por %p116, %p117
      %p119 = scmp.ne.s32.totalorder %s110, %s111
      %p120 = scmp.eq.s32.totalorder %s37, 0
      %p121 = por %p119, %p120
      %p122 = scmp.ne.s32.totalorder %s110, %s111
      %p123 = scmp.eq.s32.totalorder %s38, 1
      %p124 = por %p122, %p123
      %p126 = scmp.ne.s32.totalorder %s111, %s125
      %p127 = scmp.eq.s32.totalorder %s38, 0
      %p128 = por %p126, %p127
      %s130 = sadd.s32 %s129, 1
      %p133 = scmp.eq.s32.totalorder %s32, 1
      %p134 = scmp.ne.s32.totalorder %s129, %s131
      %p135 = scmp.eq.s32.totalorder %s32, 0
      %p136 = por %p134, %p135
      %p137 = scmp.ne.s32.totalorder %s129, %s131
      %p138 = scmp.eq.s32.totalorder %s37, 1
      %p139 = por %p137, %p138
      %p140 = scmp.ne.s32.totalorder %s131, %s132
      %p141 = scmp.eq.s32.totalorder %s37, 0
      %p142 = por %p140, %p141
      %p143 = scmp.ne.s32.totalorder %s131, %s132
      %p144 = scmp.eq.s32.totalorder %s38, 1
      %p145 = por %p143, %p144
      %p147 = scmp.ne.s32.totalorder %s132, %s146
      %p148 = scmp.eq.s32.totalorder %s38, 0
      %p149 = por %p147, %p148
      %s151 = sadd.s32 %s150, 1
      %p154 = scmp.eq.s32.totalorder %s32, 1
      %p155 = scmp.ne.s32.totalorder %s150, %s152
      %p156 = scmp.eq.s32.totalorder %s32, 0
      %p157 = por %p155, %p156
      %p158 = scmp.ne.s32.totalorder %s150, %s152
      %p159 = scmp.eq.s32.totalorder %s37, 1
      %p160 = por %p158, %p159
      %p161 = scmp.ne.s32.totalorder %s152, %s153
      %p162 = scmp.eq.s32.totalorder %s37, 0
      %p163 = por %p161, %p162
      %p164 = scmp.ne.s32.totalorder %s152, %s153
      %p165 = scmp.eq.s32.totalorder %s38, 1
      %p166 = por %p164, %p165
      %p168 = scmp.ne.s32.totalorder %s153, %s167
      %p169 = scmp.eq.s32.totalorder %s38, 0
      %p170 = por %p168, %p169
      %s172 = sadd.s32 %s171, 1
      %p175 = scmp.eq.s32.totalorder %s32, 1
      %p176 = scmp.ne.s32.totalorder %s171, %s173
      %p177 = scmp.eq.s32.totalorder %s32, 0
      %p178 = por %p176, %p177
      %p179 = scmp.ne.s32.totalorder %s171, %s173
      %p180 = scmp.eq.s32.totalorder %s37, 1
      %p181 = por %p179, %p180
      %p182 = scmp.ne.s32.totalorder %s173, %s174
      %p183 = scmp.eq.s32.totalorder %s37, 0
      %p184 = por %p182, %p183
      %p185 = scmp.ne.s32.totalorder %s173, %s174
      %p186 = scmp.eq.s32.totalorder %s38, 1
      %p187 = por %p185, %p186
      %p189 = scmp.ne.s32.totalorder %s174, %s188
      %p190 = scmp.eq.s32.totalorder %s38, 0
      %p191 = por %p189, %p190
      %s193 = sadd.s32 %s192, 1
      %p196 = scmp.eq.s32.totalorder %s32, 1
      %p197 = scmp.ne.s32.totalorder %s192, %s194
      %p198 = scmp.eq.s32.totalorder %s32, 0
      %p199 = por %p197, %p198
      %p200 = scmp.ne.s32.totalorder %s192, %s194
      %p201 = scmp.eq.s32.totalorder %s37, 1
      %p202 = por %p200, %p201
      %p203 = scmp.ne.s32.totalorder %s194, %s195
      %p204 = scmp.eq.s32.totalorder %s37, 0
      %p205 = por %p203, %p204
      %p206 = scmp.ne.s32.totalorder %s194, %s195
      %p207 = scmp.eq.s32.totalorder %s38, 1
      %p208 = por %p206, %p207
      %p210 = scmp.ne.s32.totalorder %s195, %s209
      %p211 = scmp.eq.s32.totalorder %s38, 0
      %p212 = por %p210, %p211
      %s214 = sadd.s32 %s213, 1
      %p217 = scmp.eq.s32.totalorder %s32, 1
      %p218 = scmp.ne.s32.totalorder %s213, %s215
      %p219 = scmp.eq.s32.totalorder %s32, 0
      %p220 = por %p218, %p219
      %p221 = scmp.ne.s32.totalorder %s213, %s215
      %p222 = scmp.eq.s32.totalorder %s37, 1
      %p223 = por %p221, %p222
      %p224 = scmp.ne.s32.totalorder %s215, %s216
      %p225 = scmp.eq.s32.totalorder %s37, 0
      %p226 = por %p224, %p225
      %p227 = scmp.ne.s32.totalorder %s215, %s216
      %p228 = scmp.eq.s32.totalorder %s38, 1
      %p229 = por %p227, %p228
      %p231 = scmp.ne.s32.totalorder %s216, %s230
      %p232 = scmp.eq.s32.totalorder %s38, 0
      %p233 = por %p231, %p232
      %s235 = sadd.s32 %s234, 1
      %p238 = scmp.eq.s32.totalorder %s32, 1
      %p239 = scmp.ne.s32.totalorder %s234, %s236
      %p240 = scmp.eq.s32.totalorder %s32, 0
      %p241 = por %p239, %p240
      %p242 = scmp.ne.s32.totalorder %s234, %s236
      %p243 = scmp.eq.s32.totalorder %s37, 1
      %p244 = por %p242, %p243
      %p245 = scmp.ne.s32.totalorder %s236, %s237
      %p246 = scmp.eq.s32.totalorder %s37, 0
      %p247 = por %p245, %p246
      %p248 = scmp.ne.s32.totalorder %s236, %s237
      %p249 = scmp.eq.s32.totalorder %s38, 1
      %p250 = por %p248, %p249
      %p252 = scmp.ne.s32.totalorder %s237, %s251
      %p253 = scmp.eq.s32.totalorder %s38, 0
      %p254 = por %p252, %p253
      %s256 = sadd.s32 %s255, 1
      %p259 = scmp.eq.s32.totalorder %s32, 1
      %p260 = scmp.ne.s32.totalorder %s255, %s257
      %p261 = scmp.eq.s32.totalorder %s32, 0
      %p262 = por %p260, %p261
      %p263 = scmp.ne.s32.totalorder %s255, %s257
      %p264 = scmp.eq.s32.totalorder %s37, 1
      %p265 = por %p263, %p264
      %p266 = scmp.ne.s32.totalorder %s257, %s258
      %p267 = scmp.eq.s32.totalorder %s37, 0
      %p268 = por %p266, %p267
      %p269 = scmp.ne.s32.totalorder %s257, %s258
      %p270 = scmp.eq.s32.totalorder %s38, 1
      %p271 = por %p269, %p270
      %p273 = scmp.ne.s32.totalorder %s258, %s272
      %p274 = scmp.eq.s32.totalorder %s38, 0
      %p275 = por %p273, %p274
      %s277 = sadd.s32 %s276, 1
      %p280 = scmp.eq.s32.totalorder %s32, 1
      %p281 = scmp.ne.s32.totalorder %s276, %s278
      %p282 = scmp.eq.s32.totalorder %s32, 0
      %p283 = por %p281, %p282
      %p284 = scmp.ne.s32.totalorder %s276, %s278
      %p285 = scmp.eq.s32.totalorder %s37, 1
      %p286 = por %p284, %p285
      %p287 = scmp.ne.s32.totalorder %s278, %s279
      %p288 = scmp.eq.s32.totalorder %s37, 0
      %p289 = por %p287, %p288
      %p290 = scmp.ne.s32.totalorder %s278, %s279
      %p291 = scmp.eq.s32.totalorder %s38, 1
      %p292 = por %p290, %p291
      %p294 = scmp.ne.s32.totalorder %s279, %s293
      %p295 = scmp.eq.s32.totalorder %s38, 0
      %p296 = por %p294, %p295
      %s298 = sadd.s32 %s297, 1
      %p301 = scmp.eq.s32.totalorder %s32, 1
      %p302 = scmp.ne.s32.totalorder %s297, %s299
      %p303 = scmp.eq.s32.totalorder %s32, 0
      %p304 = por %p302, %p303
      %p305 = scmp.ne.s32.totalorder %s297, %s299
      %p306 = scmp.eq.s32.totalorder %s37, 1
      %p307 = por %p305, %p306
      %p308 = scmp.ne.s32.totalorder %s299, %s300
      %p309 = scmp.eq.s32.totalorder %s37, 0
      %p310 = por %p308, %p309
      %p311 = scmp.ne.s32.totalorder %s299, %s300
      %p312 = scmp.eq.s32.totalorder %s38, 1
      %p313 = por %p311, %p312
      %p315 = scmp.ne.s32.totalorder %s300, %s314
      %p316 = scmp.eq.s32.totalorder %s38, 0
      %p317 = por %p315, %p316
      %s319 = sadd.s32 %s318, 1
      %p322 = scmp.eq.s32.totalorder %s32, 1
      %p323 = scmp.ne.s32.totalorder %s318, %s320
      %p324 = scmp.eq.s32.totalorder %s32, 0
      %p325 = por %p323, %p324
      %p326 = scmp.ne.s32.totalorder %s318, %s320
      %p327 = scmp.eq.s32.totalorder %s37, 1
      %p328 = por %p326, %p327
      %p329 = scmp.ne.s32.totalorder %s320, %s321
      %p330 = scmp.eq.s32.totalorder %s37, 0
      %p331 = por %p329, %p330
      %p332 = scmp.ne.s32.totalorder %s320, %s321
      %p333 = scmp.eq.s32.totalorder %s38, 1
      %p334 = por %p332, %p333
      %p336 = scmp.ne.s32.totalorder %s321, %s335
      %p337 = scmp.eq.s32.totalorder %s38, 0
      %p338 = por %p336, %p337
      %s340 = sadd.s32 %s339, 1
      %p343 = scmp.eq.s32.totalorder %s32, 1
      %p344 = scmp.ne.s32.totalorder %s339, %s341
      %p345 = scmp.eq.s32.totalorder %s32, 0
      %p346 = por %p344, %p345
      %p347 = scmp.ne.s32.totalorder %s339, %s341
      %p348 = scmp.eq.s32.totalorder %s37, 1
      %p349 = por %p347, %p348
      %p350 = scmp.ne.s32.totalorder %s341, %s342
      %p351 = scmp.eq.s32.totalorder %s37, 0
      %p352 = por %p350, %p351
      %p353 = scmp.ne.s32.totalorder %s341, %s342
      %p354 = scmp.eq.s32.totalorder %s38, 1
      %p355 = por %p353, %p354
      %p357 = scmp.ne.s32.totalorder %s342, %s356
      %p358 = scmp.eq.s32.totalorder %s38, 0
      %p359 = por %p357, %p358
      %s361 = sadd.s32 %s360, 1
      %p364 = scmp.eq.s32.totalorder %s32, 1
      %p365 = scmp.ne.s32.totalorder %s360, %s362
      %p366 = scmp.eq.s32.totalorder %s32, 0
      %p367 = por %p365, %p366
      %p368 = scmp.ne.s32.totalorder %s360, %s362
      %p369 = scmp.eq.s32.totalorder %s37, 1
      %p370 = por %p368, %p369
      %p371 = scmp.ne.s32.totalorder %s362, %s363
      %p372 = scmp.eq.s32.totalorder %s37, 0
      %p373 = por %p371, %p372
      %p374 = scmp.ne.s32.totalorder %s362, %s363
      %p375 = scmp.eq.s32.totalorder %s38, 1
      %p376 = por %p374, %p375
      %p378 = scmp.ne.s32.totalorder %s363, %s377
      %p379 = scmp.eq.s32.totalorder %s38, 0
      %p380 = por %p378, %p379
      %s382 = sadd.s32 %s381, 1
      %p385 = scmp.eq.s32.totalorder %s32, 1
      %p386 = scmp.ne.s32.totalorder %s381, %s383
      %p387 = scmp.eq.s32.totalorder %s32, 0
      %p388 = por %p386, %p387
      %p389 = scmp.ne.s32.totalorder %s381, %s383
      %p390 = scmp.eq.s32.totalorder %s37, 1
      %p391 = por %p389, %p390
      %p392 = scmp.ne.s32.totalorder %s383, %s384
      %p393 = scmp.eq.s32.totalorder %s37, 0
      %p394 = por %p392, %p393
      %p395 = scmp.ne.s32.totalorder %s383, %s384
      %p396 = scmp.eq.s32.totalorder %s38, 1
      %p397 = por %p395, %p396
      %p399 = scmp.ne.s32.totalorder %s384, %s398
      %p400 = scmp.eq.s32.totalorder %s38, 0
      %p401 = por %p399, %p400
      %s402 = ssub.s32 %s32, %s39
      %p403 = scmp.eq.s32.totalorder %s402, 0
      %s405 = sadd.s32 %s404, 1
      %s406 = scalar_select %p403, %s404, %s405
      %p409 = pneg %p403
      %p410 = scmp.eq.s32.totalorder %s32, 1
      %p411 = por %p409, %p410
      %p412 = scmp.ne.s32.totalorder %s404, %s407
      %p413 = scmp.eq.s32.totalorder %s32, 0
      %p414 = por %p412, %p413
      %p415 = scmp.ne.s32.totalorder %s404, %s407
      %p416 = scmp.eq.s32.totalorder %s37, 1
      %p417 = por %p415, %p416
      %p418 = scmp.ne.s32.totalorder %s407, %s408
      %p419 = scmp.eq.s32.totalorder %s37, 0
      %p420 = por %p418, %p419
      %p421 = scmp.ne.s32.totalorder %s407, %s408
      %p422 = scmp.eq.s32.totalorder %s38, 1
      %p423 = por %p421, %p422
      %p425 = scmp.ne.s32.totalorder %s408, %s424
      %p426 = scmp.eq.s32.totalorder %s38, 0
      %p427 = por %p425, %p426
      %p428 = scmp.le.s32.totalorder 1, %s32
      %p429 = scmp.lt.s32.totalorder %s32, 3
      %p430 = pnand %p428, %p429
      %p431 = pneg %p430
      // Predicated region
      $region9: #{observation_transformer_forward.1} parent=5 // pred_check
        _
      $region10: #{observation_transformer_forward.1} parent=5 // pred_check_branch
        %433 = sbr.rel (%p430) target = $region12
      $region11: #{observation_transformer_forward.1} parent=5 // pred_region
        %s434 = ssub.s32 %s32, 1
        // Predicated region
        $region13: #{observation_transformer_forward.1} parent=11 // pred_check
          %p435 = pneg %p79
        $region14: #{observation_transformer_forward.1} parent=11 // pred_check_branch
          %437 = sbr.rel (%p435) target = $region16
        $region15: #{observation_transformer_forward.1} parent=11 // pred_region
          _
        $region16: #{observation_transformer_forward.1} parent=11 // pred_fallthru
          _
        // Predicated region
        $region17: #{observation_transformer_forward.1} parent=11 // pred_check
          %p438 = pneg %p100
        $region18: #{observation_transformer_forward.1} parent=11 // pred_check_branch
          %440 = sbr.rel (%p438) target = $region20
        $region19: #{observation_transformer_forward.1} parent=11 // pred_region
          %442 = vsyncadd [#allocation3], 0
          %s444 = sshll.u32 %s2, 4
          %s445 = int_to_ptr.hbm [resolvable:$true] %s444
          %s446 = sshll.u32 [#allocation2], 4
          %s447 = int_to_ptr.vmem [resolvable:$true] %s446
          %449 = dma.hbm_to_vmem [thread:$0]  %s445, 16, %s447, [#allocation3]
        $region20: #{observation_transformer_forward.1} parent=11 // pred_fallthru
          _
        // Predicated region
        $region21: #{observation_transformer_forward.1} parent=11 // pred_check
          %p450 = pneg %p121
        $region22: #{observation_transformer_forward.1} parent=11 // pred_check_branch
          %452 = sbr.rel (%p450) target = $region24
        $region23: #{observation_transformer_forward.1} parent=11 // pred_region
          _
        $region24: #{observation_transformer_forward.1} parent=11 // pred_fallthru
          _
        // Predicated region
        $region25: #{observation_transformer_forward.1} parent=11 // pred_check
          %p453 = pneg %p142
        $region26: #{observation_transformer_forward.1} parent=11 // pred_check_branch
          %455 = sbr.rel (%p453) target = $region28
        $region27: #{observation_transformer_forward.1} parent=11 // pred_region
          %457 = vsyncadd [#allocation6], 0
          %s458 = sshll.u32 %s4, 4
          %s459 = int_to_ptr.hbm [resolvable:$true] %s458
          %s460 = sshll.u32 [#allocation5], 4
          %s461 = int_to_ptr.vmem [resolvable:$true] %s460
          %466 = dma.hbm_to_vmem [thread:$0]  %s459, 144, %s461, [#allocation6], 48, 48, 3
        $region28: #{observation_transformer_forward.1} parent=11 // pred_fallthru
          _
        // Predicated region
        $region29: #{observation_transformer_forward.1} parent=11 // pred_check
          %p467 = pneg %p163
        $region30: #{observation_transformer_forward.1} parent=11 // pred_check_branch
          %469 = sbr.rel (%p467) target = $region32
        $region31: #{observation_transformer_forward.1} parent=11 // pred_region
          _
        $region32: #{observation_transformer_forward.1} parent=11 // pred_fallthru
          _
        // Predicated region
        $region33: #{observation_transformer_forward.1} parent=11 // pred_check
          %p470 = pneg %p184
        $region34: #{observation_transformer_forward.1} parent=11 // pred_check_branch
          %472 = sbr.rel (%p470) target = $region36
        $region35: #{observation_transformer_forward.1} parent=11 // pred_region
          %474 = vsyncadd [#allocation6], 0
          %s475 = sshll.u32 %s6, 4
          %s476 = int_to_ptr.hbm [resolvable:$true] %s475
          %s477 = sshll.u32 [#allocation7], 4
          %s478 = int_to_ptr.vmem [resolvable:$true] %s477
          %483 = dma.hbm_to_vmem [thread:$0]  %s476, 48, %s478, [#allocation6], 16, 16, 1
        $region36: #{observation_transformer_forward.1} parent=11 // pred_fallthru
          _
        // Predicated region
        $region37: #{observation_transformer_forward.1} parent=11 // pred_check
          %p484 = pneg %p205
        $region38: #{observation_transformer_forward.1} parent=11 // pred_check_branch
          %486 = sbr.rel (%p484) target = $region40
        $region39: #{observation_transformer_forward.1} parent=11 // pred_region
          _
        $region40: #{observation_transformer_forward.1} parent=11 // pred_fallthru
          _
        // Predicated region
        $region41: #{observation_transformer_forward.1} parent=11 // pred_check
          %p487 = pneg %p226
        $region42: #{observation_transformer_forward.1} parent=11 // pred_check_branch
          %489 = sbr.rel (%p487) target = $region44
        $region43: #{observation_transformer_forward.1} parent=11 // pred_region
          %491 = vsyncadd [#allocation9], 0
          %s492 = sshll.u32 %s8, 4
          %s493 = int_to_ptr.hbm [resolvable:$true] %s492
          %s494 = sshll.u32 [#allocation8], 4
          %s495 = int_to_ptr.vmem [resolvable:$true] %s494
          %500 = dma.hbm_to_vmem [thread:$0]  %s493, 96, %s495, [#allocation9], 32, 32, 2
        $region44: #{observation_transformer_forward.1} parent=11 // pred_fallthru
          _
        // Predicated region
        $region45: #{observation_transformer_forward.1} parent=11 // pred_check
          %p501 = pneg %p247
        $region46: #{observation_transformer_forward.1} parent=11 // pred_check_branch
          %503 = sbr.rel (%p501) target = $region48
        $region47: #{observation_transformer_forward.1} parent=11 // pred_region
          _
        $region48: #{observation_transformer_forward.1} parent=11 // pred_fallthru
          _
        // Predicated region
        $region49: #{observation_transformer_forward.1} parent=11 // pred_check
          %p504 = pneg %p268
        $region50: #{observation_transformer_forward.1} parent=11 // pred_check_branch
          %506 = sbr.rel (%p504) target = $region52
        $region51: #{observation_transformer_forward.1} parent=11 // pred_region
          %508 = vsyncadd [#allocation9], 0
          %s509 = sshll.u32 %s10, 4
          %s510 = int_to_ptr.hbm [resolvable:$true] %s509
          %s511 = sshll.u32 [#allocation10], 4
          %s512 = int_to_ptr.vmem [resolvable:$true] %s511
          %517 = dma.hbm_to_vmem [thread:$0]  %s510, 48, %s512, [#allocation9], 16, 16, 1
        $region52: #{observation_transformer_forward.1} parent=11 // pred_fallthru
          _
        // Predicated region
        $region53: #{observation_transformer_forward.1} parent=11 // pred_check
          %p518 = pneg %p289
        $region54: #{observation_transformer_forward.1} parent=11 // pred_check_branch
          %520 = sbr.rel (%p518) target = $region56
        $region55: #{observation_transformer_forward.1} parent=11 // pred_region
          %522 = vsyncadd [#allocation12], 0
          %s523 = sshll.u32 %s11, 4
          %s524 = int_to_ptr.hbm [resolvable:$true] %s523
          %s525 = sshll.u32 [#allocation11], 4
          %s526 = int_to_ptr.vmem [resolvable:$true] %s525
          %531 = dma.hbm_to_vmem [thread:$0]  %s524, 48, %s526, [#allocation12], 16, 16, 1
        $region56: #{observation_transformer_forward.1} parent=11 // pred_fallthru
          _
        // Predicated region
        $region57: #{observation_transformer_forward.1} parent=11 // pred_check
          %p532 = pneg %p310
        $region58: #{observation_transformer_forward.1} parent=11 // pred_check_branch
          %534 = sbr.rel (%p532) target = $region60
        $region59: #{observation_transformer_forward.1} parent=11 // pred_region
          %536 = vsyncadd [#allocation12], 0
          %s537 = sshll.u32 %s12, 4
          %s538 = int_to_ptr.hbm [resolvable:$true] %s537
          %s539 = sshll.u32 [#allocation13], 4
          %s540 = int_to_ptr.vmem [resolvable:$true] %s539
          %545 = dma.hbm_to_vmem [thread:$0]  %s538, 48, %s540, [#allocation12], 16, 16, 1
        $region60: #{observation_transformer_forward.1} parent=11 // pred_fallthru
          _
        // Predicated region
        $region61: #{observation_transformer_forward.1} parent=11 // pred_check
          %p546 = pneg %p331
        $region62: #{observation_transformer_forward.1} parent=11 // pred_check_branch
          %548 = sbr.rel (%p546) target = $region64
        $region63: #{observation_transformer_forward.1} parent=11 // pred_region
          %550 = vsyncadd [#allocation15], 0
          %s551 = sshll.u32 %s13, 4
          %s552 = int_to_ptr.hbm [resolvable:$true] %s551
          %s553 = sshll.u32 [#allocation14], 4
          %s554 = int_to_ptr.vmem [resolvable:$true] %s553
          %559 = dma.hbm_to_vmem [thread:$0]  %s552, 48, %s554, [#allocation15], 16, 16, 1
        $region64: #{observation_transformer_forward.1} parent=11 // pred_fallthru
          _
        // Predicated region
        $region65: #{observation_transformer_forward.1} parent=11 // pred_check
          %p560 = pneg %p352
        $region66: #{observation_transformer_forward.1} parent=11 // pred_check_branch
          %562 = sbr.rel (%p560) target = $region68
        $region67: #{observation_transformer_forward.1} parent=11 // pred_region
          %564 = vsyncadd [#allocation15], 0
          %s565 = sshll.u32 %s14, 4
          %s566 = int_to_ptr.hbm [resolvable:$true] %s565
          %s567 = sshll.u32 [#allocation16], 4
          %s568 = int_to_ptr.vmem [resolvable:$true] %s567
          %573 = dma.hbm_to_vmem [thread:$0]  %s566, 48, %s568, [#allocation15], 16, 16, 1
        $region68: #{observation_transformer_forward.1} parent=11 // pred_fallthru
          _
        // Predicated region
        $region69: #{observation_transformer_forward.1} parent=11 // pred_check
          %p574 = pneg %p373
        $region70: #{observation_transformer_forward.1} parent=11 // pred_check_branch
          %576 = sbr.rel (%p574) target = $region72
        $region71: #{observation_transformer_forward.1} parent=11 // pred_region
          _
        $region72: #{observation_transformer_forward.1} parent=11 // pred_fallthru
          _
        // Predicated region
        $region73: #{observation_transformer_forward.1} parent=11 // pred_check
          %p577 = pneg %p394
        $region74: #{observation_transformer_forward.1} parent=11 // pred_check_branch
          %579 = sbr.rel (%p577) target = $region76
        $region75: #{observation_transformer_forward.1} parent=11 // pred_region
          %581 = vsyncadd [#allocation18], 0
          %s583 = sshll.u32 %s16, 4
          %s584 = int_to_ptr.hbm [resolvable:$true] %s583
          %s585 = sshll.u32 [#allocation17], 4
          %s586 = int_to_ptr.vmem [resolvable:$true] %s585
          %588 = dma.hbm_to_vmem [thread:$0]  %s584, 16, %s586, [#allocation18]
        $region76: #{observation_transformer_forward.1} parent=11 // pred_fallthru
          _
      $region12: #{observation_transformer_forward.1} parent=5 // pred_fallthru
        _
      %p589 = scmp.lt.s32.totalorder %s32, 2
      // Predicated region
      $region77: #{observation_transformer_forward.1} parent=5 // pred_check
        %p590 = pneg %p589
      $region78: #{observation_transformer_forward.1} parent=5 // pred_check_branch
        %592 = sbr.rel (%p590) target = $region80
      $region79: #{observation_transformer_forward.1} parent=5 // pred_region
        // Predicated region
        $region81: #{observation_transformer_forward.1} parent=79 // pred_check
          %p593 = pneg %p52
        $region82: #{observation_transformer_forward.1} parent=79 // pred_check_branch
          %595 = sbr.rel (%p593) target = $region84
        $region83: #{observation_transformer_forward.1} parent=79 // pred_region
          %p596 = scmp.lt.s32.totalorder %s32, 1
          %s597 = scalar_select %p596, %s32, 1
          %s598 = smul.addr %s597, 8
          %s599 = smul.addr %s598, 4
          %s600 = scalar_lea.vmem %s0, %s599
        $region84: #{observation_transformer_forward.1} parent=79 // pred_fallthru
          _
      $region80: #{observation_transformer_forward.1} parent=5 // pred_fallthru
        _
      %p601 = scmp.le.s32.totalorder 1, %s32
      %p602 = scmp.lt.s32.totalorder %s32, 3
      %p603 = pnand %p601, %p602
      %p604 = pneg %p603
      // Predicated region
      $region85: #{observation_transformer_forward.1} parent=5 // pred_check
        _
      $region86: #{observation_transformer_forward.1} parent=5 // pred_check_branch
        %606 = sbr.rel (%p603) target = $region88
      $region87: #{observation_transformer_forward.1} parent=5 // pred_region
        %s607 = ssub.s32 %s32, 1
        // Predicated region
        $region89: #{observation_transformer_forward.1} parent=87 // pred_check
          %p608 = pneg %p100
        $region90: #{observation_transformer_forward.1} parent=87 // pred_check_branch
          %610 = sbr.rel (%p608) target = $region92
        $region91: #{observation_transformer_forward.1} parent=87 // pred_region
          %612 = dma.done [#allocation3], 16
        $region92: #{observation_transformer_forward.1} parent=87 // pred_fallthru
          _
        // Predicated region
        $region93: #{observation_transformer_forward.1} parent=87 // pred_check
          %p613 = pneg %p142
        $region94: #{observation_transformer_forward.1} parent=87 // pred_check_branch
          %615 = sbr.rel (%p613) target = $region96
        $region95: #{observation_transformer_forward.1} parent=87 // pred_region
          %617 = dma.done [#allocation6], 144
        $region96: #{observation_transformer_forward.1} parent=87 // pred_fallthru
          _
        // Predicated region
        $region97: #{observation_transformer_forward.1} parent=87 // pred_check
          %p618 = pneg %p184
        $region98: #{observation_transformer_forward.1} parent=87 // pred_check_branch
          %620 = sbr.rel (%p618) target = $region100
        $region99: #{observation_transformer_forward.1} parent=87 // pred_region
          %622 = dma.done [#allocation6], 48
        $region100: #{observation_transformer_forward.1} parent=87 // pred_fallthru
          _
        // Predicated region
        $region101: #{observation_transformer_forward.1} parent=87 // pred_check
          %p623 = pneg %p226
        $region102: #{observation_transformer_forward.1} parent=87 // pred_check_branch
          %625 = sbr.rel (%p623) target = $region104
        $region103: #{observation_transformer_forward.1} parent=87 // pred_region
          %627 = dma.done [#allocation9], 96
        $region104: #{observation_transformer_forward.1} parent=87 // pred_fallthru
          _
        // Predicated region
        $region105: #{observation_transformer_forward.1} parent=87 // pred_check
          %p628 = pneg %p268
        $region106: #{observation_transformer_forward.1} parent=87 // pred_check_branch
          %630 = sbr.rel (%p628) target = $region108
        $region107: #{observation_transformer_forward.1} parent=87 // pred_region
          %632 = dma.done [#allocation9], 48
        $region108: #{observation_transformer_forward.1} parent=87 // pred_fallthru
          _
        // Predicated region
        $region109: #{observation_transformer_forward.1} parent=87 // pred_check
          %p633 = pneg %p289
        $region110: #{observation_transformer_forward.1} parent=87 // pred_check_branch
          %635 = sbr.rel (%p633) target = $region112
        $region111: #{observation_transformer_forward.1} parent=87 // pred_region
          %637 = dma.done [#allocation12], 48
        $region112: #{observation_transformer_forward.1} parent=87 // pred_fallthru
          _
        // Predicated region
        $region113: #{observation_transformer_forward.1} parent=87 // pred_check
          %p638 = pneg %p310
        $region114: #{observation_transformer_forward.1} parent=87 // pred_check_branch
          %640 = sbr.rel (%p638) target = $region116
        $region115: #{observation_transformer_forward.1} parent=87 // pred_region
          %642 = dma.done [#allocation12], 48
        $region116: #{observation_transformer_forward.1} parent=87 // pred_fallthru
          _
        // Predicated region
        $region117: #{observation_transformer_forward.1} parent=87 // pred_check
          %p643 = pneg %p331
        $region118: #{observation_transformer_forward.1} parent=87 // pred_check_branch
          %645 = sbr.rel (%p643) target = $region120
        $region119: #{observation_transformer_forward.1} parent=87 // pred_region
          %647 = dma.done [#allocation15], 48
        $region120: #{observation_transformer_forward.1} parent=87 // pred_fallthru
          _
        // Predicated region
        $region121: #{observation_transformer_forward.1} parent=87 // pred_check
          %p648 = pneg %p352
        $region122: #{observation_transformer_forward.1} parent=87 // pred_check_branch
          %650 = sbr.rel (%p648) target = $region124
        $region123: #{observation_transformer_forward.1} parent=87 // pred_region
          %652 = dma.done [#allocation15], 48
        $region124: #{observation_transformer_forward.1} parent=87 // pred_fallthru
          _
        // Predicated region
        $region125: #{observation_transformer_forward.1} parent=87 // pred_check
          %p653 = pneg %p394
        $region126: #{observation_transformer_forward.1} parent=87 // pred_check_branch
          %655 = sbr.rel (%p653) target = $region128
        $region127: #{observation_transformer_forward.1} parent=87 // pred_region
          %657 = dma.done [#allocation18], 16
        $region128: #{observation_transformer_forward.1} parent=87 // pred_fallthru
          _
        %p658 = scmp.lt.s32.totalorder %s37, 1
        %s659 = scalar_select %p658, %s37, 1
        %s660 = smul.addr %s659, 8
        %s661 = smul.addr %s660, 4
        %s662 = scalar_lea.vmem %s0, %s661
        %p663 = pneg %p58
        %p664 = pneg %p55
        %p665 = pneg %p79
        %p666 = pneg %p76
        %p667 = pneg %p100
        %p668 = pneg %p97
        %p669 = pneg %p121
        %p670 = pneg %p118
        %p671 = pneg %p142
        %p672 = pneg %p139
        %p673 = pneg %p163
        %p674 = pneg %p160
        %p675 = pneg %p184
        %p676 = pneg %p181
        %p677 = pneg %p205
        %p678 = pneg %p202
        %p679 = pneg %p226
        %p680 = pneg %p223
        %p681 = pneg %p247
        %p682 = pneg %p244
        %p683 = pneg %p268
        %p684 = pneg %p265
        %p685 = pneg %p289
        %p686 = pneg %p286
        %p687 = pneg %p310
        %p688 = pneg %p307
        %p689 = pneg %p331
        %p690 = pneg %p328
        %p691 = pneg %p352
        %p692 = pneg %p349
        %p693 = pneg %p373
        %p694 = pneg %p370
        %p695 = pneg %p394
        %p696 = pneg %p391
        %p697 = pneg %p420
        %p698 = pneg %p417
        %s699 = sand.u32 %s407, 1
        %s700 = scalar_lea.sflag [#allocation4], %s699
        %s701 = sand.u32 %s407, 1
        %s702 = scalar_lea.vmem [#allocation19], %s701
        %p703 = scmp.lt.s32.totalorder %s37, 1
        %s704 = scalar_select %p703, %s37, 1
        %s705 = smul.addr %s704, 8
        %s706 = smul.addr %s705, 4
        %s707 = scalar_lea.vmem %s0, %s706
        %v709 = vld [vmem:[%s707] sm:$0xff]
        %v710 = vld [vmem:[%s707 + $0x8] sm:$0xff]
        %v711 = vld [vmem:[%s707 + $0x10] sm:$0xff]
        %v712 = vld [vmem:[%s707 + $0x18] sm:$0xff]
        %v713 = vld [vmem:[%s1] sm:$0xf]
        %v714 = vld [vmem:[%s1 + $0x4] sm:$0xf]
        %v715 = vld [vmem:[%s1 + $0x8] sm:$0xf]
        %v716 = vld [vmem:[%s1 + $0xc] sm:$0xf]
        %v717 = vld [vmem:[%s1 + $0x10] sm:$0xf]
        %v718 = vld [vmem:[%s1 + $0x14] sm:$0xf]
        %v719 = vld [vmem:[%s1 + $0x18] sm:$0xf]
        %v720 = vld [vmem:[%s1 + $0x1c] sm:$0xf]
        %v721 = vld [vmem:[%s1 + $0x20] sm:$0xf]
        %v722 = vld [vmem:[%s1 + $0x24] sm:$0xf]
        %v723 = vld [vmem:[%s1 + $0x28] sm:$0xf]
        %v724 = vld [vmem:[%s1 + $0x2c] sm:$0xf]
        %v725 = vld [vmem:[%s1 + $0x30] sm:$0xf]
        %v726 = vld [vmem:[%s1 + $0x34] sm:$0xf]
        %v727 = vld [vmem:[%s1 + $0x38] sm:$0xf]
        %v728 = vld [vmem:[%s1 + $0x3c] sm:$0xf]
        %v729 = vld [vmem:[%s1 + $0x40] sm:$0xf]
        %v730 = vld [vmem:[%s1 + $0x44] sm:$0xf]
        %v731 = vld [vmem:[%s1 + $0x48] sm:$0xf]
        %v732 = vld [vmem:[%s1 + $0x4c] sm:$0xf]
        %v733 = vld [vmem:[%s1 + $0x50] sm:$0xf]
        %v734 = vld [vmem:[%s1 + $0x54] sm:$0xf]
        %v735 = vld [vmem:[%s1 + $0x58] sm:$0xf]
        %v736 = vld [vmem:[%s1 + $0x5c] sm:$0xf]
        %v737 = vld [vmem:[%s1 + $0x60] sm:$0xf]
        %v738 = vld [vmem:[%s1 + $0x64] sm:$0xf]
        %v739 = vld [vmem:[%s1 + $0x68] sm:$0xf]
        %v740 = vld [vmem:[%s1 + $0x6c] sm:$0xf]
        %v741 = vld [vmem:[%s1 + $0x70] sm:$0xf]
        %v742 = vld [vmem:[%s1 + $0x74] sm:$0xf]
        %v743 = vld [vmem:[%s1 + $0x78] sm:$0xf]
        %v744 = vld [vmem:[%s1 + $0x7c] sm:$0xf]
        %v745 = vld [vmem:[%s1 + $0x80] sm:$0xf]
        %v746 = vld [vmem:[%s1 + $0x84] sm:$0xf]
        %v747 = vld [vmem:[%s1 + $0x88] sm:$0xf]
        %v748 = vld [vmem:[%s1 + $0x8c] sm:$0xf]
        %v749 = vld [vmem:[%s1 + $0x90] sm:$0xf]
        %v750 = vld [vmem:[%s1 + $0x94] sm:$0xf]
        %v751 = vld [vmem:[%s1 + $0x98] sm:$0xf]
        %v752 = vld [vmem:[%s1 + $0x9c] sm:$0xf]
        %v753 = vld [vmem:[%s1 + $0xa0] sm:$0xf]
        %v754 = vld [vmem:[%s1 + $0xa4] sm:$0xf]
        %v755 = vld [vmem:[%s1 + $0xa8] sm:$0xf]
        %v756 = vld [vmem:[%s1 + $0xac] sm:$0xf]
        %v757 = vld [vmem:[%s1 + $0xb0] sm:$0xf]
        %v758 = vld [vmem:[%s1 + $0xb4] sm:$0xf]
        %v759 = vld [vmem:[%s1 + $0xb8] sm:$0xf]
        %v760 = vld [vmem:[%s1 + $0xbc] sm:$0xf]
        %v761 = vld [vmem:[%s1 + $0xc0] sm:$0xf]
        %v762 = vld [vmem:[%s1 + $0xc4] sm:$0xf]
        %v763 = vld [vmem:[%s1 + $0xc8] sm:$0xf]
        %v764 = vld [vmem:[%s1 + $0xcc] sm:$0xf]
        %v765 = vld [vmem:[%s1 + $0xd0] sm:$0xf]
        %v766 = vld [vmem:[%s1 + $0xd4] sm:$0xf]
        %v767 = vld [vmem:[%s1 + $0xd8] sm:$0xf]
        %v768 = vld [vmem:[%s1 + $0xdc] sm:$0xf]
        %v769 = vld [vmem:[%s1 + $0xe0] sm:$0xf]
        %v770 = vld [vmem:[%s1 + $0xe4] sm:$0xf]
        %v771 = vld [vmem:[%s1 + $0xe8] sm:$0xf]
        %v772 = vld [vmem:[%s1 + $0xec] sm:$0xf]
        %v773 = vld [vmem:[%s1 + $0xf0] sm:$0xf]
        %v774 = vld [vmem:[%s1 + $0xf4] sm:$0xf]
        %v775 = vld [vmem:[%s1 + $0xf8] sm:$0xf]
        %v776 = vld [vmem:[%s1 + $0xfc] sm:$0xf]
        %v777 = vld [vmem:[%s1 + $0x100] sm:$0xf]
        %v778 = vld [vmem:[%s1 + $0x104] sm:$0xf]
        %v779 = vld [vmem:[%s1 + $0x108] sm:$0xf]
        %v780 = vld [vmem:[%s1 + $0x10c] sm:$0xf]
        %v781 = vld [vmem:[%s1 + $0x110] sm:$0xf]
        %v782 = vld [vmem:[%s1 + $0x114] sm:$0xf]
        %v783 = vld [vmem:[%s1 + $0x118] sm:$0xf]
        %v784 = vld [vmem:[%s1 + $0x11c] sm:$0xf]
        %v785 = vld [vmem:[%s1 + $0x120] sm:$0xf]
        %v786 = vld [vmem:[%s1 + $0x124] sm:$0xf]
        %v787 = vld [vmem:[%s1 + $0x128] sm:$0xf]
        %v788 = vld [vmem:[%s1 + $0x12c] sm:$0xf]
        %v789 = vld [vmem:[%s1 + $0x130] sm:$0xf]
        %v790 = vld [vmem:[%s1 + $0x134] sm:$0xf]
        %v791 = vld [vmem:[%s1 + $0x138] sm:$0xf]
        %v792 = vld [vmem:[%s1 + $0x13c] sm:$0xf]
        %v793 = vld [vmem:[%s1 + $0x140] sm:$0xf]
        %v794 = vld [vmem:[%s1 + $0x144] sm:$0xf]
        %v795 = vld [vmem:[%s1 + $0x148] sm:$0xf]
        %v796 = vld [vmem:[%s1 + $0x14c] sm:$0xf]
        %v797 = vld [vmem:[%s1 + $0x150] sm:$0xf]
        %v798 = vld [vmem:[%s1 + $0x154] sm:$0xf]
        %v799 = vld [vmem:[%s1 + $0x158] sm:$0xf]
        %v800 = vld [vmem:[%s1 + $0x15c] sm:$0xf]
        %v801 = vld [vmem:[%s1 + $0x160] sm:$0xf]
        %v802 = vld [vmem:[%s1 + $0x164] sm:$0xf]
        %v803 = vld [vmem:[%s1 + $0x168] sm:$0xf]
        %v804 = vld [vmem:[%s1 + $0x16c] sm:$0xf]
        %v805 = vld [vmem:[%s1 + $0x170] sm:$0xf]
        %v806 = vld [vmem:[%s1 + $0x174] sm:$0xf]
        %v807 = vld [vmem:[%s1 + $0x178] sm:$0xf]
        %v808 = vld [vmem:[%s1 + $0x17c] sm:$0xf]
        %v809 = vld [vmem:[%s1 + $0x180] sm:$0xf]
        %v810 = vld [vmem:[%s1 + $0x184] sm:$0xf]
        %v811 = vld [vmem:[%s1 + $0x188] sm:$0xf]
        %v812 = vld [vmem:[%s1 + $0x18c] sm:$0xf]
        %v813 = vld [vmem:[%s1 + $0x190] sm:$0xf]
        %v814 = vld [vmem:[%s1 + $0x194] sm:$0xf]
        %v815 = vld [vmem:[%s1 + $0x198] sm:$0xf]
        %v816 = vld [vmem:[%s1 + $0x19c] sm:$0xf]
        %v817 = vld [vmem:[%s1 + $0x1a0] sm:$0xf]
        %v818 = vld [vmem:[%s1 + $0x1a4] sm:$0xf]
        %v819 = vld [vmem:[%s1 + $0x1a8] sm:$0xf]
        %v820 = vld [vmem:[%s1 + $0x1ac] sm:$0xf]
        %v821 = vld [vmem:[%s1 + $0x1b0] sm:$0xf]
        %v822 = vld [vmem:[%s1 + $0x1b4] sm:$0xf]
        %v823 = vld [vmem:[%s1 + $0x1b8] sm:$0xf]
        %v824 = vld [vmem:[%s1 + $0x1bc] sm:$0xf]
        %v825 = vld [vmem:[%s1 + $0x1c0] sm:$0xf]
        %v826 = vld [vmem:[%s1 + $0x1c4] sm:$0xf]
        %v827 = vld [vmem:[%s1 + $0x1c8] sm:$0xf]
        %v828 = vld [vmem:[%s1 + $0x1cc] sm:$0xf]
        %v829 = vld [vmem:[%s1 + $0x1d0] sm:$0xf]
        %v830 = vld [vmem:[%s1 + $0x1d4] sm:$0xf]
        %v831 = vld [vmem:[%s1 + $0x1d8] sm:$0xf]
        %v832 = vld [vmem:[%s1 + $0x1dc] sm:$0xf]
        %v833 = vld [vmem:[%s1 + $0x1e0] sm:$0xf]
        %v834 = vld [vmem:[%s1 + $0x1e4] sm:$0xf]
        %v835 = vld [vmem:[%s1 + $0x1e8] sm:$0xf]
        %v836 = vld [vmem:[%s1 + $0x1ec] sm:$0xf]
        %v837 = vld [vmem:[%s1 + $0x1f0] sm:$0xf]
        %v838 = vld [vmem:[%s1 + $0x1f4] sm:$0xf]
        %v839 = vld [vmem:[%s1 + $0x1f8] sm:$0xf]
        %v840 = vld [vmem:[%s1 + $0x1fc] sm:$0xf]
        %v841 = vld [vmem:[#allocation2] sm:$0x1]
        %v843 = vperm.slane %v841, 0
        %v849 = vunpack.c.l.b16 %v709
        %v850 = vunpack.c.h.b16 %v709
        %v851 = vunpack.c.l.b16 %v710
        %v852 = vunpack.c.h.b16 %v710
        %v853 = vunpack.c.l.b16 %v711
        %v854 = vunpack.c.h.b16 %v711
        %v855 = vunpack.c.l.b16 %v712
        %v856 = vunpack.c.h.b16 %v712
        %v857 = vpack.c.b16 %v849, %v849
        %v858 = vpack.c.b16 %v850, %v850
        %v859 = vpack.c.b16 %v851, %v851
        %v860 = vpack.c.b16 %v852, %v852
        %v861 = vpack.c.b16 %v853, %v853
        %v862 = vpack.c.b16 %v854, %v854
        %v863 = vpack.c.b16 %v855, %v855
        %v864 = vpack.c.b16 %v856, %v856
        %v1001 = vunpack.c.l.b16 %v713
        %v1002 = vunpack.c.l.b16 %v714
        %v1003 = vunpack.c.l.b16 %v715
        %v1004 = vunpack.c.l.b16 %v716
        %v1005 = vunpack.c.l.b16 %v717
        %v1006 = vunpack.c.l.b16 %v718
        %v1007 = vunpack.c.l.b16 %v719
        %v1008 = vunpack.c.l.b16 %v720
        %v1009 = vunpack.c.l.b16 %v721
        %v1010 = vunpack.c.l.b16 %v722
        %v1011 = vunpack.c.l.b16 %v723
        %v1012 = vunpack.c.l.b16 %v724
        %v1013 = vunpack.c.l.b16 %v725
        %v1014 = vunpack.c.l.b16 %v726
        %v1015 = vunpack.c.l.b16 %v727
        %v1016 = vunpack.c.l.b16 %v728
        %v1017 = vunpack.c.l.b16 %v729
        %v1018 = vunpack.c.l.b16 %v730
        %v1019 = vunpack.c.l.b16 %v731
        %v1020 = vunpack.c.l.b16 %v732
        %v1021 = vunpack.c.l.b16 %v733
        %v1022 = vunpack.c.l.b16 %v734
        %v1023 = vunpack.c.l.b16 %v735
        %v1024 = vunpack.c.l.b16 %v736
        %v1025 = vunpack.c.l.b16 %v737
        %v1026 = vunpack.c.l.b16 %v738
        %v1027 = vunpack.c.l.b16 %v739
        %v1028 = vunpack.c.l.b16 %v740
        %v1029 = vunpack.c.l.b16 %v741
        %v1030 = vunpack.c.l.b16 %v742
        %v1031 = vunpack.c.l.b16 %v743
        %v1032 = vunpack.c.l.b16 %v744
        %v1033 = vunpack.c.l.b16 %v745
        %v1034 = vunpack.c.l.b16 %v746
        %v1035 = vunpack.c.l.b16 %v747
        %v1036 = vunpack.c.l.b16 %v748
        %v1037 = vunpack.c.l.b16 %v749
        %v1038 = vunpack.c.l.b16 %v750
        %v1039 = vunpack.c.l.b16 %v751
        %v1040 = vunpack.c.l.b16 %v752
        %v1041 = vunpack.c.l.b16 %v753
        %v1042 = vunpack.c.l.b16 %v754
        %v1043 = vunpack.c.l.b16 %v755
        %v1044 = vunpack.c.l.b16 %v756
        %v1045 = vunpack.c.l.b16 %v757
        %v1046 = vunpack.c.l.b16 %v758
        %v1047 = vunpack.c.l.b16 %v759
        %v1048 = vunpack.c.l.b16 %v760
        %v1049 = vunpack.c.l.b16 %v761
        %v1050 = vunpack.c.l.b16 %v762
        %v1051 = vunpack.c.l.b16 %v763
        %v1052 = vunpack.c.l.b16 %v764
        %v1053 = vunpack.c.l.b16 %v765
        %v1054 = vunpack.c.l.b16 %v766
        %v1055 = vunpack.c.l.b16 %v767
        %v1056 = vunpack.c.l.b16 %v768
        %v1057 = vunpack.c.l.b16 %v769
        %v1058 = vunpack.c.l.b16 %v770
        %v1059 = vunpack.c.l.b16 %v771
        %v1060 = vunpack.c.l.b16 %v772
        %v1061 = vunpack.c.l.b16 %v773
        %v1062 = vunpack.c.l.b16 %v774
        %v1063 = vunpack.c.l.b16 %v775
        %v1064 = vunpack.c.l.b16 %v776
        %v1065 = vunpack.c.l.b16 %v777
        %v1066 = vunpack.c.l.b16 %v778
        %v1067 = vunpack.c.l.b16 %v779
        %v1068 = vunpack.c.l.b16 %v780
        %v1069 = vunpack.c.l.b16 %v781
        %v1070 = vunpack.c.l.b16 %v782
        %v1071 = vunpack.c.l.b16 %v783
        %v1072 = vunpack.c.l.b16 %v784
        %v1073 = vunpack.c.l.b16 %v785
        %v1074 = vunpack.c.l.b16 %v786
        %v1075 = vunpack.c.l.b16 %v787
        %v1076 = vunpack.c.l.b16 %v788
        %v1077 = vunpack.c.l.b16 %v789
        %v1078 = vunpack.c.l.b16 %v790
        %v1079 = vunpack.c.l.b16 %v791
        %v1080 = vunpack.c.l.b16 %v792
        %v1081 = vunpack.c.l.b16 %v793
        %v1082 = vunpack.c.l.b16 %v794
        %v1083 = vunpack.c.l.b16 %v795
        %v1084 = vunpack.c.l.b16 %v796
        %v1085 = vunpack.c.l.b16 %v797
        %v1086 = vunpack.c.l.b16 %v798
        %v1087 = vunpack.c.l.b16 %v799
        %v1088 = vunpack.c.l.b16 %v800
        %v1089 = vunpack.c.l.b16 %v801
        %v1090 = vunpack.c.l.b16 %v802
        %v1091 = vunpack.c.l.b16 %v803
        %v1092 = vunpack.c.l.b16 %v804
        %v1093 = vunpack.c.l.b16 %v805
        %v1094 = vunpack.c.l.b16 %v806
        %v1095 = vunpack.c.l.b16 %v807
        %v1096 = vunpack.c.l.b16 %v808
        %v1097 = vunpack.c.l.b16 %v809
        %v1098 = vunpack.c.l.b16 %v810
        %v1099 = vunpack.c.l.b16 %v811
        %v1100 = vunpack.c.l.b16 %v812
        %v1101 = vunpack.c.l.b16 %v813
        %v1102 = vunpack.c.l.b16 %v814
        %v1103 = vunpack.c.l.b16 %v815
        %v1104 = vunpack.c.l.b16 %v816
        %v1105 = vunpack.c.l.b16 %v817
        %v1106 = vunpack.c.l.b16 %v818
        %v1107 = vunpack.c.l.b16 %v819
        %v1108 = vunpack.c.l.b16 %v820
        %v1109 = vunpack.c.l.b16 %v821
        %v1110 = vunpack.c.l.b16 %v822
        %v1111 = vunpack.c.l.b16 %v823
        %v1112 = vunpack.c.l.b16 %v824
        %v1113 = vunpack.c.l.b16 %v825
        %v1114 = vunpack.c.l.b16 %v826
        %v1115 = vunpack.c.l.b16 %v827
        %v1116 = vunpack.c.l.b16 %v828
        %v1117 = vunpack.c.l.b16 %v829
        %v1118 = vunpack.c.l.b16 %v830
        %v1119 = vunpack.c.l.b16 %v831
        %v1120 = vunpack.c.l.b16 %v832
        %v1121 = vunpack.c.l.b16 %v833
        %v1122 = vunpack.c.l.b16 %v834
        %v1123 = vunpack.c.l.b16 %v835
        %v1124 = vunpack.c.l.b16 %v836
        %v1125 = vunpack.c.l.b16 %v837
        %v1126 = vunpack.c.l.b16 %v838
        %v1127 = vunpack.c.l.b16 %v839
        %v1128 = vunpack.c.l.b16 %v840
        %v1129 = vpack.c.b16 %v1002, %v1001
        %v1130 = vpack.c.b16 %v1004, %v1003
        %v1131 = vpack.c.b16 %v1006, %v1005
        %v1132 = vpack.c.b16 %v1008, %v1007
        %v1133 = vpack.c.b16 %v1010, %v1009
        %v1134 = vpack.c.b16 %v1012, %v1011
        %v1135 = vpack.c.b16 %v1014, %v1013
        %v1136 = vpack.c.b16 %v1016, %v1015
        %v1137 = vpack.c.b16 %v1018, %v1017
        %v1138 = vpack.c.b16 %v1020, %v1019
        %v1139 = vpack.c.b16 %v1022, %v1021
        %v1140 = vpack.c.b16 %v1024, %v1023
        %v1141 = vpack.c.b16 %v1026, %v1025
        %v1142 = vpack.c.b16 %v1028, %v1027
        %v1143 = vpack.c.b16 %v1030, %v1029
        %v1144 = vpack.c.b16 %v1032, %v1031
        %v1145 = vpack.c.b16 %v1034, %v1033
        %v1146 = vpack.c.b16 %v1036, %v1035
        %v1147 = vpack.c.b16 %v1038, %v1037
        %v1148 = vpack.c.b16 %v1040, %v1039
        %v1149 = vpack.c.b16 %v1042, %v1041
        %v1150 = vpack.c.b16 %v1044, %v1043
        %v1151 = vpack.c.b16 %v1046, %v1045
        %v1152 = vpack.c.b16 %v1048, %v1047
        %v1153 = vpack.c.b16 %v1050, %v1049
        %v1154 = vpack.c.b16 %v1052, %v1051
        %v1155 = vpack.c.b16 %v1054, %v1053
        %v1156 = vpack.c.b16 %v1056, %v1055
        %v1157 = vpack.c.b16 %v1058, %v1057
        %v1158 = vpack.c.b16 %v1060, %v1059
        %v1159 = vpack.c.b16 %v1062, %v1061
        %v1160 = vpack.c.b16 %v1064, %v1063
        %v1161 = vpack.c.b16 %v1066, %v1065
        %v1162 = vpack.c.b16 %v1068, %v1067
        %v1163 = vpack.c.b16 %v1070, %v1069
        %v1164 = vpack.c.b16 %v1072, %v1071
        %v1165 = vpack.c.b16 %v1074, %v1073
        %v1166 = vpack.c.b16 %v1076, %v1075
        %v1167 = vpack.c.b16 %v1078, %v1077
        %v1168 = vpack.c.b16 %v1080, %v1079
        %v1169 = vpack.c.b16 %v1082, %v1081
        %v1170 = vpack.c.b16 %v1084, %v1083
        %v1171 = vpack.c.b16 %v1086, %v1085
        %v1172 = vpack.c.b16 %v1088, %v1087
        %v1173 = vpack.c.b16 %v1090, %v1089
        %v1174 = vpack.c.b16 %v1092, %v1091
        %v1175 = vpack.c.b16 %v1094, %v1093
        %v1176 = vpack.c.b16 %v1096, %v1095
        %v1177 = vpack.c.b16 %v1098, %v1097
        %v1178 = vpack.c.b16 %v1100, %v1099
        %v1179 = vpack.c.b16 %v1102, %v1101
        %v1180 = vpack.c.b16 %v1104, %v1103
        %v1181 = vpack.c.b16 %v1106, %v1105
        %v1182 = vpack.c.b16 %v1108, %v1107
        %v1183 = vpack.c.b16 %v1110, %v1109
        %v1184 = vpack.c.b16 %v1112, %v1111
        %v1185 = vpack.c.b16 %v1114, %v1113
        %v1186 = vpack.c.b16 %v1116, %v1115
        %v1187 = vpack.c.b16 %v1118, %v1117
        %v1188 = vpack.c.b16 %v1120, %v1119
        %v1189 = vpack.c.b16 %v1122, %v1121
        %v1190 = vpack.c.b16 %v1124, %v1123
        %v1191 = vpack.c.b16 %v1126, %v1125
        %v1192 = vpack.c.b16 %v1128, %v1127
        %1257 = vmatpush.bf16.msra.mxu0 %v1136
        %1258 = vmatpush.bf16.msra.mxu0 %v1135
        %1259 = vmatpush.bf16.msra.mxu0 %v1134
        %1260 = vmatpush.bf16.msra.mxu0 %v1133
        %1261 = vmatpush.bf16.msra.mxu0 %v1132
        %1262 = vmatpush.bf16.msra.mxu0 %v1131
        %1263 = vmatpush.bf16.msra.mxu0 %v1130
        %1264 = vmatpush.bf16.msra.mxu0 %v1129
        %1265 = vmatmul.bf16.gmra.mxu0 %v857
        %v1266 = vpop.f32.mrf.mxu0
        %v1267 = vadd.f32 %v843, %v1266
        %v1268 = vpop.f32.mrf.mxu0
        %1269 = vdwg.mxu0
        %1270 = vmatpush.bf16.msra.mxu0 %v1144
        %1271 = vmatpush.bf16.msra.mxu0 %v1143
        %1272 = vmatpush.bf16.msra.mxu0 %v1142
        %1273 = vmatpush.bf16.msra.mxu0 %v1141
        %1274 = vmatpush.bf16.msra.mxu0 %v1140
        %1275 = vmatpush.bf16.msra.mxu0 %v1139
        %1276 = vmatpush.bf16.msra.mxu0 %v1138
        %1277 = vmatpush.bf16.msra.mxu0 %v1137
        %1278 = vmatmul.bf16.gmra.mxu0 %v858
        %v1279 = vpop.f32.mrf.mxu0
        %v1280 = vadd.f32 %v1267, %v1279
        %v1281 = vpop.f32.mrf.mxu0
        %1282 = vdwg.mxu0
        %1283 = vmatpush.bf16.msra.mxu0 %v1152
        %1284 = vmatpush.bf16.msra.mxu0 %v1151
        %1285 = vmatpush.bf16.msra.mxu0 %v1150
        %1286 = vmatpush.bf16.msra.mxu0 %v1149
        %1287 = vmatpush.bf16.msra.mxu0 %v1148
        %1288 = vmatpush.bf16.msra.mxu0 %v1147
        %1289 = vmatpush.bf16.msra.mxu0 %v1146
        %1290 = vmatpush.bf16.msra.mxu0 %v1145
        %1291 = vmatmul.bf16.gmra.mxu0 %v859
        %v1292 = vpop.f32.mrf.mxu0
        %v1293 = vadd.f32 %v1280, %v1292
        %v1294 = vpop.f32.mrf.mxu0
        %1295 = vdwg.mxu0
        %1296 = vmatpush.bf16.msra.mxu0 %v1160
        %1297 = vmatpush.bf16.msra.mxu0 %v1159
        %1298 = vmatpush.bf16.msra.mxu0 %v1158
        %1299 = vmatpush.bf16.msra.mxu0 %v1157
        %1300 = vmatpush.bf16.msra.mxu0 %v1156
        %1301 = vmatpush.bf16.msra.mxu0 %v1155
        %1302 = vmatpush.bf16.msra.mxu0 %v1154
        %1303 = vmatpush.bf16.msra.mxu0 %v1153
        %1304 = vmatmul.bf16.gmra.mxu0 %v860
        %v1305 = vpop.f32.mrf.mxu0
        %v1306 = vadd.f32 %v1293, %v1305
        %v1307 = vpop.f32.mrf.mxu0
        %1308 = vdwg.mxu0
        %1309 = vmatpush.bf16.msra.mxu0 %v1168
        %1310 = vmatpush.bf16.msra.mxu0 %v1167
        %1311 = vmatpush.bf16.msra.mxu0 %v1166
        %1312 = vmatpush.bf16.msra.mxu0 %v1165
        %1313 = vmatpush.bf16.msra.mxu0 %v1164
        %1314 = vmatpush.bf16.msra.mxu0 %v1163
        %1315 = vmatpush.bf16.msra.mxu0 %v1162
        %1316 = vmatpush.bf16.msra.mxu0 %v1161
        %1317 = vmatmul.bf16.gmra.mxu0 %v861
        %v1318 = vpop.f32.mrf.mxu0
        %v1319 = vadd.f32 %v1306, %v1318
        %v1320 = vpop.f32.mrf.mxu0
        %1321 = vdwg.mxu0
        %1322 = vmatpush.bf16.msra.mxu0 %v1176
        %1323 = vmatpush.bf16.msra.mxu0 %v1175
        %1324 = vmatpush.bf16.msra.mxu0 %v1174
        %1325 = vmatpush.bf16.msra.mxu0 %v1173
        %1326 = vmatpush.bf16.msra.mxu0 %v1172
        %1327 = vmatpush.bf16.msra.mxu0 %v1171
        %1328 = vmatpush.bf16.msra.mxu0 %v1170
        %1329 = vmatpush.bf16.msra.mxu0 %v1169
        %1330 = vmatmul.bf16.gmra.mxu0 %v862
        %v1331 = vpop.f32.mrf.mxu0
        %v1332 = vadd.f32 %v1319, %v1331
        %v1333 = vpop.f32.mrf.mxu0
        %1334 = vdwg.mxu0
        %1335 = vmatpush.bf16.msra.mxu0 %v1184
        %1336 = vmatpush.bf16.msra.mxu0 %v1183
        %1337 = vmatpush.bf16.msra.mxu0 %v1182
        %1338 = vmatpush.bf16.msra.mxu0 %v1181
        %1339 = vmatpush.bf16.msra.mxu0 %v1180
        %1340 = vmatpush.bf16.msra.mxu0 %v1179
        %1341 = vmatpush.bf16.msra.mxu0 %v1178
        %1342 = vmatpush.bf16.msra.mxu0 %v1177
        %1343 = vmatmul.bf16.gmra.mxu0 %v863
        %v1344 = vpop.f32.mrf.mxu0
        %v1345 = vadd.f32 %v1332, %v1344
        %v1346 = vpop.f32.mrf.mxu0
        %1347 = vdwg.mxu0
        %1348 = vmatpush.bf16.msra.mxu0 %v1192
        %1349 = vmatpush.bf16.msra.mxu0 %v1191
        %1350 = vmatpush.bf16.msra.mxu0 %v1190
        %1351 = vmatpush.bf16.msra.mxu0 %v1189
        %1352 = vmatpush.bf16.msra.mxu0 %v1188
        %1353 = vmatpush.bf16.msra.mxu0 %v1187
        %1354 = vmatpush.bf16.msra.mxu0 %v1186
        %1355 = vmatpush.bf16.msra.mxu0 %v1185
        %1356 = vmatmul.bf16.gmra.mxu0 %v864
        %v1357 = vpop.f32.mrf.mxu0
        %v1358 = vadd.f32 %v1345, %v1357
        %v1359 = vpop.f32.mrf.mxu0
        %1360 = vdwg.mxu0
        %v1361 = vld [vmem:[%s3] sm:$0xff]
        %v1362 = vld [vmem:[%s3 + $0x8] sm:$0xf]
        %v1363 = vld [vmem:[%s3 + $0xc] sm:$0xff]
        %v1364 = vld [vmem:[%s3 + $0x14] sm:$0xf]
        %v1365 = vld [vmem:[%s3 + $0x18] sm:$0xff]
        %v1366 = vld [vmem:[%s3 + $0x20] sm:$0xf]
        %v1367 = vld [vmem:[%s3 + $0x24] sm:$0xff]
        %v1368 = vld [vmem:[%s3 + $0x2c] sm:$0xf]
        %v1369 = vld [vmem:[%s3 + $0x30] sm:$0xff]
        %v1370 = vld [vmem:[%s3 + $0x38] sm:$0xf]
        %v1371 = vld [vmem:[%s3 + $0x3c] sm:$0xff]
        %v1372 = vld [vmem:[%s3 + $0x44] sm:$0xf]
        %v1373 = vld [vmem:[%s3 + $0x48] sm:$0xff]
        %v1374 = vld [vmem:[%s3 + $0x50] sm:$0xf]
        %v1375 = vld [vmem:[%s3 + $0x54] sm:$0xff]
        %v1376 = vld [vmem:[%s3 + $0x5c] sm:$0xf]
        %v1377 = vld [vmem:[%s3 + $0x60] sm:$0xff]
        %v1378 = vld [vmem:[%s3 + $0x68] sm:$0xf]
        %v1379 = vld [vmem:[%s3 + $0x6c] sm:$0xff]
        %v1380 = vld [vmem:[%s3 + $0x74] sm:$0xf]
        %v1381 = vld [vmem:[%s3 + $0x78] sm:$0xff]
        %v1382 = vld [vmem:[%s3 + $0x80] sm:$0xf]
        %v1383 = vld [vmem:[%s3 + $0x84] sm:$0xff]
        %v1384 = vld [vmem:[%s3 + $0x8c] sm:$0xf]
        %v1385 = vld [vmem:[%s3 + $0x90] sm:$0xff]
        %v1386 = vld [vmem:[%s3 + $0x98] sm:$0xf]
        %v1387 = vld [vmem:[%s3 + $0x9c] sm:$0xff]
        %v1388 = vld [vmem:[%s3 + $0xa4] sm:$0xf]
        %v1389 = vld [vmem:[%s3 + $0xa8] sm:$0xff]
        %v1390 = vld [vmem:[%s3 + $0xb0] sm:$0xf]
        %v1391 = vld [vmem:[%s3 + $0xb4] sm:$0xff]
        %v1392 = vld [vmem:[%s3 + $0xbc] sm:$0xf]
        %v1393 = vld [vmem:[%s5] sm:$0xf]
        %v1394 = vld [vmem:[%s5 + $0x4] sm:$0xf]
        %v1395 = vld [vmem:[%s5 + $0x8] sm:$0xf]
        %v1396 = vld [vmem:[%s5 + $0xc] sm:$0xf]
        %v1397 = vld [vmem:[%s5 + $0x10] sm:$0xf]
        %v1398 = vld [vmem:[%s5 + $0x14] sm:$0xf]
        %v1399 = vld [vmem:[%s5 + $0x18] sm:$0xf]
        %v1400 = vld [vmem:[%s5 + $0x1c] sm:$0xf]
        %v1401 = vld [vmem:[%s5 + $0x20] sm:$0xf]
        %v1402 = vld [vmem:[%s5 + $0x24] sm:$0xf]
        %v1403 = vld [vmem:[%s5 + $0x28] sm:$0xf]
        %v1404 = vld [vmem:[%s5 + $0x2c] sm:$0xf]
        %v1405 = vld [vmem:[%s5 + $0x30] sm:$0xf]
        %v1406 = vld [vmem:[%s5 + $0x34] sm:$0xf]
        %v1407 = vld [vmem:[%s5 + $0x38] sm:$0xf]
        %v1408 = vld [vmem:[%s5 + $0x3c] sm:$0xf]
        %v1409 = vld [vmem:[#allocation5] sm:$0x7]
        %v1410 = vpack.c.bf16 %v1358, %v1358
        %v1412 = vperm.slane %v1409, 0
        %v1413 = vperm.slane %v1409, 1
        %v1414 = vperm.slane %v1409, 2
        %v1450 = vunpack.c.l.b16 %v1361
        %v1451 = vunpack.c.h.b16 %v1361
        %v1452 = vunpack.c.l.b16 %v1362
        %v1453 = vunpack.c.l.b16 %v1363
        %v1454 = vunpack.c.h.b16 %v1363
        %v1455 = vunpack.c.l.b16 %v1364
        %v1456 = vunpack.c.l.b16 %v1365
        %v1457 = vunpack.c.h.b16 %v1365
        %v1458 = vunpack.c.l.b16 %v1366
        %v1459 = vunpack.c.l.b16 %v1367
        %v1460 = vunpack.c.h.b16 %v1367
        %v1461 = vunpack.c.l.b16 %v1368
        %v1462 = vunpack.c.l.b16 %v1369
        %v1463 = vunpack.c.h.b16 %v1369
        %v1464 = vunpack.c.l.b16 %v1370
        %v1465 = vunpack.c.l.b16 %v1371
        %v1466 = vunpack.c.h.b16 %v1371
        %v1467 = vunpack.c.l.b16 %v1372
        %v1468 = vunpack.c.l.b16 %v1373
        %v1469 = vunpack.c.h.b16 %v1373
        %v1470 = vunpack.c.l.b16 %v1374
        %v1471 = vunpack.c.l.b16 %v1375
        %v1472 = vunpack.c.h.b16 %v1375
        %v1473 = vunpack.c.l.b16 %v1376
        %v1474 = vunpack.c.l.b16 %v1377
        %v1475 = vunpack.c.h.b16 %v1377
        %v1476 = vunpack.c.l.b16 %v1378
        %v1477 = vunpack.c.l.b16 %v1379
        %v1478 = vunpack.c.h.b16 %v1379
        %v1479 = vunpack.c.l.b16 %v1380
        %v1480 = vunpack.c.l.b16 %v1381
        %v1481 = vunpack.c.h.b16 %v1381
        %v1482 = vunpack.c.l.b16 %v1382
        %v1483 = vunpack.c.l.b16 %v1383
        %v1484 = vunpack.c.h.b16 %v1383
        %v1485 = vunpack.c.l.b16 %v1384
        %v1486 = vunpack.c.l.b16 %v1385
        %v1487 = vunpack.c.h.b16 %v1385
        %v1488 = vunpack.c.l.b16 %v1386
        %v1489 = vunpack.c.l.b16 %v1387
        %v1490 = vunpack.c.h.b16 %v1387
        %v1491 = vunpack.c.l.b16 %v1388
        %v1492 = vunpack.c.l.b16 %v1389
        %v1493 = vunpack.c.h.b16 %v1389
        %v1494 = vunpack.c.l.b16 %v1390
        %v1495 = vunpack.c.l.b16 %v1391
        %v1496 = vunpack.c.h.b16 %v1391
        %v1497 = vunpack.c.l.b16 %v1392
        %v1498 = vpack.c.b16 %v1453, %v1450
        %v1499 = vpack.c.b16 %v1454, %v1451
        %v1500 = vpack.c.b16 %v1455, %v1452
        %v1501 = vpack.c.b16 %v1459, %v1456
        %v1502 = vpack.c.b16 %v1460, %v1457
        %v1503 = vpack.c.b16 %v1461, %v1458
        %v1504 = vpack.c.b16 %v1465, %v1462
        %v1505 = vpack.c.b16 %v1466, %v1463
        %v1506 = vpack.c.b16 %v1467, %v1464
        %v1507 = vpack.c.b16 %v1471, %v1468
        %v1508 = vpack.c.b16 %v1472, %v1469
        %v1509 = vpack.c.b16 %v1473, %v1470
        %v1510 = vpack.c.b16 %v1477, %v1474
        %v1511 = vpack.c.b16 %v1478, %v1475
        %v1512 = vpack.c.b16 %v1479, %v1476
        %v1513 = vpack.c.b16 %v1483, %v1480
        %v1514 = vpack.c.b16 %v1484, %v1481
        %v1515 = vpack.c.b16 %v1485, %v1482
        %v1516 = vpack.c.b16 %v1489, %v1486
        %v1517 = vpack.c.b16 %v1490, %v1487
        %v1518 = vpack.c.b16 %v1491, %v1488
        %v1519 = vpack.c.b16 %v1495, %v1492
        %v1520 = vpack.c.b16 %v1496, %v1493
        %v1521 = vpack.c.b16 %v1497, %v1494
        %1546 = vmatpush.bf16.msra.mxu0 %v1519
        %1547 = vmatpush.bf16.msra.mxu0 %v1516
        %1548 = vmatpush.bf16.msra.mxu0 %v1513
        %1549 = vmatpush.bf16.msra.mxu0 %v1510
        %1550 = vmatpush.bf16.msra.mxu0 %v1507
        %1551 = vmatpush.bf16.msra.mxu0 %v1504
        %1552 = vmatpush.bf16.msra.mxu0 %v1501
        %1553 = vmatpush.bf16.msra.mxu0 %v1498
        %1554 = vmatmul.bf16.gmra.mxu0 %v1410
        %v1555 = vpop.f32.mrf.mxu0
        %v1556 = vadd.f32 %v1412, %v1555
        %v1557 = vpop.f32.mrf.mxu0
        %1558 = vdwg.mxu0
        %1559 = vmatpush.bf16.msra.mxu0 %v1520
        %1560 = vmatpush.bf16.msra.mxu0 %v1517
        %1561 = vmatpush.bf16.msra.mxu0 %v1514
        %1562 = vmatpush.bf16.msra.mxu0 %v1511
        %1563 = vmatpush.bf16.msra.mxu0 %v1508
        %1564 = vmatpush.bf16.msra.mxu0 %v1505
        %1565 = vmatpush.bf16.msra.mxu0 %v1502
        %1566 = vmatpush.bf16.msra.mxu0 %v1499
        %1567 = vmatmul.bf16.gmra.mxu0 %v1410
        %v1568 = vpop.f32.mrf.mxu0
        %v1569 = vadd.f32 %v1413, %v1568
        %v1570 = vpop.f32.mrf.mxu0
        %1571 = vdwg.mxu0
        %1572 = vmatpush.bf16.msra.mxu0 %v1521
        %1573 = vmatpush.bf16.msra.mxu0 %v1518
        %1574 = vmatpush.bf16.msra.mxu0 %v1515
        %1575 = vmatpush.bf16.msra.mxu0 %v1512
        %1576 = vmatpush.bf16.msra.mxu0 %v1509
        %1577 = vmatpush.bf16.msra.mxu0 %v1506
        %1578 = vmatpush.bf16.msra.mxu0 %v1503
        %1579 = vmatpush.bf16.msra.mxu0 %v1500
        %1580 = vmatmul.bf16.gmra.mxu0 %v1410
        %v1581 = vpop.f32.mrf.mxu0
        %v1582 = vadd.f32 %v1414, %v1581
        %v1583 = vpop.f32.mrf.mxu0
        %1584 = vdwg.mxu0
        %vm1585 = vcmask 261120
        %v1587 = vsel %vm1585, %v1556, 0
        %v1590 = vsel %vm1585, %v1569, 0
        %1592 = vmatpush.xpose.msra.mxu0 0.0
        %1593 = vmatpush.xpose.msra.mxu0 0.0
        %1594 = vmatpush.xpose.msra.mxu0 0.0
        %1595 = vmatpush.xpose.msra.mxu0 0.0
        %1596 = vmatpush.xpose.msra.mxu0 0.0
        %1597 = vmatpush.xpose.msra.mxu0 0.0
        %1598 = vmatpush.xpose.msra.mxu0 0.0
        %1599 = vmatpush.xpose.msra.mxu0 0.0
        %1600 = vmatpush.xpose.msra.mxu0 0.0
        %1601 = vmatpush.xpose.msra.mxu0 0.0
        %1602 = vmatpush.xpose.msra.mxu0 0.0
        %1603 = vmatpush.xpose.msra.mxu0 0.0
        %1604 = vmatpush.xpose.msra.mxu0 0.0
        %1605 = vmatpush.xpose.msra.mxu0 0.0
        %1606 = vmatpush.xpose.msra.mxu0 0.0
        %1607 = vmatpush.xpose.msra.mxu0 %v1590
        %1608 = vmatmul.f32.gmra.mxu0 %v1587
        %v1609 = vpop.f32.mrf.mxu0
        %v1610 = vadd.f32 0.0, %v1609
        %1611 = vdwg.mxu0
        %v1612 = vmul.f32 %v1610, 0.17677669
        %vm1613 = vcmask 64512
        %v1614 = vsel %vm1613, %v1612, -inf
        %1615 = vmax.xlane.f32.xlu0 %v1614
        %v1616 = vpop.xlane.xlu0 %1615
        %v1617 = vsub.f32 %v1612, %v1616
        %v1618 = vmul.f32 %v1617, 1.442695
        %v1619 = vpow.pop %v1618
        %v1620 = vsel %vm1613, %v1619, 0.0
        %1621 = vadd.xlane.f32.xlu0 %v1620
        %v1622 = vpop.xlane.xlu0 %1621
        %v1623 = vrcp.pop %v1622
        %v1624 = vmul.f32 %v1619, %v1623
        %v1626 = vsel %vm1613, %v1624, 0
        %1628 = vmatpush.msra.mxu0 0.0
        %1629 = vmatpush.msra.mxu0 0.0
        %1630 = vmatpush.msra.mxu0 0.0
        %1631 = vmatpush.msra.mxu0 0.0
        %1632 = vmatpush.msra.mxu0 0.0
        %1633 = vmatpush.msra.mxu0 0.0
        %1634 = vmatpush.msra.mxu0 0.0
        %1635 = vmatpush.msra.mxu0 0.0
        %1636 = vmatpush.msra.mxu0 0.0
        %1637 = vmatpush.msra.mxu0 0.0
        %1638 = vmatpush.msra.mxu0 0.0
        %1639 = vmatpush.msra.mxu0 0.0
        %1640 = vmatpush.msra.mxu0 0.0
        %1641 = vmatpush.msra.mxu0 0.0
        %1642 = vmatpush.msra.mxu0 0.0
        %1643 = vmatpush.msra.mxu0 %v1582
        %1644 = vmatmul.f32.gmra.mxu0 %v1626
        %v1645 = vpop.f32.mrf.mxu0
        %v1646 = vadd.f32 0.0, %v1645
        %1647 = vdwg.mxu0
        %v1648 = vpack.c.bf16 %v1646, %v1646
        %1649 = vrot.lane.b32.xlu0 %v1556, 96
        %v1650 = vpop.permute.xlu0 %1649
        %1651 = vrot.lane.b32.xlu0 %v1569, 96
        %v1652 = vpop.permute.xlu0 %1651
        %v1653 = vsel %vm1585, %v1650, 0
        %v1655 = vsel %vm1585, %v1652, 0
        %1657 = vmatpush.xpose.msra.mxu0 0.0
        %1658 = vmatpush.xpose.msra.mxu0 0.0
        %1659 = vmatpush.xpose.msra.mxu0 0.0
        %1660 = vmatpush.xpose.msra.mxu0 0.0
        %1661 = vmatpush.xpose.msra.mxu0 0.0
        %1662 = vmatpush.xpose.msra.mxu0 0.0
        %1663 = vmatpush.xpose.msra.mxu0 0.0
        %1664 = vmatpush.xpose.msra.mxu0 0.0
        %1665 = vmatpush.xpose.msra.mxu0 0.0
        %1666 = vmatpush.xpose.msra.mxu0 0.0
        %1667 = vmatpush.xpose.msra.mxu0 0.0
        %1668 = vmatpush.xpose.msra.mxu0 0.0
        %1669 = vmatpush.xpose.msra.mxu0 0.0
        %1670 = vmatpush.xpose.msra.mxu0 0.0
        %1671 = vmatpush.xpose.msra.mxu0 0.0
        %1672 = vmatpush.xpose.msra.mxu0 %v1655
        %1673 = vmatmul.f32.gmra.mxu0 %v1653
        %v1674 = vpop.f32.mrf.mxu0
        %v1675 = vadd.f32 0.0, %v1674
        %1676 = vdwg.mxu0
        %v1677 = vmul.f32 %v1675, 0.17677669
        %v1678 = vsel %vm1613, %v1677, -inf
        %1679 = vmax.xlane.f32.xlu0 %v1678
        %v1680 = vpop.xlane.xlu0 %1679
        %v1681 = vsub.f32 %v1677, %v1680
        %v1682 = vmul.f32 %v1681, 1.442695
        %v1683 = vpow.pop %v1682
        %v1684 = vsel %vm1613, %v1683, 0.0
        %1685 = vadd.xlane.f32.xlu0 %v1684
        %v1686 = vpop.xlane.xlu0 %1685
        %v1687 = vrcp.pop %v1686
        %v1688 = vmul.f32 %v1683, %v1687
        %1690 = vrot.lane.b32.xlu0 %v1582, 96
        %v1691 = vpop.permute.xlu0 %1690
        %v1694 = vsel %vm1613, %v1688, 0
        %1696 = vmatpush.msra.mxu0 0.0
        %1697 = vmatpush.msra.mxu0 0.0
        %1698 = vmatpush.msra.mxu0 0.0
        %1699 = vmatpush.msra.mxu0 0.0
        %1700 = vmatpush.msra.mxu0 0.0
        %1701 = vmatpush.msra.mxu0 0.0
        %1702 = vmatpush.msra.mxu0 0.0
        %1703 = vmatpush.msra.mxu0 0.0
        %1704 = vmatpush.msra.mxu0 0.0
        %1705 = vmatpush.msra.mxu0 0.0
        %1706 = vmatpush.msra.mxu0 0.0
        %1707 = vmatpush.msra.mxu0 0.0
        %1708 = vmatpush.msra.mxu0 0.0
        %1709 = vmatpush.msra.mxu0 0.0
        %1710 = vmatpush.msra.mxu0 0.0
        %1711 = vmatpush.msra.mxu0 %v1691
        %1712 = vmatmul.f32.gmra.mxu0 %v1694
        %v1713 = vpop.f32.mrf.mxu0
        %v1714 = vadd.f32 0.0, %v1713
        %1715 = vdwg.mxu0
        %v1716 = vpack.c.bf16 %v1714, %v1714
        %v1721 = vunpack.c.l.b16 %v1397
        %v1722 = vunpack.c.l.b16 %v1398
        %v1723 = vunpack.c.l.b16 %v1399
        %v1724 = vunpack.c.l.b16 %v1400
        %v1725 = vpack.c.b16 %v1722, %v1721
        %v1726 = vpack.c.b16 %v1724, %v1723
        %v1730 = vsel %vm1585, %v1716, 0
        %1732 = vmatpush.bf16.msra.mxu0 0
        %1733 = vmatpush.bf16.msra.mxu0 0
        %1734 = vmatpush.bf16.msra.mxu0 0
        %1735 = vmatpush.bf16.msra.mxu0 0
        %1736 = vmatpush.bf16.msra.mxu0 0
        %1737 = vmatpush.bf16.msra.mxu0 0
        %1738 = vmatpush.bf16.msra.mxu0 %v1726
        %1739 = vmatpush.bf16.msra.mxu0 %v1725
        %1740 = vmatmul.bf16.gmra.mxu0 %v1730
        %v1741 = vpop.f32.mrf.mxu0
        %v1742 = vadd.f32 0.0, %v1741
        %v1743 = vpop.f32.mrf.mxu0
        %1744 = vdwg.mxu0
        %v1749 = vunpack.c.l.b16 %v1393
        %v1750 = vunpack.c.l.b16 %v1394
        %v1751 = vunpack.c.l.b16 %v1395
        %v1752 = vunpack.c.l.b16 %v1396
        %v1753 = vpack.c.b16 %v1750, %v1749
        %v1754 = vpack.c.b16 %v1752, %v1751
        %v1758 = vsel %vm1585, %v1648, 0
        %1760 = vmatpush.bf16.msra.mxu0 0
        %1761 = vmatpush.bf16.msra.mxu0 0
        %1762 = vmatpush.bf16.msra.mxu0 0
        %1763 = vmatpush.bf16.msra.mxu0 0
        %1764 = vmatpush.bf16.msra.mxu0 0
        %1765 = vmatpush.bf16.msra.mxu0 0
        %1766 = vmatpush.bf16.msra.mxu0 %v1754
        %1767 = vmatpush.bf16.msra.mxu0 %v1753
        %1768 = vmatmul.bf16.gmra.mxu0 %v1758
        %v1769 = vpop.f32.mrf.mxu0
        %v1770 = vadd.f32 %v1742, %v1769
        %v1771 = vpop.f32.mrf.mxu0
        %1772 = vdwg.mxu0
        %1773 = vrot.lane.b32.xlu0 %v1556, 64
        %v1774 = vpop.permute.xlu0 %1773
        %1775 = vrot.lane.b32.xlu0 %v1569, 64
        %v1776 = vpop.permute.xlu0 %1775
        %v1777 = vsel %vm1585, %v1774, 0
        %v1779 = vsel %vm1585, %v1776, 0
        %1781 = vmatpush.xpose.msra.mxu0 0.0
        %1782 = vmatpush.xpose.msra.mxu0 0.0
        %1783 = vmatpush.xpose.msra.mxu0 0.0
        %1784 = vmatpush.xpose.msra.mxu0 0.0
        %1785 = vmatpush.xpose.msra.mxu0 0.0
        %1786 = vmatpush.xpose.msra.mxu0 0.0
        %1787 = vmatpush.xpose.msra.mxu0 0.0
        %1788 = vmatpush.xpose.msra.mxu0 0.0
        %1789 = vmatpush.xpose.msra.mxu0 0.0
        %1790 = vmatpush.xpose.msra.mxu0 0.0
        %1791 = vmatpush.xpose.msra.mxu0 0.0
        %1792 = vmatpush.xpose.msra.mxu0 0.0
        %1793 = vmatpush.xpose.msra.mxu0 0.0
        %1794 = vmatpush.xpose.msra.mxu0 0.0
        %1795 = vmatpush.xpose.msra.mxu0 0.0
        %1796 = vmatpush.xpose.msra.mxu0 %v1779
        %1797 = vmatmul.f32.gmra.mxu0 %v1777
        %v1798 = vpop.f32.mrf.mxu0
        %v1799 = vadd.f32 0.0, %v1798
        %1800 = vdwg.mxu0
        %v1801 = vmul.f32 %v1799, 0.17677669
        %v1802 = vsel %vm1613, %v1801, -inf
        %1803 = vmax.xlane.f32.xlu0 %v1802
        %v1804 = vpop.xlane.xlu0 %1803
        %v1805 = vsub.f32 %v1801, %v1804
        %v1806 = vmul.f32 %v1805, 1.442695
        %v1807 = vpow.pop %v1806
        %v1808 = vsel %vm1613, %v1807, 0.0
        %1809 = vadd.xlane.f32.xlu0 %v1808
        %v1810 = vpop.xlane.xlu0 %1809
        %v1811 = vrcp.pop %v1810
        %v1812 = vmul.f32 %v1807, %v1811
        %1813 = vrot.lane.b32.xlu0 %v1582, 64
        %v1814 = vpop.permute.xlu0 %1813
        %v1817 = vsel %vm1613, %v1812, 0
        %1819 = vmatpush.msra.mxu0 0.0
        %1820 = vmatpush.msra.mxu0 0.0
        %1821 = vmatpush.msra.mxu0 0.0
        %1822 = vmatpush.msra.mxu0 0.0
        %1823 = vmatpush.msra.mxu0 0.0
        %1824 = vmatpush.msra.mxu0 0.0
        %1825 = vmatpush.msra.mxu0 0.0
        %1826 = vmatpush.msra.mxu0 0.0
        %1827 = vmatpush.msra.mxu0 0.0
        %1828 = vmatpush.msra.mxu0 0.0
        %1829 = vmatpush.msra.mxu0 0.0
        %1830 = vmatpush.msra.mxu0 0.0
        %1831 = vmatpush.msra.mxu0 0.0
        %1832 = vmatpush.msra.mxu0 0.0
        %1833 = vmatpush.msra.mxu0 0.0
        %1834 = vmatpush.msra.mxu0 %v1814
        %1835 = vmatmul.f32.gmra.mxu0 %v1817
        %v1836 = vpop.f32.mrf.mxu0
        %v1837 = vadd.f32 0.0, %v1836
        %1838 = vdwg.mxu0
        %v1839 = vpack.c.bf16 %v1837, %v1837
        %v1844 = vunpack.c.l.b16 %v1401
        %v1845 = vunpack.c.l.b16 %v1402
        %v1846 = vunpack.c.l.b16 %v1403
        %v1847 = vunpack.c.l.b16 %v1404
        %v1848 = vpack.c.b16 %v1845, %v1844
        %v1849 = vpack.c.b16 %v1847, %v1846
        %v1853 = vsel %vm1585, %v1839, 0
        %1855 = vmatpush.bf16.msra.mxu0 0
        %1856 = vmatpush.bf16.msra.mxu0 0
        %1857 = vmatpush.bf16.msra.mxu0 0
        %1858 = vmatpush.bf16.msra.mxu0 0
        %1859 = vmatpush.bf16.msra.mxu0 0
        %1860 = vmatpush.bf16.msra.mxu0 0
        %1861 = vmatpush.bf16.msra.mxu0 %v1849
        %1862 = vmatpush.bf16.msra.mxu0 %v1848
        %1863 = vmatmul.bf16.gmra.mxu0 %v1853
        %v1864 = vpop.f32.mrf.mxu0
        %v1865 = vadd.f32 0.0, %v1864
        %v1866 = vpop.f32.mrf.mxu0
        %1867 = vdwg.mxu0
        %v1868 = vadd.f32 %v1770, %v1865
        %1869 = vrot.lane.b32.xlu0 %v1556, 32
        %v1870 = vpop.permute.xlu0 %1869
        %1871 = vrot.lane.b32.xlu0 %v1569, 32
        %v1872 = vpop.permute.xlu0 %1871
        %v1873 = vsel %vm1585, %v1870, 0
        %v1875 = vsel %vm1585, %v1872, 0
        %1877 = vmatpush.xpose.msra.mxu0 0.0
        %1878 = vmatpush.xpose.msra.mxu0 0.0
        %1879 = vmatpush.xpose.msra.mxu0 0.0
        %1880 = vmatpush.xpose.msra.mxu0 0.0
        %1881 = vmatpush.xpose.msra.mxu0 0.0
        %1882 = vmatpush.xpose.msra.mxu0 0.0
        %1883 = vmatpush.xpose.msra.mxu0 0.0
        %1884 = vmatpush.xpose.msra.mxu0 0.0
        %1885 = vmatpush.xpose.msra.mxu0 0.0
        %1886 = vmatpush.xpose.msra.mxu0 0.0
        %1887 = vmatpush.xpose.msra.mxu0 0.0
        %1888 = vmatpush.xpose.msra.mxu0 0.0
        %1889 = vmatpush.xpose.msra.mxu0 0.0
        %1890 = vmatpush.xpose.msra.mxu0 0.0
        %1891 = vmatpush.xpose.msra.mxu0 0.0
        %1892 = vmatpush.xpose.msra.mxu0 %v1875
        %1893 = vmatmul.f32.gmra.mxu0 %v1873
        %v1894 = vpop.f32.mrf.mxu0
        %v1895 = vadd.f32 0.0, %v1894
        %1896 = vdwg.mxu0
        %v1897 = vmul.f32 %v1895, 0.17677669
        %v1898 = vsel %vm1613, %v1897, -inf
        %1899 = vmax.xlane.f32.xlu0 %v1898
        %v1900 = vpop.xlane.xlu0 %1899
        %v1901 = vsub.f32 %v1897, %v1900
        %v1902 = vmul.f32 %v1901, 1.442695
        %v1903 = vpow.pop %v1902
        %v1904 = vsel %vm1613, %v1903, 0.0
        %1905 = vadd.xlane.f32.xlu0 %v1904
        %v1906 = vpop.xlane.xlu0 %1905
        %v1907 = vrcp.pop %v1906
        %v1908 = vmul.f32 %v1903, %v1907
        %1909 = vrot.lane.b32.xlu0 %v1582, 32
        %v1910 = vpop.permute.xlu0 %1909
        %v1913 = vsel %vm1613, %v1908, 0
        %1915 = vmatpush.msra.mxu0 0.0
        %1916 = vmatpush.msra.mxu0 0.0
        %1917 = vmatpush.msra.mxu0 0.0
        %1918 = vmatpush.msra.mxu0 0.0
        %1919 = vmatpush.msra.mxu0 0.0
        %1920 = vmatpush.msra.mxu0 0.0
        %1921 = vmatpush.msra.mxu0 0.0
        %1922 = vmatpush.msra.mxu0 0.0
        %1923 = vmatpush.msra.mxu0 0.0
        %1924 = vmatpush.msra.mxu0 0.0
        %1925 = vmatpush.msra.mxu0 0.0
        %1926 = vmatpush.msra.mxu0 0.0
        %1927 = vmatpush.msra.mxu0 0.0
        %1928 = vmatpush.msra.mxu0 0.0
        %1929 = vmatpush.msra.mxu0 0.0
        %1930 = vmatpush.msra.mxu0 %v1910
        %1931 = vmatmul.f32.gmra.mxu0 %v1913
        %v1932 = vpop.f32.mrf.mxu0
        %v1933 = vadd.f32 0.0, %v1932
        %1934 = vdwg.mxu0
        %v1935 = vpack.c.bf16 %v1933, %v1933
        %v1940 = vunpack.c.l.b16 %v1405
        %v1941 = vunpack.c.l.b16 %v1406
        %v1942 = vunpack.c.l.b16 %v1407
        %v1943 = vunpack.c.l.b16 %v1408
        %v1944 = vpack.c.b16 %v1941, %v1940
        %v1945 = vpack.c.b16 %v1943, %v1942
        %v1949 = vsel %vm1585, %v1935, 0
        %1951 = vmatpush.bf16.msra.mxu0 0
        %1952 = vmatpush.bf16.msra.mxu0 0
        %1953 = vmatpush.bf16.msra.mxu0 0
        %1954 = vmatpush.bf16.msra.mxu0 0
        %1955 = vmatpush.bf16.msra.mxu0 0
        %1956 = vmatpush.bf16.msra.mxu0 0
        %1957 = vmatpush.bf16.msra.mxu0 %v1945
        %1958 = vmatpush.bf16.msra.mxu0 %v1944
        %1959 = vmatmul.bf16.gmra.mxu0 %v1949
        %v1960 = vpop.f32.mrf.mxu0
        %v1961 = vadd.f32 0.0, %v1960
        %v1962 = vpop.f32.mrf.mxu0
        %1963 = vdwg.mxu0
        %v1964 = vadd.f32 %v1868, %v1961
        %v1965 = vld [vmem:[#allocation7] sm:$0x1]
        %v1967 = vperm.slane %v1965, 0
        %v1969 = vadd.f32 %v1964, %v1967
        %v1970 = vadd.f32 %v1358, %v1969
        %v1971 = vld [vmem:[#allocation11] sm:$0x1]
        %v1972 = vld [vmem:[#allocation13] sm:$0x1]
        %1973 = vadd.xlane.f32.xlu0 %v1970
        %v1974 = vpop.xlane.xlu0 %1973
        %v1975 = vrcp.pop 128.0
        %v1976 = vmul.f32 128.0, %v1975
        %v1977 = vsub.f32 1.0, %v1976
        %v1978 = vmul.f32 %v1975, %v1977
        %v1979 = vadd.f32 %v1975, %v1978
        %vm1980 = vweird.f32 %v1975
        %v1981 = vsel %vm1980, %v1975, %v1979
        %v1982 = vmul.f32 %v1974, %v1981
        %v1983 = vsub.f32 %v1970, %v1982
        %v1984 = vmul.f32 %v1983, %v1983
        %1985 = vadd.xlane.f32.xlu0 %v1984
        %v1986 = vpop.xlane.xlu0 %1985
        %v1987 = vmul.f32 %v1986, %v1981
        %v1988 = vadd.f32 %v1987, 1e-05
        %v1989 = vrsqrt.pop %v1988
        %v1990 = vmul.f32 %v1989, %v1988
        %v1991 = vmul.f32 %v1990, %v1989
        %v1992 = vmul.f32 0.5, %v1991
        %v1993 = vsub.f32 1.5, %v1992
        %v1994 = vmul.f32 %v1989, %v1993
        %vm1995 = vweird.f32 %v1988
        %vm1996 = vweird.f32 %v1989
        %vm1997 = vmor %vm1995, %vm1996
        %v1998 = vsel %vm1997, %v1989, %v1994
        %v1999 = vmul.f32 %v1983, %v1998
        %v2001 = vperm.slane %v1971, 0
        %v2003 = vmul.f32 %v1999, %v2001
        %v2005 = vperm.slane %v1972, 0
        %v2007 = vadd.f32 %v2003, %v2005
        %v2008 = vld [vmem:[%s7] sm:$0xff]
        %v2009 = vld [vmem:[%s7 + $0x8] sm:$0xff]
        %v2010 = vld [vmem:[%s7 + $0x10] sm:$0xff]
        %v2011 = vld [vmem:[%s7 + $0x18] sm:$0xff]
        %v2012 = vld [vmem:[%s7 + $0x20] sm:$0xff]
        %v2013 = vld [vmem:[%s7 + $0x28] sm:$0xff]
        %v2014 = vld [vmem:[%s7 + $0x30] sm:$0xff]
        %v2015 = vld [vmem:[%s7 + $0x38] sm:$0xff]
        %v2016 = vld [vmem:[%s7 + $0x40] sm:$0xff]
        %v2017 = vld [vmem:[%s7 + $0x48] sm:$0xff]
        %v2018 = vld [vmem:[%s7 + $0x50] sm:$0xff]
        %v2019 = vld [vmem:[%s7 + $0x58] sm:$0xff]
        %v2020 = vld [vmem:[%s7 + $0x60] sm:$0xff]
        %v2021 = vld [vmem:[%s7 + $0x68] sm:$0xff]
        %v2022 = vld [vmem:[%s7 + $0x70] sm:$0xff]
        %v2023 = vld [vmem:[%s7 + $0x78] sm:$0xff]
        %v2024 = vld [vmem:[#allocation8] sm:$0x3]
        %v2025 = vpack.c.bf16 %v2007, %v2007
        %v2027 = vperm.slane %v2024, 0
        %v2028 = vperm.slane %v2024, 1
        %v2047 = vunpack.c.l.b16 %v2008
        %v2048 = vunpack.c.h.b16 %v2008
        %v2049 = vunpack.c.l.b16 %v2009
        %v2050 = vunpack.c.h.b16 %v2009
        %v2051 = vunpack.c.l.b16 %v2010
        %v2052 = vunpack.c.h.b16 %v2010
        %v2053 = vunpack.c.l.b16 %v2011
        %v2054 = vunpack.c.h.b16 %v2011
        %v2055 = vunpack.c.l.b16 %v2012
        %v2056 = vunpack.c.h.b16 %v2012
        %v2057 = vunpack.c.l.b16 %v2013
        %v2058 = vunpack.c.h.b16 %v2013
        %v2059 = vunpack.c.l.b16 %v2014
        %v2060 = vunpack.c.h.b16 %v2014
        %v2061 = vunpack.c.l.b16 %v2015
        %v2062 = vunpack.c.h.b16 %v2015
        %v2063 = vunpack.c.l.b16 %v2016
        %v2064 = vunpack.c.h.b16 %v2016
        %v2065 = vunpack.c.l.b16 %v2017
        %v2066 = vunpack.c.h.b16 %v2017
        %v2067 = vunpack.c.l.b16 %v2018
        %v2068 = vunpack.c.h.b16 %v2018
        %v2069 = vunpack.c.l.b16 %v2019
        %v2070 = vunpack.c.h.b16 %v2019
        %v2071 = vunpack.c.l.b16 %v2020
        %v2072 = vunpack.c.h.b16 %v2020
        %v2073 = vunpack.c.l.b16 %v2021
        %v2074 = vunpack.c.h.b16 %v2021
        %v2075 = vunpack.c.l.b16 %v2022
        %v2076 = vunpack.c.h.b16 %v2022
        %v2077 = vunpack.c.l.b16 %v2023
        %v2078 = vunpack.c.h.b16 %v2023
        %v2079 = vpack.c.b16 %v2049, %v2047
        %v2080 = vpack.c.b16 %v2050, %v2048
        %v2081 = vpack.c.b16 %v2053, %v2051
        %v2082 = vpack.c.b16 %v2054, %v2052
        %v2083 = vpack.c.b16 %v2057, %v2055
        %v2084 = vpack.c.b16 %v2058, %v2056
        %v2085 = vpack.c.b16 %v2061, %v2059
        %v2086 = vpack.c.b16 %v2062, %v2060
        %v2087 = vpack.c.b16 %v2065, %v2063
        %v2088 = vpack.c.b16 %v2066, %v2064
        %v2089 = vpack.c.b16 %v2069, %v2067
        %v2090 = vpack.c.b16 %v2070, %v2068
        %v2091 = vpack.c.b16 %v2073, %v2071
        %v2092 = vpack.c.b16 %v2074, %v2072
        %v2093 = vpack.c.b16 %v2077, %v2075
        %v2094 = vpack.c.b16 %v2078, %v2076
        %2111 = vmatpush.bf16.msra.mxu0 %v2093
        %2112 = vmatpush.bf16.msra.mxu0 %v2091
        %2113 = vmatpush.bf16.msra.mxu0 %v2089
        %2114 = vmatpush.bf16.msra.mxu0 %v2087
        %2115 = vmatpush.bf16.msra.mxu0 %v2085
        %2116 = vmatpush.bf16.msra.mxu0 %v2083
        %2117 = vmatpush.bf16.msra.mxu0 %v2081
        %2118 = vmatpush.bf16.msra.mxu0 %v2079
        %2119 = vmatmul.bf16.gmra.mxu0 %v2025
        %v2120 = vpop.f32.mrf.mxu0
        %v2121 = vadd.f32 %v2027, %v2120
        %v2122 = vpop.f32.mrf.mxu0
        %2123 = vdwg.mxu0
        %2124 = vmatpush.bf16.msra.mxu0 %v2094
        %2125 = vmatpush.bf16.msra.mxu0 %v2092
        %2126 = vmatpush.bf16.msra.mxu0 %v2090
        %2127 = vmatpush.bf16.msra.mxu0 %v2088
        %2128 = vmatpush.bf16.msra.mxu0 %v2086
        %2129 = vmatpush.bf16.msra.mxu0 %v2084
        %2130 = vmatpush.bf16.msra.mxu0 %v2082
        %2131 = vmatpush.bf16.msra.mxu0 %v2080
        %2132 = vmatmul.bf16.gmra.mxu0 %v2025
        %v2133 = vpop.f32.mrf.mxu0
        %v2134 = vadd.f32 %v2028, %v2133
        %v2135 = vpop.f32.mrf.mxu0
        %2136 = vdwg.mxu0
        %v2137 = vmax.f32 %v2121, 0.0
        %v2138 = vmax.f32 %v2134, 0.0
        %v2139 = vld [vmem:[%s9] sm:$0xf]
        %v2140 = vld [vmem:[%s9 + $0x4] sm:$0xf]
        %v2141 = vld [vmem:[%s9 + $0x8] sm:$0xf]
        %v2142 = vld [vmem:[%s9 + $0xc] sm:$0xf]
        %v2143 = vld [vmem:[%s9 + $0x10] sm:$0xf]
        %v2144 = vld [vmem:[%s9 + $0x14] sm:$0xf]
        %v2145 = vld [vmem:[%s9 + $0x18] sm:$0xf]
        %v2146 = vld [vmem:[%s9 + $0x1c] sm:$0xf]
        %v2147 = vld [vmem:[%s9 + $0x20] sm:$0xf]
        %v2148 = vld [vmem:[%s9 + $0x24] sm:$0xf]
        %v2149 = vld [vmem:[%s9 + $0x28] sm:$0xf]
        %v2150 = vld [vmem:[%s9 + $0x2c] sm:$0xf]
        %v2151 = vld [vmem:[%s9 + $0x30] sm:$0xf]
        %v2152 = vld [vmem:[%s9 + $0x34] sm:$0xf]
        %v2153 = vld [vmem:[%s9 + $0x38] sm:$0xf]
        %v2154 = vld [vmem:[%s9 + $0x3c] sm:$0xf]
        %v2155 = vld [vmem:[%s9 + $0x40] sm:$0xf]
        %v2156 = vld [vmem:[%s9 + $0x44] sm:$0xf]
        %v2157 = vld [vmem:[%s9 + $0x48] sm:$0xf]
        %v2158 = vld [vmem:[%s9 + $0x4c] sm:$0xf]
        %v2159 = vld [vmem:[%s9 + $0x50] sm:$0xf]
        %v2160 = vld [vmem:[%s9 + $0x54] sm:$0xf]
        %v2161 = vld [vmem:[%s9 + $0x58] sm:$0xf]
        %v2162 = vld [vmem:[%s9 + $0x5c] sm:$0xf]
        %v2163 = vld [vmem:[%s9 + $0x60] sm:$0xf]
        %v2164 = vld [vmem:[%s9 + $0x64] sm:$0xf]
        %v2165 = vld [vmem:[%s9 + $0x68] sm:$0xf]
        %v2166 = vld [vmem:[%s9 + $0x6c] sm:$0xf]
        %v2167 = vld [vmem:[%s9 + $0x70] sm:$0xf]
        %v2168 = vld [vmem:[%s9 + $0x74] sm:$0xf]
        %v2169 = vld [vmem:[%s9 + $0x78] sm:$0xf]
        %v2170 = vld [vmem:[%s9 + $0x7c] sm:$0xf]
        %v2171 = vld [vmem:[#allocation10] sm:$0x1]
        %v2172 = vpack.c.bf16 %v2137, %v2137
        %v2173 = vpack.c.bf16 %v2138, %v2138
        %v2175 = vperm.slane %v2171, 0
        %v2209 = vunpack.c.l.b16 %v2139
        %v2210 = vunpack.c.l.b16 %v2140
        %v2211 = vunpack.c.l.b16 %v2141
        %v2212 = vunpack.c.l.b16 %v2142
        %v2213 = vunpack.c.l.b16 %v2143
        %v2214 = vunpack.c.l.b16 %v2144
        %v2215 = vunpack.c.l.b16 %v2145
        %v2216 = vunpack.c.l.b16 %v2146
        %v2217 = vunpack.c.l.b16 %v2147
        %v2218 = vunpack.c.l.b16 %v2148
        %v2219 = vunpack.c.l.b16 %v2149
        %v2220 = vunpack.c.l.b16 %v2150
        %v2221 = vunpack.c.l.b16 %v2151
        %v2222 = vunpack.c.l.b16 %v2152
        %v2223 = vunpack.c.l.b16 %v2153
        %v2224 = vunpack.c.l.b16 %v2154
        %v2225 = vunpack.c.l.b16 %v2155
        %v2226 = vunpack.c.l.b16 %v2156
        %v2227 = vunpack.c.l.b16 %v2157
        %v2228 = vunpack.c.l.b16 %v2158
        %v2229 = vunpack.c.l.b16 %v2159
        %v2230 = vunpack.c.l.b16 %v2160
        %v2231 = vunpack.c.l.b16 %v2161
        %v2232 = vunpack.c.l.b16 %v2162
        %v2233 = vunpack.c.l.b16 %v2163
        %v2234 = vunpack.c.l.b16 %v2164
        %v2235 = vunpack.c.l.b16 %v2165
        %v2236 = vunpack.c.l.b16 %v2166
        %v2237 = vunpack.c.l.b16 %v2167
        %v2238 = vunpack.c.l.b16 %v2168
        %v2239 = vunpack.c.l.b16 %v2169
        %v2240 = vunpack.c.l.b16 %v2170
        %v2241 = vpack.c.b16 %v2210, %v2209
        %v2242 = vpack.c.b16 %v2212, %v2211
        %v2243 = vpack.c.b16 %v2214, %v2213
        %v2244 = vpack.c.b16 %v2216, %v2215
        %v2245 = vpack.c.b16 %v2218, %v2217
        %v2246 = vpack.c.b16 %v2220, %v2219
        %v2247 = vpack.c.b16 %v2222, %v2221
        %v2248 = vpack.c.b16 %v2224, %v2223
        %v2249 = vpack.c.b16 %v2226, %v2225
        %v2250 = vpack.c.b16 %v2228, %v2227
        %v2251 = vpack.c.b16 %v2230, %v2229
        %v2252 = vpack.c.b16 %v2232, %v2231
        %v2253 = vpack.c.b16 %v2234, %v2233
        %v2254 = vpack.c.b16 %v2236, %v2235
        %v2255 = vpack.c.b16 %v2238, %v2237
        %v2256 = vpack.c.b16 %v2240, %v2239
        %2273 = vmatpush.bf16.msra.mxu0 %v2248
        %2274 = vmatpush.bf16.msra.mxu0 %v2247
        %2275 = vmatpush.bf16.msra.mxu0 %v2246
        %2276 = vmatpush.bf16.msra.mxu0 %v2245
        %2277 = vmatpush.bf16.msra.mxu0 %v2244
        %2278 = vmatpush.bf16.msra.mxu0 %v2243
        %2279 = vmatpush.bf16.msra.mxu0 %v2242
        %2280 = vmatpush.bf16.msra.mxu0 %v2241
        %2281 = vmatmul.bf16.gmra.mxu0 %v2172
        %v2282 = vpop.f32.mrf.mxu0
        %v2283 = vadd.f32 %v2175, %v2282
        %v2284 = vpop.f32.mrf.mxu0
        %2285 = vdwg.mxu0
        %2286 = vmatpush.bf16.msra.mxu0 %v2256
        %2287 = vmatpush.bf16.msra.mxu0 %v2255
        %2288 = vmatpush.bf16.msra.mxu0 %v2254
        %2289 = vmatpush.bf16.msra.mxu0 %v2253
        %2290 = vmatpush.bf16.msra.mxu0 %v2252
        %2291 = vmatpush.bf16.msra.mxu0 %v2251
        %2292 = vmatpush.bf16.msra.mxu0 %v2250
        %2293 = vmatpush.bf16.msra.mxu0 %v2249
        %2294 = vmatmul.bf16.gmra.mxu0 %v2173
        %v2295 = vpop.f32.mrf.mxu0
        %v2296 = vadd.f32 %v2283, %v2295
        %v2297 = vpop.f32.mrf.mxu0
        %2298 = vdwg.mxu0
        %v2299 = vadd.f32 %v2007, %v2296
        %v2300 = vld [vmem:[#allocation14] sm:$0x1]
        %v2301 = vld [vmem:[#allocation16] sm:$0x1]
        %2302 = vadd.xlane.f32.xlu0 %v2299
        %v2303 = vpop.xlane.xlu0 %2302
        %v2304 = vmul.f32 %v2303, %v1981
        %v2305 = vsub.f32 %v2299, %v2304
        %v2306 = vmul.f32 %v2305, %v2305
        %2307 = vadd.xlane.f32.xlu0 %v2306
        %v2308 = vpop.xlane.xlu0 %2307
        %v2309 = vmul.f32 %v2308, %v1981
        %v2310 = vadd.f32 %v2309, 1e-05
        %v2311 = vrsqrt.pop %v2310
        %v2312 = vmul.f32 %v2311, %v2310
        %v2313 = vmul.f32 %v2312, %v2311
        %v2314 = vmul.f32 0.5, %v2313
        %v2315 = vsub.f32 1.5, %v2314
        %v2316 = vmul.f32 %v2311, %v2315
        %vm2317 = vweird.f32 %v2310
        %vm2318 = vweird.f32 %v2311
        %vm2319 = vmor %vm2317, %vm2318
        %v2320 = vsel %vm2319, %v2311, %v2316
        %v2321 = vmul.f32 %v2305, %v2320
        %v2323 = vperm.slane %v2300, 0
        %v2325 = vmul.f32 %v2321, %v2323
        %v2327 = vperm.slane %v2301, 0
        %v2329 = vadd.f32 %v2325, %v2327
        %s2330 = scalar_lea.vmem %s3, 192
        %v2331 = vld [vmem:[%s2330] sm:$0xff]
        %v2332 = vld [vmem:[%s2330 + $0x8] sm:$0xf]
        %v2333 = vld [vmem:[%s2330 + $0xc] sm:$0xff]
        %v2334 = vld [vmem:[%s2330 + $0x14] sm:$0xf]
        %v2335 = vld [vmem:[%s2330 + $0x18] sm:$0xff]
        %v2336 = vld [vmem:[%s2330 + $0x20] sm:$0xf]
        %v2337 = vld [vmem:[%s2330 + $0x24] sm:$0xff]
        %v2338 = vld [vmem:[%s2330 + $0x2c] sm:$0xf]
        %v2339 = vld [vmem:[%s2330 + $0x30] sm:$0xff]
        %v2340 = vld [vmem:[%s2330 + $0x38] sm:$0xf]
        %v2341 = vld [vmem:[%s2330 + $0x3c] sm:$0xff]
        %v2342 = vld [vmem:[%s2330 + $0x44] sm:$0xf]
        %v2343 = vld [vmem:[%s2330 + $0x48] sm:$0xff]
        %v2344 = vld [vmem:[%s2330 + $0x50] sm:$0xf]
        %v2345 = vld [vmem:[%s2330 + $0x54] sm:$0xff]
        %v2346 = vld [vmem:[%s2330 + $0x5c] sm:$0xf]
        %v2347 = vld [vmem:[%s2330 + $0x60] sm:$0xff]
        %v2348 = vld [vmem:[%s2330 + $0x68] sm:$0xf]
        %v2349 = vld [vmem:[%s2330 + $0x6c] sm:$0xff]
        %v2350 = vld [vmem:[%s2330 + $0x74] sm:$0xf]
        %v2351 = vld [vmem:[%s2330 + $0x78] sm:$0xff]
        %v2352 = vld [vmem:[%s2330 + $0x80] sm:$0xf]
        %v2353 = vld [vmem:[%s2330 + $0x84] sm:$0xff]
        %v2354 = vld [vmem:[%s2330 + $0x8c] sm:$0xf]
        %v2355 = vld [vmem:[%s2330 + $0x90] sm:$0xff]
        %v2356 = vld [vmem:[%s2330 + $0x98] sm:$0xf]
        %v2357 = vld [vmem:[%s2330 + $0x9c] sm:$0xff]
        %v2358 = vld [vmem:[%s2330 + $0xa4] sm:$0xf]
        %v2359 = vld [vmem:[%s2330 + $0xa8] sm:$0xff]
        %v2360 = vld [vmem:[%s2330 + $0xb0] sm:$0xf]
        %v2361 = vld [vmem:[%s2330 + $0xb4] sm:$0xff]
        %v2362 = vld [vmem:[%s2330 + $0xbc] sm:$0xf]
        %s2363 = scalar_lea.vmem %s5, 64
        %v2364 = vld [vmem:[%s2363] sm:$0xf]
        %v2365 = vld [vmem:[%s2363 + $0x4] sm:$0xf]
        %v2366 = vld [vmem:[%s2363 + $0x8] sm:$0xf]
        %v2367 = vld [vmem:[%s2363 + $0xc] sm:$0xf]
        %v2368 = vld [vmem:[%s2363 + $0x10] sm:$0xf]
        %v2369 = vld [vmem:[%s2363 + $0x14] sm:$0xf]
        %v2370 = vld [vmem:[%s2363 + $0x18] sm:$0xf]
        %v2371 = vld [vmem:[%s2363 + $0x1c] sm:$0xf]
        %v2372 = vld [vmem:[%s2363 + $0x20] sm:$0xf]
        %v2373 = vld [vmem:[%s2363 + $0x24] sm:$0xf]
        %v2374 = vld [vmem:[%s2363 + $0x28] sm:$0xf]
        %v2375 = vld [vmem:[%s2363 + $0x2c] sm:$0xf]
        %v2376 = vld [vmem:[%s2363 + $0x30] sm:$0xf]
        %v2377 = vld [vmem:[%s2363 + $0x34] sm:$0xf]
        %v2378 = vld [vmem:[%s2363 + $0x38] sm:$0xf]
        %v2379 = vld [vmem:[%s2363 + $0x3c] sm:$0xf]
        %s2380 = scalar_lea.vmem [#allocation5], 3
        %v2381 = vld [vmem:[%s2380] sm:$0x7]
        %v2382 = vpack.c.bf16 %v2329, %v2329
        %v2384 = vperm.slane %v2381, 0
        %v2385 = vperm.slane %v2381, 1
        %v2386 = vperm.slane %v2381, 2
        %v2422 = vunpack.c.l.b16 %v2331
        %v2423 = vunpack.c.h.b16 %v2331
        %v2424 = vunpack.c.l.b16 %v2332
        %v2425 = vunpack.c.l.b16 %v2333
        %v2426 = vunpack.c.h.b16 %v2333
        %v2427 = vunpack.c.l.b16 %v2334
        %v2428 = vunpack.c.l.b16 %v2335
        %v2429 = vunpack.c.h.b16 %v2335
        %v2430 = vunpack.c.l.b16 %v2336
        %v2431 = vunpack.c.l.b16 %v2337
        %v2432 = vunpack.c.h.b16 %v2337
        %v2433 = vunpack.c.l.b16 %v2338
        %v2434 = vunpack.c.l.b16 %v2339
        %v2435 = vunpack.c.h.b16 %v2339
        %v2436 = vunpack.c.l.b16 %v2340
        %v2437 = vunpack.c.l.b16 %v2341
        %v2438 = vunpack.c.h.b16 %v2341
        %v2439 = vunpack.c.l.b16 %v2342
        %v2440 = vunpack.c.l.b16 %v2343
        %v2441 = vunpack.c.h.b16 %v2343
        %v2442 = vunpack.c.l.b16 %v2344
        %v2443 = vunpack.c.l.b16 %v2345
        %v2444 = vunpack.c.h.b16 %v2345
        %v2445 = vunpack.c.l.b16 %v2346
        %v2446 = vunpack.c.l.b16 %v2347
        %v2447 = vunpack.c.h.b16 %v2347
        %v2448 = vunpack.c.l.b16 %v2348
        %v2449 = vunpack.c.l.b16 %v2349
        %v2450 = vunpack.c.h.b16 %v2349
        %v2451 = vunpack.c.l.b16 %v2350
        %v2452 = vunpack.c.l.b16 %v2351
        %v2453 = vunpack.c.h.b16 %v2351
        %v2454 = vunpack.c.l.b16 %v2352
        %v2455 = vunpack.c.l.b16 %v2353
        %v2456 = vunpack.c.h.b16 %v2353
        %v2457 = vunpack.c.l.b16 %v2354
        %v2458 = vunpack.c.l.b16 %v2355
        %v2459 = vunpack.c.h.b16 %v2355
        %v2460 = vunpack.c.l.b16 %v2356
        %v2461 = vunpack.c.l.b16 %v2357
        %v2462 = vunpack.c.h.b16 %v2357
        %v2463 = vunpack.c.l.b16 %v2358
        %v2464 = vunpack.c.l.b16 %v2359
        %v2465 = vunpack.c.h.b16 %v2359
        %v2466 = vunpack.c.l.b16 %v2360
        %v2467 = vunpack.c.l.b16 %v2361
        %v2468 = vunpack.c.h.b16 %v2361
        %v2469 = vunpack.c.l.b16 %v2362
        %v2470 = vpack.c.b16 %v2425, %v2422
        %v2471 = vpack.c.b16 %v2426, %v2423
        %v2472 = vpack.c.b16 %v2427, %v2424
        %v2473 = vpack.c.b16 %v2431, %v2428
        %v2474 = vpack.c.b16 %v2432, %v2429
        %v2475 = vpack.c.b16 %v2433, %v2430
        %v2476 = vpack.c.b16 %v2437, %v2434
        %v2477 = vpack.c.b16 %v2438, %v2435
        %v2478 = vpack.c.b16 %v2439, %v2436
        %v2479 = vpack.c.b16 %v2443, %v2440
        %v2480 = vpack.c.b16 %v2444, %v2441
        %v2481 = vpack.c.b16 %v2445, %v2442
        %v2482 = vpack.c.b16 %v2449, %v2446
        %v2483 = vpack.c.b16 %v2450, %v2447
        %v2484 = vpack.c.b16 %v2451, %v2448
        %v2485 = vpack.c.b16 %v2455, %v2452
        %v2486 = vpack.c.b16 %v2456, %v2453
        %v2487 = vpack.c.b16 %v2457, %v2454
        %v2488 = vpack.c.b16 %v2461, %v2458
        %v2489 = vpack.c.b16 %v2462, %v2459
        %v2490 = vpack.c.b16 %v2463, %v2460
        %v2491 = vpack.c.b16 %v2467, %v2464
        %v2492 = vpack.c.b16 %v2468, %v2465
        %v2493 = vpack.c.b16 %v2469, %v2466
        %2518 = vmatpush.bf16.msra.mxu0 %v2491
        %2519 = vmatpush.bf16.msra.mxu0 %v2488
        %2520 = vmatpush.bf16.msra.mxu0 %v2485
        %2521 = vmatpush.bf16.msra.mxu0 %v2482
        %2522 = vmatpush.bf16.msra.mxu0 %v2479
        %2523 = vmatpush.bf16.msra.mxu0 %v2476
        %2524 = vmatpush.bf16.msra.mxu0 %v2473
        %2525 = vmatpush.bf16.msra.mxu0 %v2470
        %2526 = vmatmul.bf16.gmra.mxu0 %v2382
        %v2527 = vpop.f32.mrf.mxu0
        %v2528 = vadd.f32 %v2384, %v2527
        %v2529 = vpop.f32.mrf.mxu0
        %2530 = vdwg.mxu0
        %2531 = vmatpush.bf16.msra.mxu0 %v2492
        %2532 = vmatpush.bf16.msra.mxu0 %v2489
        %2533 = vmatpush.bf16.msra.mxu0 %v2486
        %2534 = vmatpush.bf16.msra.mxu0 %v2483
        %2535 = vmatpush.bf16.msra.mxu0 %v2480
        %2536 = vmatpush.bf16.msra.mxu0 %v2477
        %2537 = vmatpush.bf16.msra.mxu0 %v2474
        %2538 = vmatpush.bf16.msra.mxu0 %v2471
        %2539 = vmatmul.bf16.gmra.mxu0 %v2382
        %v2540 = vpop.f32.mrf.mxu0
        %v2541 = vadd.f32 %v2385, %v2540
        %v2542 = vpop.f32.mrf.mxu0
        %2543 = vdwg.mxu0
        %2544 = vmatpush.bf16.msra.mxu0 %v2493
        %2545 = vmatpush.bf16.msra.mxu0 %v2490
        %2546 = vmatpush.bf16.msra.mxu0 %v2487
        %2547 = vmatpush.bf16.msra.mxu0 %v2484
        %2548 = vmatpush.bf16.msra.mxu0 %v2481
        %2549 = vmatpush.bf16.msra.mxu0 %v2478
        %2550 = vmatpush.bf16.msra.mxu0 %v2475
        %2551 = vmatpush.bf16.msra.mxu0 %v2472
        %2552 = vmatmul.bf16.gmra.mxu0 %v2382
        %v2553 = vpop.f32.mrf.mxu0
        %v2554 = vadd.f32 %v2386, %v2553
        %v2555 = vpop.f32.mrf.mxu0
        %2556 = vdwg.mxu0
        %v2558 = vsel %vm1585, %v2528, 0
        %v2561 = vsel %vm1585, %v2541, 0
        %2563 = vmatpush.xpose.msra.mxu0 0.0
        %2564 = vmatpush.xpose.msra.mxu0 0.0
        %2565 = vmatpush.xpose.msra.mxu0 0.0
        %2566 = vmatpush.xpose.msra.mxu0 0.0
        %2567 = vmatpush.xpose.msra.mxu0 0.0
        %2568 = vmatpush.xpose.msra.mxu0 0.0
        %2569 = vmatpush.xpose.msra.mxu0 0.0
        %2570 = vmatpush.xpose.msra.mxu0 0.0
        %2571 = vmatpush.xpose.msra.mxu0 0.0
        %2572 = vmatpush.xpose.msra.mxu0 0.0
        %2573 = vmatpush.xpose.msra.mxu0 0.0
        %2574 = vmatpush.xpose.msra.mxu0 0.0
        %2575 = vmatpush.xpose.msra.mxu0 0.0
        %2576 = vmatpush.xpose.msra.mxu0 0.0
        %2577 = vmatpush.xpose.msra.mxu0 0.0
        %2578 = vmatpush.xpose.msra.mxu0 %v2561
        %2579 = vmatmul.f32.gmra.mxu0 %v2558
        %v2580 = vpop.f32.mrf.mxu0
        %v2581 = vadd.f32 0.0, %v2580
        %2582 = vdwg.mxu0
        %v2583 = vmul.f32 %v2581, 0.17677669
        %v2584 = vsel %vm1613, %v2583, -inf
        %2585 = vmax.xlane.f32.xlu0 %v2584
        %v2586 = vpop.xlane.xlu0 %2585
        %v2587 = vsub.f32 %v2583, %v2586
        %v2588 = vmul.f32 %v2587, 1.442695
        %v2589 = vpow.pop %v2588
        %v2590 = vsel %vm1613, %v2589, 0.0
        %2591 = vadd.xlane.f32.xlu0 %v2590
        %v2592 = vpop.xlane.xlu0 %2591
        %v2593 = vrcp.pop %v2592
        %v2594 = vmul.f32 %v2589, %v2593
        %v2596 = vsel %vm1613, %v2594, 0
        %2598 = vmatpush.msra.mxu0 0.0
        %2599 = vmatpush.msra.mxu0 0.0
        %2600 = vmatpush.msra.mxu0 0.0
        %2601 = vmatpush.msra.mxu0 0.0
        %2602 = vmatpush.msra.mxu0 0.0
        %2603 = vmatpush.msra.mxu0 0.0
        %2604 = vmatpush.msra.mxu0 0.0
        %2605 = vmatpush.msra.mxu0 0.0
        %2606 = vmatpush.msra.mxu0 0.0
        %2607 = vmatpush.msra.mxu0 0.0
        %2608 = vmatpush.msra.mxu0 0.0
        %2609 = vmatpush.msra.mxu0 0.0
        %2610 = vmatpush.msra.mxu0 0.0
        %2611 = vmatpush.msra.mxu0 0.0
        %2612 = vmatpush.msra.mxu0 0.0
        %2613 = vmatpush.msra.mxu0 %v2554
        %2614 = vmatmul.f32.gmra.mxu0 %v2596
        %v2615 = vpop.f32.mrf.mxu0
        %v2616 = vadd.f32 0.0, %v2615
        %2617 = vdwg.mxu0
        %v2618 = vpack.c.bf16 %v2616, %v2616
        %2619 = vrot.lane.b32.xlu0 %v2528, 96
        %v2620 = vpop.permute.xlu0 %2619
        %2621 = vrot.lane.b32.xlu0 %v2541, 96
        %v2622 = vpop.permute.xlu0 %2621
        %v2623 = vsel %vm1585, %v2620, 0
        %v2625 = vsel %vm1585, %v2622, 0
        %2627 = vmatpush.xpose.msra.mxu0 0.0
        %2628 = vmatpush.xpose.msra.mxu0 0.0
        %2629 = vmatpush.xpose.msra.mxu0 0.0
        %2630 = vmatpush.xpose.msra.mxu0 0.0
        %2631 = vmatpush.xpose.msra.mxu0 0.0
        %2632 = vmatpush.xpose.msra.mxu0 0.0
        %2633 = vmatpush.xpose.msra.mxu0 0.0
        %2634 = vmatpush.xpose.msra.mxu0 0.0
        %2635 = vmatpush.xpose.msra.mxu0 0.0
        %2636 = vmatpush.xpose.msra.mxu0 0.0
        %2637 = vmatpush.xpose.msra.mxu0 0.0
        %2638 = vmatpush.xpose.msra.mxu0 0.0
        %2639 = vmatpush.xpose.msra.mxu0 0.0
        %2640 = vmatpush.xpose.msra.mxu0 0.0
        %2641 = vmatpush.xpose.msra.mxu0 0.0
        %2642 = vmatpush.xpose.msra.mxu0 %v2625
        %2643 = vmatmul.f32.gmra.mxu0 %v2623
        %v2644 = vpop.f32.mrf.mxu0
        %v2645 = vadd.f32 0.0, %v2644
        %2646 = vdwg.mxu0
        %v2647 = vmul.f32 %v2645, 0.17677669
        %v2648 = vsel %vm1613, %v2647, -inf
        %2649 = vmax.xlane.f32.xlu0 %v2648
        %v2650 = vpop.xlane.xlu0 %2649
        %v2651 = vsub.f32 %v2647, %v2650
        %v2652 = vmul.f32 %v2651, 1.442695
        %v2653 = vpow.pop %v2652
        %v2654 = vsel %vm1613, %v2653, 0.0
        %2655 = vadd.xlane.f32.xlu0 %v2654
        %v2656 = vpop.xlane.xlu0 %2655
        %v2657 = vrcp.pop %v2656
        %v2658 = vmul.f32 %v2653, %v2657
        %2660 = vrot.lane.b32.xlu0 %v2554, 96
        %v2661 = vpop.permute.xlu0 %2660
        %v2664 = vsel %vm1613, %v2658, 0
        %2666 = vmatpush.msra.mxu0 0.0
        %2667 = vmatpush.msra.mxu0 0.0
        %2668 = vmatpush.msra.mxu0 0.0
        %2669 = vmatpush.msra.mxu0 0.0
        %2670 = vmatpush.msra.mxu0 0.0
        %2671 = vmatpush.msra.mxu0 0.0
        %2672 = vmatpush.msra.mxu0 0.0
        %2673 = vmatpush.msra.mxu0 0.0
        %2674 = vmatpush.msra.mxu0 0.0
        %2675 = vmatpush.msra.mxu0 0.0
        %2676 = vmatpush.msra.mxu0 0.0
        %2677 = vmatpush.msra.mxu0 0.0
        %2678 = vmatpush.msra.mxu0 0.0
        %2679 = vmatpush.msra.mxu0 0.0
        %2680 = vmatpush.msra.mxu0 0.0
        %2681 = vmatpush.msra.mxu0 %v2661
        %2682 = vmatmul.f32.gmra.mxu0 %v2664
        %v2683 = vpop.f32.mrf.mxu0
        %v2684 = vadd.f32 0.0, %v2683
        %2685 = vdwg.mxu0
        %v2686 = vpack.c.bf16 %v2684, %v2684
        %v2691 = vunpack.c.l.b16 %v2368
        %v2692 = vunpack.c.l.b16 %v2369
        %v2693 = vunpack.c.l.b16 %v2370
        %v2694 = vunpack.c.l.b16 %v2371
        %v2695 = vpack.c.b16 %v2692, %v2691
        %v2696 = vpack.c.b16 %v2694, %v2693
        %v2700 = vsel %vm1585, %v2686, 0
        %2702 = vmatpush.bf16.msra.mxu0 0
        %2703 = vmatpush.bf16.msra.mxu0 0
        %2704 = vmatpush.bf16.msra.mxu0 0
        %2705 = vmatpush.bf16.msra.mxu0 0
        %2706 = vmatpush.bf16.msra.mxu0 0
        %2707 = vmatpush.bf16.msra.mxu0 0
        %2708 = vmatpush.bf16.msra.mxu0 %v2696
        %2709 = vmatpush.bf16.msra.mxu0 %v2695
        %2710 = vmatmul.bf16.gmra.mxu0 %v2700
        %v2711 = vpop.f32.mrf.mxu0
        %v2712 = vadd.f32 0.0, %v2711
        %v2713 = vpop.f32.mrf.mxu0
        %2714 = vdwg.mxu0
        %v2719 = vunpack.c.l.b16 %v2364
        %v2720 = vunpack.c.l.b16 %v2365
        %v2721 = vunpack.c.l.b16 %v2366
        %v2722 = vunpack.c.l.b16 %v2367
        %v2723 = vpack.c.b16 %v2720, %v2719
        %v2724 = vpack.c.b16 %v2722, %v2721
        %v2728 = vsel %vm1585, %v2618, 0
        %2730 = vmatpush.bf16.msra.mxu0 0
        %2731 = vmatpush.bf16.msra.mxu0 0
        %2732 = vmatpush.bf16.msra.mxu0 0
        %2733 = vmatpush.bf16.msra.mxu0 0
        %2734 = vmatpush.bf16.msra.mxu0 0
        %2735 = vmatpush.bf16.msra.mxu0 0
        %2736 = vmatpush.bf16.msra.mxu0 %v2724
        %2737 = vmatpush.bf16.msra.mxu0 %v2723
        %2738 = vmatmul.bf16.gmra.mxu0 %v2728
        %v2739 = vpop.f32.mrf.mxu0
        %v2740 = vadd.f32 %v2712, %v2739
        %v2741 = vpop.f32.mrf.mxu0
        %2742 = vdwg.mxu0
        %2743 = vrot.lane.b32.xlu0 %v2528, 64
        %v2744 = vpop.permute.xlu0 %2743
        %2745 = vrot.lane.b32.xlu0 %v2541, 64
        %v2746 = vpop.permute.xlu0 %2745
        %v2747 = vsel %vm1585, %v2744, 0
        %v2749 = vsel %vm1585, %v2746, 0
        %2751 = vmatpush.xpose.msra.mxu0 0.0
        %2752 = vmatpush.xpose.msra.mxu0 0.0
        %2753 = vmatpush.xpose.msra.mxu0 0.0
        %2754 = vmatpush.xpose.msra.mxu0 0.0
        %2755 = vmatpush.xpose.msra.mxu0 0.0
        %2756 = vmatpush.xpose.msra.mxu0 0.0
        %2757 = vmatpush.xpose.msra.mxu0 0.0
        %2758 = vmatpush.xpose.msra.mxu0 0.0
        %2759 = vmatpush.xpose.msra.mxu0 0.0
        %2760 = vmatpush.xpose.msra.mxu0 0.0
        %2761 = vmatpush.xpose.msra.mxu0 0.0
        %2762 = vmatpush.xpose.msra.mxu0 0.0
        %2763 = vmatpush.xpose.msra.mxu0 0.0
        %2764 = vmatpush.xpose.msra.mxu0 0.0
        %2765 = vmatpush.xpose.msra.mxu0 0.0
        %2766 = vmatpush.xpose.msra.mxu0 %v2749
        %2767 = vmatmul.f32.gmra.mxu0 %v2747
        %v2768 = vpop.f32.mrf.mxu0
        %v2769 = vadd.f32 0.0, %v2768
        %2770 = vdwg.mxu0
        %v2771 = vmul.f32 %v2769, 0.17677669
        %v2772 = vsel %vm1613, %v2771, -inf
        %2773 = vmax.xlane.f32.xlu0 %v2772
        %v2774 = vpop.xlane.xlu0 %2773
        %v2775 = vsub.f32 %v2771, %v2774
        %v2776 = vmul.f32 %v2775, 1.442695
        %v2777 = vpow.pop %v2776
        %v2778 = vsel %vm1613, %v2777, 0.0
        %2779 = vadd.xlane.f32.xlu0 %v2778
        %v2780 = vpop.xlane.xlu0 %2779
        %v2781 = vrcp.pop %v2780
        %v2782 = vmul.f32 %v2777, %v2781
        %2783 = vrot.lane.b32.xlu0 %v2554, 64
        %v2784 = vpop.permute.xlu0 %2783
        %v2787 = vsel %vm1613, %v2782, 0
        %2789 = vmatpush.msra.mxu0 0.0
        %2790 = vmatpush.msra.mxu0 0.0
        %2791 = vmatpush.msra.mxu0 0.0
        %2792 = vmatpush.msra.mxu0 0.0
        %2793 = vmatpush.msra.mxu0 0.0
        %2794 = vmatpush.msra.mxu0 0.0
        %2795 = vmatpush.msra.mxu0 0.0
        %2796 = vmatpush.msra.mxu0 0.0
        %2797 = vmatpush.msra.mxu0 0.0
        %2798 = vmatpush.msra.mxu0 0.0
        %2799 = vmatpush.msra.mxu0 0.0
        %2800 = vmatpush.msra.mxu0 0.0
        %2801 = vmatpush.msra.mxu0 0.0
        %2802 = vmatpush.msra.mxu0 0.0
        %2803 = vmatpush.msra.mxu0 0.0
        %2804 = vmatpush.msra.mxu0 %v2784
        %2805 = vmatmul.f32.gmra.mxu0 %v2787
        %v2806 = vpop.f32.mrf.mxu0
        %v2807 = vadd.f32 0.0, %v2806
        %2808 = vdwg.mxu0
        %v2809 = vpack.c.bf16 %v2807, %v2807
        %v2814 = vunpack.c.l.b16 %v2372
        %v2815 = vunpack.c.l.b16 %v2373
        %v2816 = vunpack.c.l.b16 %v2374
        %v2817 = vunpack.c.l.b16 %v2375
        %v2818 = vpack.c.b16 %v2815, %v2814
        %v2819 = vpack.c.b16 %v2817, %v2816
        %v2823 = vsel %vm1585, %v2809, 0
        %2825 = vmatpush.bf16.msra.mxu0 0
        %2826 = vmatpush.bf16.msra.mxu0 0
        %2827 = vmatpush.bf16.msra.mxu0 0
        %2828 = vmatpush.bf16.msra.mxu0 0
        %2829 = vmatpush.bf16.msra.mxu0 0
        %2830 = vmatpush.bf16.msra.mxu0 0
        %2831 = vmatpush.bf16.msra.mxu0 %v2819
        %2832 = vmatpush.bf16.msra.mxu0 %v2818
        %2833 = vmatmul.bf16.gmra.mxu0 %v2823
        %v2834 = vpop.f32.mrf.mxu0
        %v2835 = vadd.f32 0.0, %v2834
        %v2836 = vpop.f32.mrf.mxu0
        %2837 = vdwg.mxu0
        %v2838 = vadd.f32 %v2740, %v2835
        %2839 = vrot.lane.b32.xlu0 %v2528, 32
        %v2840 = vpop.permute.xlu0 %2839
        %2841 = vrot.lane.b32.xlu0 %v2541, 32
        %v2842 = vpop.permute.xlu0 %2841
        %v2843 = vsel %vm1585, %v2840, 0
        %v2845 = vsel %vm1585, %v2842, 0
        %2847 = vmatpush.xpose.msra.mxu0 0.0
        %2848 = vmatpush.xpose.msra.mxu0 0.0
        %2849 = vmatpush.xpose.msra.mxu0 0.0
        %2850 = vmatpush.xpose.msra.mxu0 0.0
        %2851 = vmatpush.xpose.msra.mxu0 0.0
        %2852 = vmatpush.xpose.msra.mxu0 0.0
        %2853 = vmatpush.xpose.msra.mxu0 0.0
        %2854 = vmatpush.xpose.msra.mxu0 0.0
        %2855 = vmatpush.xpose.msra.mxu0 0.0
        %2856 = vmatpush.xpose.msra.mxu0 0.0
        %2857 = vmatpush.xpose.msra.mxu0 0.0
        %2858 = vmatpush.xpose.msra.mxu0 0.0
        %2859 = vmatpush.xpose.msra.mxu0 0.0
        %2860 = vmatpush.xpose.msra.mxu0 0.0
        %2861 = vmatpush.xpose.msra.mxu0 0.0
        %2862 = vmatpush.xpose.msra.mxu0 %v2845
        %2863 = vmatmul.f32.gmra.mxu0 %v2843
        %v2864 = vpop.f32.mrf.mxu0
        %v2865 = vadd.f32 0.0, %v2864
        %2866 = vdwg.mxu0
        %v2867 = vmul.f32 %v2865, 0.17677669
        %v2868 = vsel %vm1613, %v2867, -inf
        %2869 = vmax.xlane.f32.xlu0 %v2868
        %v2870 = vpop.xlane.xlu0 %2869
        %v2871 = vsub.f32 %v2867, %v2870
        %v2872 = vmul.f32 %v2871, 1.442695
        %v2873 = vpow.pop %v2872
        %v2874 = vsel %vm1613, %v2873, 0.0
        %2875 = vadd.xlane.f32.xlu0 %v2874
        %v2876 = vpop.xlane.xlu0 %2875
        %v2877 = vrcp.pop %v2876
        %v2878 = vmul.f32 %v2873, %v2877
        %2879 = vrot.lane.b32.xlu0 %v2554, 32
        %v2880 = vpop.permute.xlu0 %2879
        %v2883 = vsel %vm1613, %v2878, 0
        %2885 = vmatpush.msra.mxu0 0.0
        %2886 = vmatpush.msra.mxu0 0.0
        %2887 = vmatpush.msra.mxu0 0.0
        %2888 = vmatpush.msra.mxu0 0.0
        %2889 = vmatpush.msra.mxu0 0.0
        %2890 = vmatpush.msra.mxu0 0.0
        %2891 = vmatpush.msra.mxu0 0.0
        %2892 = vmatpush.msra.mxu0 0.0
        %2893 = vmatpush.msra.mxu0 0.0
        %2894 = vmatpush.msra.mxu0 0.0
        %2895 = vmatpush.msra.mxu0 0.0
        %2896 = vmatpush.msra.mxu0 0.0
        %2897 = vmatpush.msra.mxu0 0.0
        %2898 = vmatpush.msra.mxu0 0.0
        %2899 = vmatpush.msra.mxu0 0.0
        %2900 = vmatpush.msra.mxu0 %v2880
        %2901 = vmatmul.f32.gmra.mxu0 %v2883
        %v2902 = vpop.f32.mrf.mxu0
        %v2903 = vadd.f32 0.0, %v2902
        %2904 = vdwg.mxu0
        %v2905 = vpack.c.bf16 %v2903, %v2903
        %v2910 = vunpack.c.l.b16 %v2376
        %v2911 = vunpack.c.l.b16 %v2377
        %v2912 = vunpack.c.l.b16 %v2378
        %v2913 = vunpack.c.l.b16 %v2379
        %v2914 = vpack.c.b16 %v2911, %v2910
        %v2915 = vpack.c.b16 %v2913, %v2912
        %v2919 = vsel %vm1585, %v2905, 0
        %2921 = vmatpush.bf16.msra.mxu0 0
        %2922 = vmatpush.bf16.msra.mxu0 0
        %2923 = vmatpush.bf16.msra.mxu0 0
        %2924 = vmatpush.bf16.msra.mxu0 0
        %2925 = vmatpush.bf16.msra.mxu0 0
        %2926 = vmatpush.bf16.msra.mxu0 0
        %2927 = vmatpush.bf16.msra.mxu0 %v2915
        %2928 = vmatpush.bf16.msra.mxu0 %v2914
        %2929 = vmatmul.bf16.gmra.mxu0 %v2919
        %v2930 = vpop.f32.mrf.mxu0
        %v2931 = vadd.f32 0.0, %v2930
        %v2932 = vpop.f32.mrf.mxu0
        %2933 = vdwg.mxu0
        %v2934 = vadd.f32 %v2838, %v2931
        %s2935 = scalar_lea.vmem [#allocation7], 1
        %v2936 = vld [vmem:[%s2935] sm:$0x1]
        %v2938 = vperm.slane %v2936, 0
        %v2940 = vadd.f32 %v2934, %v2938
        %v2941 = vadd.f32 %v2329, %v2940
        %s2942 = scalar_lea.vmem [#allocation11], 1
        %v2943 = vld [vmem:[%s2942] sm:$0x1]
        %s2944 = scalar_lea.vmem [#allocation13], 1
        %v2945 = vld [vmem:[%s2944] sm:$0x1]
        %2946 = vadd.xlane.f32.xlu0 %v2941
        %v2947 = vpop.xlane.xlu0 %2946
        %v2948 = vmul.f32 %v2947, %v1981
        %v2949 = vsub.f32 %v2941, %v2948
        %v2950 = vmul.f32 %v2949, %v2949
        %2951 = vadd.xlane.f32.xlu0 %v2950
        %v2952 = vpop.xlane.xlu0 %2951
        %v2953 = vmul.f32 %v2952, %v1981
        %v2954 = vadd.f32 %v2953, 1e-05
        %v2955 = vrsqrt.pop %v2954
        %v2956 = vmul.f32 %v2955, %v2954
        %v2957 = vmul.f32 %v2956, %v2955
        %v2958 = vmul.f32 0.5, %v2957
        %v2959 = vsub.f32 1.5, %v2958
        %v2960 = vmul.f32 %v2955, %v2959
        %vm2961 = vweird.f32 %v2954
        %vm2962 = vweird.f32 %v2955
        %vm2963 = vmor %vm2961, %vm2962
        %v2964 = vsel %vm2963, %v2955, %v2960
        %v2965 = vmul.f32 %v2949, %v2964
        %v2967 = vperm.slane %v2943, 0
        %v2969 = vmul.f32 %v2965, %v2967
        %v2971 = vperm.slane %v2945, 0
        %v2973 = vadd.f32 %v2969, %v2971
        %s2974 = scalar_lea.vmem %s7, 128
        %v2975 = vld [vmem:[%s2974] sm:$0xff]
        %v2976 = vld [vmem:[%s2974 + $0x8] sm:$0xff]
        %v2977 = vld [vmem:[%s2974 + $0x10] sm:$0xff]
        %v2978 = vld [vmem:[%s2974 + $0x18] sm:$0xff]
        %v2979 = vld [vmem:[%s2974 + $0x20] sm:$0xff]
        %v2980 = vld [vmem:[%s2974 + $0x28] sm:$0xff]
        %v2981 = vld [vmem:[%s2974 + $0x30] sm:$0xff]
        %v2982 = vld [vmem:[%s2974 + $0x38] sm:$0xff]
        %v2983 = vld [vmem:[%s2974 + $0x40] sm:$0xff]
        %v2984 = vld [vmem:[%s2974 + $0x48] sm:$0xff]
        %v2985 = vld [vmem:[%s2974 + $0x50] sm:$0xff]
        %v2986 = vld [vmem:[%s2974 + $0x58] sm:$0xff]
        %v2987 = vld [vmem:[%s2974 + $0x60] sm:$0xff]
        %v2988 = vld [vmem:[%s2974 + $0x68] sm:$0xff]
        %v2989 = vld [vmem:[%s2974 + $0x70] sm:$0xff]
        %v2990 = vld [vmem:[%s2974 + $0x78] sm:$0xff]
        %s2991 = scalar_lea.vmem [#allocation8], 2
        %v2992 = vld [vmem:[%s2991] sm:$0x3]
        %v2993 = vpack.c.bf16 %v2973, %v2973
        %v2995 = vperm.slane %v2992, 0
        %v2996 = vperm.slane %v2992, 1
        %v3015 = vunpack.c.l.b16 %v2975
        %v3016 = vunpack.c.h.b16 %v2975
        %v3017 = vunpack.c.l.b16 %v2976
        %v3018 = vunpack.c.h.b16 %v2976
        %v3019 = vunpack.c.l.b16 %v2977
        %v3020 = vunpack.c.h.b16 %v2977
        %v3021 = vunpack.c.l.b16 %v2978
        %v3022 = vunpack.c.h.b16 %v2978
        %v3023 = vunpack.c.l.b16 %v2979
        %v3024 = vunpack.c.h.b16 %v2979
        %v3025 = vunpack.c.l.b16 %v2980
        %v3026 = vunpack.c.h.b16 %v2980
        %v3027 = vunpack.c.l.b16 %v2981
        %v3028 = vunpack.c.h.b16 %v2981
        %v3029 = vunpack.c.l.b16 %v2982
        %v3030 = vunpack.c.h.b16 %v2982
        %v3031 = vunpack.c.l.b16 %v2983
        %v3032 = vunpack.c.h.b16 %v2983
        %v3033 = vunpack.c.l.b16 %v2984
        %v3034 = vunpack.c.h.b16 %v2984
        %v3035 = vunpack.c.l.b16 %v2985
        %v3036 = vunpack.c.h.b16 %v2985
        %v3037 = vunpack.c.l.b16 %v2986
        %v3038 = vunpack.c.h.b16 %v2986
        %v3039 = vunpack.c.l.b16 %v2987
        %v3040 = vunpack.c.h.b16 %v2987
        %v3041 = vunpack.c.l.b16 %v2988
        %v3042 = vunpack.c.h.b16 %v2988
        %v3043 = vunpack.c.l.b16 %v2989
        %v3044 = vunpack.c.h.b16 %v2989
        %v3045 = vunpack.c.l.b16 %v2990
        %v3046 = vunpack.c.h.b16 %v2990
        %v3047 = vpack.c.b16 %v3017, %v3015
        %v3048 = vpack.c.b16 %v3018, %v3016
        %v3049 = vpack.c.b16 %v3021, %v3019
        %v3050 = vpack.c.b16 %v3022, %v3020
        %v3051 = vpack.c.b16 %v3025, %v3023
        %v3052 = vpack.c.b16 %v3026, %v3024
        %v3053 = vpack.c.b16 %v3029, %v3027
        %v3054 = vpack.c.b16 %v3030, %v3028
        %v3055 = vpack.c.b16 %v3033, %v3031
        %v3056 = vpack.c.b16 %v3034, %v3032
        %v3057 = vpack.c.b16 %v3037, %v3035
        %v3058 = vpack.c.b16 %v3038, %v3036
        %v3059 = vpack.c.b16 %v3041, %v3039
        %v3060 = vpack.c.b16 %v3042, %v3040
        %v3061 = vpack.c.b16 %v3045, %v3043
        %v3062 = vpack.c.b16 %v3046, %v3044
        %3079 = vmatpush.bf16.msra.mxu0 %v3061
        %3080 = vmatpush.bf16.msra.mxu0 %v3059
        %3081 = vmatpush.bf16.msra.mxu0 %v3057
        %3082 = vmatpush.bf16.msra.mxu0 %v3055
        %3083 = vmatpush.bf16.msra.mxu0 %v3053
        %3084 = vmatpush.bf16.msra.mxu0 %v3051
        %3085 = vmatpush.bf16.msra.mxu0 %v3049
        %3086 = vmatpush.bf16.msra.mxu0 %v3047
        %3087 = vmatmul.bf16.gmra.mxu0 %v2993
        %v3088 = vpop.f32.mrf.mxu0
        %v3089 = vadd.f32 %v2995, %v3088
        %v3090 = vpop.f32.mrf.mxu0
        %3091 = vdwg.mxu0
        %3092 = vmatpush.bf16.msra.mxu0 %v3062
        %3093 = vmatpush.bf16.msra.mxu0 %v3060
        %3094 = vmatpush.bf16.msra.mxu0 %v3058
        %3095 = vmatpush.bf16.msra.mxu0 %v3056
        %3096 = vmatpush.bf16.msra.mxu0 %v3054
        %3097 = vmatpush.bf16.msra.mxu0 %v3052
        %3098 = vmatpush.bf16.msra.mxu0 %v3050
        %3099 = vmatpush.bf16.msra.mxu0 %v3048
        %3100 = vmatmul.bf16.gmra.mxu0 %v2993
        %v3101 = vpop.f32.mrf.mxu0
        %v3102 = vadd.f32 %v2996, %v3101
        %v3103 = vpop.f32.mrf.mxu0
        %3104 = vdwg.mxu0
        %v3105 = vmax.f32 %v3089, 0.0
        %v3106 = vmax.f32 %v3102, 0.0
        %s3107 = scalar_lea.vmem %s9, 128
        %v3108 = vld [vmem:[%s3107] sm:$0xf]
        %v3109 = vld [vmem:[%s3107 + $0x4] sm:$0xf]
        %v3110 = vld [vmem:[%s3107 + $0x8] sm:$0xf]
        %v3111 = vld [vmem:[%s3107 + $0xc] sm:$0xf]
        %v3112 = vld [vmem:[%s3107 + $0x10] sm:$0xf]
        %v3113 = vld [vmem:[%s3107 + $0x14] sm:$0xf]
        %v3114 = vld [vmem:[%s3107 + $0x18] sm:$0xf]
        %v3115 = vld [vmem:[%s3107 + $0x1c] sm:$0xf]
        %v3116 = vld [vmem:[%s3107 + $0x20] sm:$0xf]
        %v3117 = vld [vmem:[%s3107 + $0x24] sm:$0xf]
        %v3118 = vld [vmem:[%s3107 + $0x28] sm:$0xf]
        %v3119 = vld [vmem:[%s3107 + $0x2c] sm:$0xf]
        %v3120 = vld [vmem:[%s3107 + $0x30] sm:$0xf]
        %v3121 = vld [vmem:[%s3107 + $0x34] sm:$0xf]
        %v3122 = vld [vmem:[%s3107 + $0x38] sm:$0xf]
        %v3123 = vld [vmem:[%s3107 + $0x3c] sm:$0xf]
        %v3124 = vld [vmem:[%s3107 + $0x40] sm:$0xf]
        %v3125 = vld [vmem:[%s3107 + $0x44] sm:$0xf]
        %v3126 = vld [vmem:[%s3107 + $0x48] sm:$0xf]
        %v3127 = vld [vmem:[%s3107 + $0x4c] sm:$0xf]
        %v3128 = vld [vmem:[%s3107 + $0x50] sm:$0xf]
        %v3129 = vld [vmem:[%s3107 + $0x54] sm:$0xf]
        %v3130 = vld [vmem:[%s3107 + $0x58] sm:$0xf]
        %v3131 = vld [vmem:[%s3107 + $0x5c] sm:$0xf]
        %v3132 = vld [vmem:[%s3107 + $0x60] sm:$0xf]
        %v3133 = vld [vmem:[%s3107 + $0x64] sm:$0xf]
        %v3134 = vld [vmem:[%s3107 + $0x68] sm:$0xf]
        %v3135 = vld [vmem:[%s3107 + $0x6c] sm:$0xf]
        %v3136 = vld [vmem:[%s3107 + $0x70] sm:$0xf]
        %v3137 = vld [vmem:[%s3107 + $0x74] sm:$0xf]
        %v3138 = vld [vmem:[%s3107 + $0x78] sm:$0xf]
        %v3139 = vld [vmem:[%s3107 + $0x7c] sm:$0xf]
        %s3140 = scalar_lea.vmem [#allocation10], 1
        %v3141 = vld [vmem:[%s3140] sm:$0x1]
        %v3142 = vpack.c.bf16 %v3105, %v3105
        %v3143 = vpack.c.bf16 %v3106, %v3106
        %v3145 = vperm.slane %v3141, 0
        %v3179 = vunpack.c.l.b16 %v3108
        %v3180 = vunpack.c.l.b16 %v3109
        %v3181 = vunpack.c.l.b16 %v3110
        %v3182 = vunpack.c.l.b16 %v3111
        %v3183 = vunpack.c.l.b16 %v3112
        %v3184 = vunpack.c.l.b16 %v3113
        %v3185 = vunpack.c.l.b16 %v3114
        %v3186 = vunpack.c.l.b16 %v3115
        %v3187 = vunpack.c.l.b16 %v3116
        %v3188 = vunpack.c.l.b16 %v3117
        %v3189 = vunpack.c.l.b16 %v3118
        %v3190 = vunpack.c.l.b16 %v3119
        %v3191 = vunpack.c.l.b16 %v3120
        %v3192 = vunpack.c.l.b16 %v3121
        %v3193 = vunpack.c.l.b16 %v3122
        %v3194 = vunpack.c.l.b16 %v3123
        %v3195 = vunpack.c.l.b16 %v3124
        %v3196 = vunpack.c.l.b16 %v3125
        %v3197 = vunpack.c.l.b16 %v3126
        %v3198 = vunpack.c.l.b16 %v3127
        %v3199 = vunpack.c.l.b16 %v3128
        %v3200 = vunpack.c.l.b16 %v3129
        %v3201 = vunpack.c.l.b16 %v3130
        %v3202 = vunpack.c.l.b16 %v3131
        %v3203 = vunpack.c.l.b16 %v3132
        %v3204 = vunpack.c.l.b16 %v3133
        %v3205 = vunpack.c.l.b16 %v3134
        %v3206 = vunpack.c.l.b16 %v3135
        %v3207 = vunpack.c.l.b16 %v3136
        %v3208 = vunpack.c.l.b16 %v3137
        %v3209 = vunpack.c.l.b16 %v3138
        %v3210 = vunpack.c.l.b16 %v3139
        %v3211 = vpack.c.b16 %v3180, %v3179
        %v3212 = vpack.c.b16 %v3182, %v3181
        %v3213 = vpack.c.b16 %v3184, %v3183
        %v3214 = vpack.c.b16 %v3186, %v3185
        %v3215 = vpack.c.b16 %v3188, %v3187
        %v3216 = vpack.c.b16 %v3190, %v3189
        %v3217 = vpack.c.b16 %v3192, %v3191
        %v3218 = vpack.c.b16 %v3194, %v3193
        %v3219 = vpack.c.b16 %v3196, %v3195
        %v3220 = vpack.c.b16 %v3198, %v3197
        %v3221 = vpack.c.b16 %v3200, %v3199
        %v3222 = vpack.c.b16 %v3202, %v3201
        %v3223 = vpack.c.b16 %v3204, %v3203
        %v3224 = vpack.c.b16 %v3206, %v3205
        %v3225 = vpack.c.b16 %v3208, %v3207
        %v3226 = vpack.c.b16 %v3210, %v3209
        %3243 = vmatpush.bf16.msra.mxu0 %v3218
        %3244 = vmatpush.bf16.msra.mxu0 %v3217
        %3245 = vmatpush.bf16.msra.mxu0 %v3216
        %3246 = vmatpush.bf16.msra.mxu0 %v3215
        %3247 = vmatpush.bf16.msra.mxu0 %v3214
        %3248 = vmatpush.bf16.msra.mxu0 %v3213
        %3249 = vmatpush.bf16.msra.mxu0 %v3212
        %3250 = vmatpush.bf16.msra.mxu0 %v3211
        %3251 = vmatmul.bf16.gmra.mxu0 %v3142
        %v3252 = vpop.f32.mrf.mxu0
        %v3253 = vadd.f32 %v3145, %v3252
        %v3254 = vpop.f32.mrf.mxu0
        %3255 = vdwg.mxu0
        %3256 = vmatpush.bf16.msra.mxu0 %v3226
        %3257 = vmatpush.bf16.msra.mxu0 %v3225
        %3258 = vmatpush.bf16.msra.mxu0 %v3224
        %3259 = vmatpush.bf16.msra.mxu0 %v3223
        %3260 = vmatpush.bf16.msra.mxu0 %v3222
        %3261 = vmatpush.bf16.msra.mxu0 %v3221
        %3262 = vmatpush.bf16.msra.mxu0 %v3220
        %3263 = vmatpush.bf16.msra.mxu0 %v3219
        %3264 = vmatmul.bf16.gmra.mxu0 %v3143
        %v3265 = vpop.f32.mrf.mxu0
        %v3266 = vadd.f32 %v3253, %v3265
        %v3267 = vpop.f32.mrf.mxu0
        %3268 = vdwg.mxu0
        %v3269 = vadd.f32 %v2973, %v3266
        %s3270 = scalar_lea.vmem [#allocation14], 1
        %v3271 = vld [vmem:[%s3270] sm:$0x1]
        %s3272 = scalar_lea.vmem [#allocation16], 1
        %v3273 = vld [vmem:[%s3272] sm:$0x1]
        %3274 = vadd.xlane.f32.xlu0 %v3269
        %v3275 = vpop.xlane.xlu0 %3274
        %v3276 = vmul.f32 %v3275, %v1981
        %v3277 = vsub.f32 %v3269, %v3276
        %v3278 = vmul.f32 %v3277, %v3277
        %3279 = vadd.xlane.f32.xlu0 %v3278
        %v3280 = vpop.xlane.xlu0 %3279
        %v3281 = vmul.f32 %v3280, %v1981
        %v3282 = vadd.f32 %v3281, 1e-05
        %v3283 = vrsqrt.pop %v3282
        %v3284 = vmul.f32 %v3283, %v3282
        %v3285 = vmul.f32 %v3284, %v3283
        %v3286 = vmul.f32 0.5, %v3285
        %v3287 = vsub.f32 1.5, %v3286
        %v3288 = vmul.f32 %v3283, %v3287
        %vm3289 = vweird.f32 %v3282
        %vm3290 = vweird.f32 %v3283
        %vm3291 = vmor %vm3289, %vm3290
        %v3292 = vsel %vm3291, %v3283, %v3288
        %v3293 = vmul.f32 %v3277, %v3292
        %v3295 = vperm.slane %v3271, 0
        %v3297 = vmul.f32 %v3293, %v3295
        %v3299 = vperm.slane %v3273, 0
        %v3301 = vadd.f32 %v3297, %v3299
        %s3302 = scalar_lea.vmem %s3, 384
        %v3303 = vld [vmem:[%s3302] sm:$0xff]
        %v3304 = vld [vmem:[%s3302 + $0x8] sm:$0xf]
        %v3305 = vld [vmem:[%s3302 + $0xc] sm:$0xff]
        %v3306 = vld [vmem:[%s3302 + $0x14] sm:$0xf]
        %v3307 = vld [vmem:[%s3302 + $0x18] sm:$0xff]
        %v3308 = vld [vmem:[%s3302 + $0x20] sm:$0xf]
        %v3309 = vld [vmem:[%s3302 + $0x24] sm:$0xff]
        %v3310 = vld [vmem:[%s3302 + $0x2c] sm:$0xf]
        %v3311 = vld [vmem:[%s3302 + $0x30] sm:$0xff]
        %v3312 = vld [vmem:[%s3302 + $0x38] sm:$0xf]
        %v3313 = vld [vmem:[%s3302 + $0x3c] sm:$0xff]
        %v3314 = vld [vmem:[%s3302 + $0x44] sm:$0xf]
        %v3315 = vld [vmem:[%s3302 + $0x48] sm:$0xff]
        %v3316 = vld [vmem:[%s3302 + $0x50] sm:$0xf]
        %v3317 = vld [vmem:[%s3302 + $0x54] sm:$0xff]
        %v3318 = vld [vmem:[%s3302 + $0x5c] sm:$0xf]
        %v3319 = vld [vmem:[%s3302 + $0x60] sm:$0xff]
        %v3320 = vld [vmem:[%s3302 + $0x68] sm:$0xf]
        %v3321 = vld [vmem:[%s3302 + $0x6c] sm:$0xff]
        %v3322 = vld [vmem:[%s3302 + $0x74] sm:$0xf]
        %v3323 = vld [vmem:[%s3302 + $0x78] sm:$0xff]
        %v3324 = vld [vmem:[%s3302 + $0x80] sm:$0xf]
        %v3325 = vld [vmem:[%s3302 + $0x84] sm:$0xff]
        %v3326 = vld [vmem:[%s3302 + $0x8c] sm:$0xf]
        %v3327 = vld [vmem:[%s3302 + $0x90] sm:$0xff]
        %v3328 = vld [vmem:[%s3302 + $0x98] sm:$0xf]
        %v3329 = vld [vmem:[%s3302 + $0x9c] sm:$0xff]
        %v3330 = vld [vmem:[%s3302 + $0xa4] sm:$0xf]
        %v3331 = vld [vmem:[%s3302 + $0xa8] sm:$0xff]
        %v3332 = vld [vmem:[%s3302 + $0xb0] sm:$0xf]
        %v3333 = vld [vmem:[%s3302 + $0xb4] sm:$0xff]
        %v3334 = vld [vmem:[%s3302 + $0xbc] sm:$0xf]
        %s3335 = scalar_lea.vmem %s5, 128
        %v3336 = vld [vmem:[%s3335] sm:$0xf]
        %v3337 = vld [vmem:[%s3335 + $0x4] sm:$0xf]
        %v3338 = vld [vmem:[%s3335 + $0x8] sm:$0xf]
        %v3339 = vld [vmem:[%s3335 + $0xc] sm:$0xf]
        %v3340 = vld [vmem:[%s3335 + $0x10] sm:$0xf]
        %v3341 = vld [vmem:[%s3335 + $0x14] sm:$0xf]
        %v3342 = vld [vmem:[%s3335 + $0x18] sm:$0xf]
        %v3343 = vld [vmem:[%s3335 + $0x1c] sm:$0xf]
        %v3344 = vld [vmem:[%s3335 + $0x20] sm:$0xf]
        %v3345 = vld [vmem:[%s3335 + $0x24] sm:$0xf]
        %v3346 = vld [vmem:[%s3335 + $0x28] sm:$0xf]
        %v3347 = vld [vmem:[%s3335 + $0x2c] sm:$0xf]
        %v3348 = vld [vmem:[%s3335 + $0x30] sm:$0xf]
        %v3349 = vld [vmem:[%s3335 + $0x34] sm:$0xf]
        %v3350 = vld [vmem:[%s3335 + $0x38] sm:$0xf]
        %v3351 = vld [vmem:[%s3335 + $0x3c] sm:$0xf]
        %s3352 = scalar_lea.vmem [#allocation5], 6
        %v3353 = vld [vmem:[%s3352] sm:$0x7]
        %v3354 = vpack.c.bf16 %v3301, %v3301
        %v3356 = vperm.slane %v3353, 0
        %v3357 = vperm.slane %v3353, 1
        %v3358 = vperm.slane %v3353, 2
        %v3394 = vunpack.c.l.b16 %v3303
        %v3395 = vunpack.c.h.b16 %v3303
        %v3396 = vunpack.c.l.b16 %v3304
        %v3397 = vunpack.c.l.b16 %v3305
        %v3398 = vunpack.c.h.b16 %v3305
        %v3399 = vunpack.c.l.b16 %v3306
        %v3400 = vunpack.c.l.b16 %v3307
        %v3401 = vunpack.c.h.b16 %v3307
        %v3402 = vunpack.c.l.b16 %v3308
        %v3403 = vunpack.c.l.b16 %v3309
        %v3404 = vunpack.c.h.b16 %v3309
        %v3405 = vunpack.c.l.b16 %v3310
        %v3406 = vunpack.c.l.b16 %v3311
        %v3407 = vunpack.c.h.b16 %v3311
        %v3408 = vunpack.c.l.b16 %v3312
        %v3409 = vunpack.c.l.b16 %v3313
        %v3410 = vunpack.c.h.b16 %v3313
        %v3411 = vunpack.c.l.b16 %v3314
        %v3412 = vunpack.c.l.b16 %v3315
        %v3413 = vunpack.c.h.b16 %v3315
        %v3414 = vunpack.c.l.b16 %v3316
        %v3415 = vunpack.c.l.b16 %v3317
        %v3416 = vunpack.c.h.b16 %v3317
        %v3417 = vunpack.c.l.b16 %v3318
        %v3418 = vunpack.c.l.b16 %v3319
        %v3419 = vunpack.c.h.b16 %v3319
        %v3420 = vunpack.c.l.b16 %v3320
        %v3421 = vunpack.c.l.b16 %v3321
        %v3422 = vunpack.c.h.b16 %v3321
        %v3423 = vunpack.c.l.b16 %v3322
        %v3424 = vunpack.c.l.b16 %v3323
        %v3425 = vunpack.c.h.b16 %v3323
        %v3426 = vunpack.c.l.b16 %v3324
        %v3427 = vunpack.c.l.b16 %v3325
        %v3428 = vunpack.c.h.b16 %v3325
        %v3429 = vunpack.c.l.b16 %v3326
        %v3430 = vunpack.c.l.b16 %v3327
        %v3431 = vunpack.c.h.b16 %v3327
        %v3432 = vunpack.c.l.b16 %v3328
        %v3433 = vunpack.c.l.b16 %v3329
        %v3434 = vunpack.c.h.b16 %v3329
        %v3435 = vunpack.c.l.b16 %v3330
        %v3436 = vunpack.c.l.b16 %v3331
        %v3437 = vunpack.c.h.b16 %v3331
        %v3438 = vunpack.c.l.b16 %v3332
        %v3439 = vunpack.c.l.b16 %v3333
        %v3440 = vunpack.c.h.b16 %v3333
        %v3441 = vunpack.c.l.b16 %v3334
        %v3442 = vpack.c.b16 %v3397, %v3394
        %v3443 = vpack.c.b16 %v3398, %v3395
        %v3444 = vpack.c.b16 %v3399, %v3396
        %v3445 = vpack.c.b16 %v3403, %v3400
        %v3446 = vpack.c.b16 %v3404, %v3401
        %v3447 = vpack.c.b16 %v3405, %v3402
        %v3448 = vpack.c.b16 %v3409, %v3406
        %v3449 = vpack.c.b16 %v3410, %v3407
        %v3450 = vpack.c.b16 %v3411, %v3408
        %v3451 = vpack.c.b16 %v3415, %v3412
        %v3452 = vpack.c.b16 %v3416, %v3413
        %v3453 = vpack.c.b16 %v3417, %v3414
        %v3454 = vpack.c.b16 %v3421, %v3418
        %v3455 = vpack.c.b16 %v3422, %v3419
        %v3456 = vpack.c.b16 %v3423, %v3420
        %v3457 = vpack.c.b16 %v3427, %v3424
        %v3458 = vpack.c.b16 %v3428, %v3425
        %v3459 = vpack.c.b16 %v3429, %v3426
        %v3460 = vpack.c.b16 %v3433, %v3430
        %v3461 = vpack.c.b16 %v3434, %v3431
        %v3462 = vpack.c.b16 %v3435, %v3432
        %v3463 = vpack.c.b16 %v3439, %v3436
        %v3464 = vpack.c.b16 %v3440, %v3437
        %v3465 = vpack.c.b16 %v3441, %v3438
        %3490 = vmatpush.bf16.msra.mxu0 %v3463
        %3491 = vmatpush.bf16.msra.mxu0 %v3460
        %3492 = vmatpush.bf16.msra.mxu0 %v3457
        %3493 = vmatpush.bf16.msra.mxu0 %v3454
        %3494 = vmatpush.bf16.msra.mxu0 %v3451
        %3495 = vmatpush.bf16.msra.mxu0 %v3448
        %3496 = vmatpush.bf16.msra.mxu0 %v3445
        %3497 = vmatpush.bf16.msra.mxu0 %v3442
        %3498 = vmatmul.bf16.gmra.mxu0 %v3354
        %v3499 = vpop.f32.mrf.mxu0
        %v3500 = vadd.f32 %v3356, %v3499
        %v3501 = vpop.f32.mrf.mxu0
        %3502 = vdwg.mxu0
        %3503 = vmatpush.bf16.msra.mxu0 %v3464
        %3504 = vmatpush.bf16.msra.mxu0 %v3461
        %3505 = vmatpush.bf16.msra.mxu0 %v3458
        %3506 = vmatpush.bf16.msra.mxu0 %v3455
        %3507 = vmatpush.bf16.msra.mxu0 %v3452
        %3508 = vmatpush.bf16.msra.mxu0 %v3449
        %3509 = vmatpush.bf16.msra.mxu0 %v3446
        %3510 = vmatpush.bf16.msra.mxu0 %v3443
        %3511 = vmatmul.bf16.gmra.mxu0 %v3354
        %v3512 = vpop.f32.mrf.mxu0
        %v3513 = vadd.f32 %v3357, %v3512
        %v3514 = vpop.f32.mrf.mxu0
        %3515 = vdwg.mxu0
        %3516 = vmatpush.bf16.msra.mxu0 %v3465
        %3517 = vmatpush.bf16.msra.mxu0 %v3462
        %3518 = vmatpush.bf16.msra.mxu0 %v3459
        %3519 = vmatpush.bf16.msra.mxu0 %v3456
        %3520 = vmatpush.bf16.msra.mxu0 %v3453
        %3521 = vmatpush.bf16.msra.mxu0 %v3450
        %3522 = vmatpush.bf16.msra.mxu0 %v3447
        %3523 = vmatpush.bf16.msra.mxu0 %v3444
        %3524 = vmatmul.bf16.gmra.mxu0 %v3354
        %v3525 = vpop.f32.mrf.mxu0
        %v3526 = vadd.f32 %v3358, %v3525
        %v3527 = vpop.f32.mrf.mxu0
        %3528 = vdwg.mxu0
        %v3530 = vsel %vm1585, %v3500, 0
        %v3533 = vsel %vm1585, %v3513, 0
        %3535 = vmatpush.xpose.msra.mxu0 0.0
        %3536 = vmatpush.xpose.msra.mxu0 0.0
        %3537 = vmatpush.xpose.msra.mxu0 0.0
        %3538 = vmatpush.xpose.msra.mxu0 0.0
        %3539 = vmatpush.xpose.msra.mxu0 0.0
        %3540 = vmatpush.xpose.msra.mxu0 0.0
        %3541 = vmatpush.xpose.msra.mxu0 0.0
        %3542 = vmatpush.xpose.msra.mxu0 0.0
        %3543 = vmatpush.xpose.msra.mxu0 0.0
        %3544 = vmatpush.xpose.msra.mxu0 0.0
        %3545 = vmatpush.xpose.msra.mxu0 0.0
        %3546 = vmatpush.xpose.msra.mxu0 0.0
        %3547 = vmatpush.xpose.msra.mxu0 0.0
        %3548 = vmatpush.xpose.msra.mxu0 0.0
        %3549 = vmatpush.xpose.msra.mxu0 0.0
        %3550 = vmatpush.xpose.msra.mxu0 %v3533
        %3551 = vmatmul.f32.gmra.mxu0 %v3530
        %v3552 = vpop.f32.mrf.mxu0
        %v3553 = vadd.f32 0.0, %v3552
        %3554 = vdwg.mxu0
        %v3555 = vmul.f32 %v3553, 0.17677669
        %v3556 = vsel %vm1613, %v3555, -inf
        %3557 = vmax.xlane.f32.xlu0 %v3556
        %v3558 = vpop.xlane.xlu0 %3557
        %v3559 = vsub.f32 %v3555, %v3558
        %v3560 = vmul.f32 %v3559, 1.442695
        %v3561 = vpow.pop %v3560
        %v3562 = vsel %vm1613, %v3561, 0.0
        %3563 = vadd.xlane.f32.xlu0 %v3562
        %v3564 = vpop.xlane.xlu0 %3563
        %v3565 = vrcp.pop %v3564
        %v3566 = vmul.f32 %v3561, %v3565
        %v3568 = vsel %vm1613, %v3566, 0
        %3570 = vmatpush.msra.mxu0 0.0
        %3571 = vmatpush.msra.mxu0 0.0
        %3572 = vmatpush.msra.mxu0 0.0
        %3573 = vmatpush.msra.mxu0 0.0
        %3574 = vmatpush.msra.mxu0 0.0
        %3575 = vmatpush.msra.mxu0 0.0
        %3576 = vmatpush.msra.mxu0 0.0
        %3577 = vmatpush.msra.mxu0 0.0
        %3578 = vmatpush.msra.mxu0 0.0
        %3579 = vmatpush.msra.mxu0 0.0
        %3580 = vmatpush.msra.mxu0 0.0
        %3581 = vmatpush.msra.mxu0 0.0
        %3582 = vmatpush.msra.mxu0 0.0
        %3583 = vmatpush.msra.mxu0 0.0
        %3584 = vmatpush.msra.mxu0 0.0
        %3585 = vmatpush.msra.mxu0 %v3526
        %3586 = vmatmul.f32.gmra.mxu0 %v3568
        %v3587 = vpop.f32.mrf.mxu0
        %v3588 = vadd.f32 0.0, %v3587
        %3589 = vdwg.mxu0
        %v3590 = vpack.c.bf16 %v3588, %v3588
        %3591 = vrot.lane.b32.xlu0 %v3500, 96
        %v3592 = vpop.permute.xlu0 %3591
        %3593 = vrot.lane.b32.xlu0 %v3513, 96
        %v3594 = vpop.permute.xlu0 %3593
        %v3595 = vsel %vm1585, %v3592, 0
        %v3597 = vsel %vm1585, %v3594, 0
        %3599 = vmatpush.xpose.msra.mxu0 0.0
        %3600 = vmatpush.xpose.msra.mxu0 0.0
        %3601 = vmatpush.xpose.msra.mxu0 0.0
        %3602 = vmatpush.xpose.msra.mxu0 0.0
        %3603 = vmatpush.xpose.msra.mxu0 0.0
        %3604 = vmatpush.xpose.msra.mxu0 0.0
        %3605 = vmatpush.xpose.msra.mxu0 0.0
        %3606 = vmatpush.xpose.msra.mxu0 0.0
        %3607 = vmatpush.xpose.msra.mxu0 0.0
        %3608 = vmatpush.xpose.msra.mxu0 0.0
        %3609 = vmatpush.xpose.msra.mxu0 0.0
        %3610 = vmatpush.xpose.msra.mxu0 0.0
        %3611 = vmatpush.xpose.msra.mxu0 0.0
        %3612 = vmatpush.xpose.msra.mxu0 0.0
        %3613 = vmatpush.xpose.msra.mxu0 0.0
        %3614 = vmatpush.xpose.msra.mxu0 %v3597
        %3615 = vmatmul.f32.gmra.mxu0 %v3595
        %v3616 = vpop.f32.mrf.mxu0
        %v3617 = vadd.f32 0.0, %v3616
        %3618 = vdwg.mxu0
        %v3619 = vmul.f32 %v3617, 0.17677669
        %v3620 = vsel %vm1613, %v3619, -inf
        %3621 = vmax.xlane.f32.xlu0 %v3620
        %v3622 = vpop.xlane.xlu0 %3621
        %v3623 = vsub.f32 %v3619, %v3622
        %v3624 = vmul.f32 %v3623, 1.442695
        %v3625 = vpow.pop %v3624
        %v3626 = vsel %vm1613, %v3625, 0.0
        %3627 = vadd.xlane.f32.xlu0 %v3626
        %v3628 = vpop.xlane.xlu0 %3627
        %v3629 = vrcp.pop %v3628
        %v3630 = vmul.f32 %v3625, %v3629
        %3632 = vrot.lane.b32.xlu0 %v3526, 96
        %v3633 = vpop.permute.xlu0 %3632
        %v3636 = vsel %vm1613, %v3630, 0
        %3638 = vmatpush.msra.mxu0 0.0
        %3639 = vmatpush.msra.mxu0 0.0
        %3640 = vmatpush.msra.mxu0 0.0
        %3641 = vmatpush.msra.mxu0 0.0
        %3642 = vmatpush.msra.mxu0 0.0
        %3643 = vmatpush.msra.mxu0 0.0
        %3644 = vmatpush.msra.mxu0 0.0
        %3645 = vmatpush.msra.mxu0 0.0
        %3646 = vmatpush.msra.mxu0 0.0
        %3647 = vmatpush.msra.mxu0 0.0
        %3648 = vmatpush.msra.mxu0 0.0
        %3649 = vmatpush.msra.mxu0 0.0
        %3650 = vmatpush.msra.mxu0 0.0
        %3651 = vmatpush.msra.mxu0 0.0
        %3652 = vmatpush.msra.mxu0 0.0
        %3653 = vmatpush.msra.mxu0 %v3633
        %3654 = vmatmul.f32.gmra.mxu0 %v3636
        %v3655 = vpop.f32.mrf.mxu0
        %v3656 = vadd.f32 0.0, %v3655
        %3657 = vdwg.mxu0
        %v3658 = vpack.c.bf16 %v3656, %v3656
        %v3663 = vunpack.c.l.b16 %v3340
        %v3664 = vunpack.c.l.b16 %v3341
        %v3665 = vunpack.c.l.b16 %v3342
        %v3666 = vunpack.c.l.b16 %v3343
        %v3667 = vpack.c.b16 %v3664, %v3663
        %v3668 = vpack.c.b16 %v3666, %v3665
        %v3672 = vsel %vm1585, %v3658, 0
        %3674 = vmatpush.bf16.msra.mxu0 0
        %3675 = vmatpush.bf16.msra.mxu0 0
        %3676 = vmatpush.bf16.msra.mxu0 0
        %3677 = vmatpush.bf16.msra.mxu0 0
        %3678 = vmatpush.bf16.msra.mxu0 0
        %3679 = vmatpush.bf16.msra.mxu0 0
        %3680 = vmatpush.bf16.msra.mxu0 %v3668
        %3681 = vmatpush.bf16.msra.mxu0 %v3667
        %3682 = vmatmul.bf16.gmra.mxu0 %v3672
        %v3683 = vpop.f32.mrf.mxu0
        %v3684 = vadd.f32 0.0, %v3683
        %v3685 = vpop.f32.mrf.mxu0
        %3686 = vdwg.mxu0
        %v3691 = vunpack.c.l.b16 %v3336
        %v3692 = vunpack.c.l.b16 %v3337
        %v3693 = vunpack.c.l.b16 %v3338
        %v3694 = vunpack.c.l.b16 %v3339
        %v3695 = vpack.c.b16 %v3692, %v3691
        %v3696 = vpack.c.b16 %v3694, %v3693
        %v3700 = vsel %vm1585, %v3590, 0
        %3702 = vmatpush.bf16.msra.mxu0 0
        %3703 = vmatpush.bf16.msra.mxu0 0
        %3704 = vmatpush.bf16.msra.mxu0 0
        %3705 = vmatpush.bf16.msra.mxu0 0
        %3706 = vmatpush.bf16.msra.mxu0 0
        %3707 = vmatpush.bf16.msra.mxu0 0
        %3708 = vmatpush.bf16.msra.mxu0 %v3696
        %3709 = vmatpush.bf16.msra.mxu0 %v3695
        %3710 = vmatmul.bf16.gmra.mxu0 %v3700
        %v3711 = vpop.f32.mrf.mxu0
        %v3712 = vadd.f32 %v3684, %v3711
        %v3713 = vpop.f32.mrf.mxu0
        %3714 = vdwg.mxu0
        %3715 = vrot.lane.b32.xlu0 %v3500, 64
        %v3716 = vpop.permute.xlu0 %3715
        %3717 = vrot.lane.b32.xlu0 %v3513, 64
        %v3718 = vpop.permute.xlu0 %3717
        %v3719 = vsel %vm1585, %v3716, 0
        %v3721 = vsel %vm1585, %v3718, 0
        %3723 = vmatpush.xpose.msra.mxu0 0.0
        %3724 = vmatpush.xpose.msra.mxu0 0.0
        %3725 = vmatpush.xpose.msra.mxu0 0.0
        %3726 = vmatpush.xpose.msra.mxu0 0.0
        %3727 = vmatpush.xpose.msra.mxu0 0.0
        %3728 = vmatpush.xpose.msra.mxu0 0.0
        %3729 = vmatpush.xpose.msra.mxu0 0.0
        %3730 = vmatpush.xpose.msra.mxu0 0.0
        %3731 = vmatpush.xpose.msra.mxu0 0.0
        %3732 = vmatpush.xpose.msra.mxu0 0.0
        %3733 = vmatpush.xpose.msra.mxu0 0.0
        %3734 = vmatpush.xpose.msra.mxu0 0.0
        %3735 = vmatpush.xpose.msra.mxu0 0.0
        %3736 = vmatpush.xpose.msra.mxu0 0.0
        %3737 = vmatpush.xpose.msra.mxu0 0.0
        %3738 = vmatpush.xpose.msra.mxu0 %v3721
        %3739 = vmatmul.f32.gmra.mxu0 %v3719
        %v3740 = vpop.f32.mrf.mxu0
        %v3741 = vadd.f32 0.0, %v3740
        %3742 = vdwg.mxu0
        %v3743 = vmul.f32 %v3741, 0.17677669
        %v3744 = vsel %vm1613, %v3743, -inf
        %3745 = vmax.xlane.f32.xlu0 %v3744
        %v3746 = vpop.xlane.xlu0 %3745
        %v3747 = vsub.f32 %v3743, %v3746
        %v3748 = vmul.f32 %v3747, 1.442695
        %v3749 = vpow.pop %v3748
        %v3750 = vsel %vm1613, %v3749, 0.0
        %3751 = vadd.xlane.f32.xlu0 %v3750
        %v3752 = vpop.xlane.xlu0 %3751
        %v3753 = vrcp.pop %v3752
        %v3754 = vmul.f32 %v3749, %v3753
        %3755 = vrot.lane.b32.xlu0 %v3526, 64
        %v3756 = vpop.permute.xlu0 %3755
        %v3759 = vsel %vm1613, %v3754, 0
        %3761 = vmatpush.msra.mxu0 0.0
        %3762 = vmatpush.msra.mxu0 0.0
        %3763 = vmatpush.msra.mxu0 0.0
        %3764 = vmatpush.msra.mxu0 0.0
        %3765 = vmatpush.msra.mxu0 0.0
        %3766 = vmatpush.msra.mxu0 0.0
        %3767 = vmatpush.msra.mxu0 0.0
        %3768 = vmatpush.msra.mxu0 0.0
        %3769 = vmatpush.msra.mxu0 0.0
        %3770 = vmatpush.msra.mxu0 0.0
        %3771 = vmatpush.msra.mxu0 0.0
        %3772 = vmatpush.msra.mxu0 0.0
        %3773 = vmatpush.msra.mxu0 0.0
        %3774 = vmatpush.msra.mxu0 0.0
        %3775 = vmatpush.msra.mxu0 0.0
        %3776 = vmatpush.msra.mxu0 %v3756
        %3777 = vmatmul.f32.gmra.mxu0 %v3759
        %v3778 = vpop.f32.mrf.mxu0
        %v3779 = vadd.f32 0.0, %v3778
        %3780 = vdwg.mxu0
        %v3781 = vpack.c.bf16 %v3779, %v3779
        %v3786 = vunpack.c.l.b16 %v3344
        %v3787 = vunpack.c.l.b16 %v3345
        %v3788 = vunpack.c.l.b16 %v3346
        %v3789 = vunpack.c.l.b16 %v3347
        %v3790 = vpack.c.b16 %v3787, %v3786
        %v3791 = vpack.c.b16 %v3789, %v3788
        %v3795 = vsel %vm1585, %v3781, 0
        %3797 = vmatpush.bf16.msra.mxu0 0
        %3798 = vmatpush.bf16.msra.mxu0 0
        %3799 = vmatpush.bf16.msra.mxu0 0
        %3800 = vmatpush.bf16.msra.mxu0 0
        %3801 = vmatpush.bf16.msra.mxu0 0
        %3802 = vmatpush.bf16.msra.mxu0 0
        %3803 = vmatpush.bf16.msra.mxu0 %v3791
        %3804 = vmatpush.bf16.msra.mxu0 %v3790
        %3805 = vmatmul.bf16.gmra.mxu0 %v3795
        %v3806 = vpop.f32.mrf.mxu0
        %v3807 = vadd.f32 0.0, %v3806
        %v3808 = vpop.f32.mrf.mxu0
        %3809 = vdwg.mxu0
        %v3810 = vadd.f32 %v3712, %v3807
        %3811 = vrot.lane.b32.xlu0 %v3500, 32
        %v3812 = vpop.permute.xlu0 %3811
        %3813 = vrot.lane.b32.xlu0 %v3513, 32
        %v3814 = vpop.permute.xlu0 %3813
        %v3815 = vsel %vm1585, %v3812, 0
        %v3817 = vsel %vm1585, %v3814, 0
        %3819 = vmatpush.xpose.msra.mxu0 0.0
        %3820 = vmatpush.xpose.msra.mxu0 0.0
        %3821 = vmatpush.xpose.msra.mxu0 0.0
        %3822 = vmatpush.xpose.msra.mxu0 0.0
        %3823 = vmatpush.xpose.msra.mxu0 0.0
        %3824 = vmatpush.xpose.msra.mxu0 0.0
        %3825 = vmatpush.xpose.msra.mxu0 0.0
        %3826 = vmatpush.xpose.msra.mxu0 0.0
        %3827 = vmatpush.xpose.msra.mxu0 0.0
        %3828 = vmatpush.xpose.msra.mxu0 0.0
        %3829 = vmatpush.xpose.msra.mxu0 0.0
        %3830 = vmatpush.xpose.msra.mxu0 0.0
        %3831 = vmatpush.xpose.msra.mxu0 0.0
        %3832 = vmatpush.xpose.msra.mxu0 0.0
        %3833 = vmatpush.xpose.msra.mxu0 0.0
        %3834 = vmatpush.xpose.msra.mxu0 %v3817
        %3835 = vmatmul.f32.gmra.mxu0 %v3815
        %v3836 = vpop.f32.mrf.mxu0
        %v3837 = vadd.f32 0.0, %v3836
        %3838 = vdwg.mxu0
        %v3839 = vmul.f32 %v3837, 0.17677669
        %v3840 = vsel %vm1613, %v3839, -inf
        %3841 = vmax.xlane.f32.xlu0 %v3840
        %v3842 = vpop.xlane.xlu0 %3841
        %v3843 = vsub.f32 %v3839, %v3842
        %v3844 = vmul.f32 %v3843, 1.442695
        %v3845 = vpow.pop %v3844
        %v3846 = vsel %vm1613, %v3845, 0.0
        %3847 = vadd.xlane.f32.xlu0 %v3846
        %v3848 = vpop.xlane.xlu0 %3847
        %v3849 = vrcp.pop %v3848
        %v3850 = vmul.f32 %v3845, %v3849
        %3851 = vrot.lane.b32.xlu0 %v3526, 32
        %v3852 = vpop.permute.xlu0 %3851
        %v3855 = vsel %vm1613, %v3850, 0
        %3857 = vmatpush.msra.mxu0 0.0
        %3858 = vmatpush.msra.mxu0 0.0
        %3859 = vmatpush.msra.mxu0 0.0
        %3860 = vmatpush.msra.mxu0 0.0
        %3861 = vmatpush.msra.mxu0 0.0
        %3862 = vmatpush.msra.mxu0 0.0
        %3863 = vmatpush.msra.mxu0 0.0
        %3864 = vmatpush.msra.mxu0 0.0
        %3865 = vmatpush.msra.mxu0 0.0
        %3866 = vmatpush.msra.mxu0 0.0
        %3867 = vmatpush.msra.mxu0 0.0
        %3868 = vmatpush.msra.mxu0 0.0
        %3869 = vmatpush.msra.mxu0 0.0
        %3870 = vmatpush.msra.mxu0 0.0
        %3871 = vmatpush.msra.mxu0 0.0
        %3872 = vmatpush.msra.mxu0 %v3852
        %3873 = vmatmul.f32.gmra.mxu0 %v3855
        %v3874 = vpop.f32.mrf.mxu0
        %v3875 = vadd.f32 0.0, %v3874
        %3876 = vdwg.mxu0
        %v3877 = vpack.c.bf16 %v3875, %v3875
        %v3882 = vunpack.c.l.b16 %v3348
        %v3883 = vunpack.c.l.b16 %v3349
        %v3884 = vunpack.c.l.b16 %v3350
        %v3885 = vunpack.c.l.b16 %v3351
        %v3886 = vpack.c.b16 %v3883, %v3882
        %v3887 = vpack.c.b16 %v3885, %v3884
        %v3891 = vsel %vm1585, %v3877, 0
        %3893 = vmatpush.bf16.msra.mxu0 0
        %3894 = vmatpush.bf16.msra.mxu0 0
        %3895 = vmatpush.bf16.msra.mxu0 0
        %3896 = vmatpush.bf16.msra.mxu0 0
        %3897 = vmatpush.bf16.msra.mxu0 0
        %3898 = vmatpush.bf16.msra.mxu0 0
        %3899 = vmatpush.bf16.msra.mxu0 %v3887
        %3900 = vmatpush.bf16.msra.mxu0 %v3886
        %3901 = vmatmul.bf16.gmra.mxu0 %v3891
        %v3902 = vpop.f32.mrf.mxu0
        %v3903 = vadd.f32 0.0, %v3902
        %v3904 = vpop.f32.mrf.mxu0
        %3905 = vdwg.mxu0
        %v3906 = vadd.f32 %v3810, %v3903
        %s3907 = scalar_lea.vmem [#allocation7], 2
        %v3908 = vld [vmem:[%s3907] sm:$0x1]
        %v3910 = vperm.slane %v3908, 0
        %v3912 = vadd.f32 %v3906, %v3910
        %v3913 = vadd.f32 %v3301, %v3912
        %s3914 = scalar_lea.vmem [#allocation11], 2
        %v3915 = vld [vmem:[%s3914] sm:$0x1]
        %s3916 = scalar_lea.vmem [#allocation13], 2
        %v3917 = vld [vmem:[%s3916] sm:$0x1]
        %3918 = vadd.xlane.f32.xlu0 %v3913
        %v3919 = vpop.xlane.xlu0 %3918
        %v3920 = vmul.f32 %v3919, %v1981
        %v3921 = vsub.f32 %v3913, %v3920
        %v3922 = vmul.f32 %v3921, %v3921
        %3923 = vadd.xlane.f32.xlu0 %v3922
        %v3924 = vpop.xlane.xlu0 %3923
        %v3925 = vmul.f32 %v3924, %v1981
        %v3926 = vadd.f32 %v3925, 1e-05
        %v3927 = vrsqrt.pop %v3926
        %v3928 = vmul.f32 %v3927, %v3926
        %v3929 = vmul.f32 %v3928, %v3927
        %v3930 = vmul.f32 0.5, %v3929
        %v3931 = vsub.f32 1.5, %v3930
        %v3932 = vmul.f32 %v3927, %v3931
        %vm3933 = vweird.f32 %v3926
        %vm3934 = vweird.f32 %v3927
        %vm3935 = vmor %vm3933, %vm3934
        %v3936 = vsel %vm3935, %v3927, %v3932
        %v3937 = vmul.f32 %v3921, %v3936
        %v3939 = vperm.slane %v3915, 0
        %v3941 = vmul.f32 %v3937, %v3939
        %v3943 = vperm.slane %v3917, 0
        %v3945 = vadd.f32 %v3941, %v3943
        %s3946 = scalar_lea.vmem %s7, 256
        %v3947 = vld [vmem:[%s3946] sm:$0xff]
        %v3948 = vld [vmem:[%s3946 + $0x8] sm:$0xff]
        %v3949 = vld [vmem:[%s3946 + $0x10] sm:$0xff]
        %v3950 = vld [vmem:[%s3946 + $0x18] sm:$0xff]
        %v3951 = vld [vmem:[%s3946 + $0x20] sm:$0xff]
        %v3952 = vld [vmem:[%s3946 + $0x28] sm:$0xff]
        %v3953 = vld [vmem:[%s3946 + $0x30] sm:$0xff]
        %v3954 = vld [vmem:[%s3946 + $0x38] sm:$0xff]
        %v3955 = vld [vmem:[%s3946 + $0x40] sm:$0xff]
        %v3956 = vld [vmem:[%s3946 + $0x48] sm:$0xff]
        %v3957 = vld [vmem:[%s3946 + $0x50] sm:$0xff]
        %v3958 = vld [vmem:[%s3946 + $0x58] sm:$0xff]
        %v3959 = vld [vmem:[%s3946 + $0x60] sm:$0xff]
        %v3960 = vld [vmem:[%s3946 + $0x68] sm:$0xff]
        %v3961 = vld [vmem:[%s3946 + $0x70] sm:$0xff]
        %v3962 = vld [vmem:[%s3946 + $0x78] sm:$0xff]
        %s3963 = scalar_lea.vmem [#allocation8], 4
        %v3964 = vld [vmem:[%s3963] sm:$0x3]
        %v3965 = vpack.c.bf16 %v3945, %v3945
        %v3967 = vperm.slane %v3964, 0
        %v3968 = vperm.slane %v3964, 1
        %v3987 = vunpack.c.l.b16 %v3947
        %v3988 = vunpack.c.h.b16 %v3947
        %v3989 = vunpack.c.l.b16 %v3948
        %v3990 = vunpack.c.h.b16 %v3948
        %v3991 = vunpack.c.l.b16 %v3949
        %v3992 = vunpack.c.h.b16 %v3949
        %v3993 = vunpack.c.l.b16 %v3950
        %v3994 = vunpack.c.h.b16 %v3950
        %v3995 = vunpack.c.l.b16 %v3951
        %v3996 = vunpack.c.h.b16 %v3951
        %v3997 = vunpack.c.l.b16 %v3952
        %v3998 = vunpack.c.h.b16 %v3952
        %v3999 = vunpack.c.l.b16 %v3953
        %v4000 = vunpack.c.h.b16 %v3953
        %v4001 = vunpack.c.l.b16 %v3954
        %v4002 = vunpack.c.h.b16 %v3954
        %v4003 = vunpack.c.l.b16 %v3955
        %v4004 = vunpack.c.h.b16 %v3955
        %v4005 = vunpack.c.l.b16 %v3956
        %v4006 = vunpack.c.h.b16 %v3956
        %v4007 = vunpack.c.l.b16 %v3957
        %v4008 = vunpack.c.h.b16 %v3957
        %v4009 = vunpack.c.l.b16 %v3958
        %v4010 = vunpack.c.h.b16 %v3958
        %v4011 = vunpack.c.l.b16 %v3959
        %v4012 = vunpack.c.h.b16 %v3959
        %v4013 = vunpack.c.l.b16 %v3960
        %v4014 = vunpack.c.h.b16 %v3960
        %v4015 = vunpack.c.l.b16 %v3961
        %v4016 = vunpack.c.h.b16 %v3961
        %v4017 = vunpack.c.l.b16 %v3962
        %v4018 = vunpack.c.h.b16 %v3962
        %v4019 = vpack.c.b16 %v3989, %v3987
        %v4020 = vpack.c.b16 %v3990, %v3988
        %v4021 = vpack.c.b16 %v3993, %v3991
        %v4022 = vpack.c.b16 %v3994, %v3992
        %v4023 = vpack.c.b16 %v3997, %v3995
        %v4024 = vpack.c.b16 %v3998, %v3996
        %v4025 = vpack.c.b16 %v4001, %v3999
        %v4026 = vpack.c.b16 %v4002, %v4000
        %v4027 = vpack.c.b16 %v4005, %v4003
        %v4028 = vpack.c.b16 %v4006, %v4004
        %v4029 = vpack.c.b16 %v4009, %v4007
        %v4030 = vpack.c.b16 %v4010, %v4008
        %v4031 = vpack.c.b16 %v4013, %v4011
        %v4032 = vpack.c.b16 %v4014, %v4012
        %v4033 = vpack.c.b16 %v4017, %v4015
        %v4034 = vpack.c.b16 %v4018, %v4016
        %4051 = vmatpush.bf16.msra.mxu0 %v4033
        %4052 = vmatpush.bf16.msra.mxu0 %v4031
        %4053 = vmatpush.bf16.msra.mxu0 %v4029
        %4054 = vmatpush.bf16.msra.mxu0 %v4027
        %4055 = vmatpush.bf16.msra.mxu0 %v4025
        %4056 = vmatpush.bf16.msra.mxu0 %v4023
        %4057 = vmatpush.bf16.msra.mxu0 %v4021
        %4058 = vmatpush.bf16.msra.mxu0 %v4019
        %4059 = vmatmul.bf16.gmra.mxu0 %v3965
        %v4060 = vpop.f32.mrf.mxu0
        %v4061 = vadd.f32 %v3967, %v4060
        %v4062 = vpop.f32.mrf.mxu0
        %4063 = vdwg.mxu0
        %4064 = vmatpush.bf16.msra.mxu0 %v4034
        %4065 = vmatpush.bf16.msra.mxu0 %v4032
        %4066 = vmatpush.bf16.msra.mxu0 %v4030
        %4067 = vmatpush.bf16.msra.mxu0 %v4028
        %4068 = vmatpush.bf16.msra.mxu0 %v4026
        %4069 = vmatpush.bf16.msra.mxu0 %v4024
        %4070 = vmatpush.bf16.msra.mxu0 %v4022
        %4071 = vmatpush.bf16.msra.mxu0 %v4020
        %4072 = vmatmul.bf16.gmra.mxu0 %v3965
        %v4073 = vpop.f32.mrf.mxu0
        %v4074 = vadd.f32 %v3968, %v4073
        %v4075 = vpop.f32.mrf.mxu0
        %4076 = vdwg.mxu0
        %v4077 = vmax.f32 %v4061, 0.0
        %v4078 = vmax.f32 %v4074, 0.0
        %s4079 = scalar_lea.vmem %s9, 256
        %v4080 = vld [vmem:[%s4079] sm:$0xf]
        %v4081 = vld [vmem:[%s4079 + $0x4] sm:$0xf]
        %v4082 = vld [vmem:[%s4079 + $0x8] sm:$0xf]
        %v4083 = vld [vmem:[%s4079 + $0xc] sm:$0xf]
        %v4084 = vld [vmem:[%s4079 + $0x10] sm:$0xf]
        %v4085 = vld [vmem:[%s4079 + $0x14] sm:$0xf]
        %v4086 = vld [vmem:[%s4079 + $0x18] sm:$0xf]
        %v4087 = vld [vmem:[%s4079 + $0x1c] sm:$0xf]
        %v4088 = vld [vmem:[%s4079 + $0x20] sm:$0xf]
        %v4089 = vld [vmem:[%s4079 + $0x24] sm:$0xf]
        %v4090 = vld [vmem:[%s4079 + $0x28] sm:$0xf]
        %v4091 = vld [vmem:[%s4079 + $0x2c] sm:$0xf]
        %v4092 = vld [vmem:[%s4079 + $0x30] sm:$0xf]
        %v4093 = vld [vmem:[%s4079 + $0x34] sm:$0xf]
        %v4094 = vld [vmem:[%s4079 + $0x38] sm:$0xf]
        %v4095 = vld [vmem:[%s4079 + $0x3c] sm:$0xf]
        %v4096 = vld [vmem:[%s4079 + $0x40] sm:$0xf]
        %v4097 = vld [vmem:[%s4079 + $0x44] sm:$0xf]
        %v4098 = vld [vmem:[%s4079 + $0x48] sm:$0xf]
        %v4099 = vld [vmem:[%s4079 + $0x4c] sm:$0xf]
        %v4100 = vld [vmem:[%s4079 + $0x50] sm:$0xf]
        %v4101 = vld [vmem:[%s4079 + $0x54] sm:$0xf]
        %v4102 = vld [vmem:[%s4079 + $0x58] sm:$0xf]
        %v4103 = vld [vmem:[%s4079 + $0x5c] sm:$0xf]
        %v4104 = vld [vmem:[%s4079 + $0x60] sm:$0xf]
        %v4105 = vld [vmem:[%s4079 + $0x64] sm:$0xf]
        %v4106 = vld [vmem:[%s4079 + $0x68] sm:$0xf]
        %v4107 = vld [vmem:[%s4079 + $0x6c] sm:$0xf]
        %v4108 = vld [vmem:[%s4079 + $0x70] sm:$0xf]
        %v4109 = vld [vmem:[%s4079 + $0x74] sm:$0xf]
        %v4110 = vld [vmem:[%s4079 + $0x78] sm:$0xf]
        %v4111 = vld [vmem:[%s4079 + $0x7c] sm:$0xf]
        %s4112 = scalar_lea.vmem [#allocation10], 2
        %v4113 = vld [vmem:[%s4112] sm:$0x1]
        %v4114 = vpack.c.bf16 %v4077, %v4077
        %v4115 = vpack.c.bf16 %v4078, %v4078
        %v4117 = vperm.slane %v4113, 0
        %v4151 = vunpack.c.l.b16 %v4080
        %v4152 = vunpack.c.l.b16 %v4081
        %v4153 = vunpack.c.l.b16 %v4082
        %v4154 = vunpack.c.l.b16 %v4083
        %v4155 = vunpack.c.l.b16 %v4084
        %v4156 = vunpack.c.l.b16 %v4085
        %v4157 = vunpack.c.l.b16 %v4086
        %v4158 = vunpack.c.l.b16 %v4087
        %v4159 = vunpack.c.l.b16 %v4088
        %v4160 = vunpack.c.l.b16 %v4089
        %v4161 = vunpack.c.l.b16 %v4090
        %v4162 = vunpack.c.l.b16 %v4091
        %v4163 = vunpack.c.l.b16 %v4092
        %v4164 = vunpack.c.l.b16 %v4093
        %v4165 = vunpack.c.l.b16 %v4094
        %v4166 = vunpack.c.l.b16 %v4095
        %v4167 = vunpack.c.l.b16 %v4096
        %v4168 = vunpack.c.l.b16 %v4097
        %v4169 = vunpack.c.l.b16 %v4098
        %v4170 = vunpack.c.l.b16 %v4099
        %v4171 = vunpack.c.l.b16 %v4100
        %v4172 = vunpack.c.l.b16 %v4101
        %v4173 = vunpack.c.l.b16 %v4102
        %v4174 = vunpack.c.l.b16 %v4103
        %v4175 = vunpack.c.l.b16 %v4104
        %v4176 = vunpack.c.l.b16 %v4105
        %v4177 = vunpack.c.l.b16 %v4106
        %v4178 = vunpack.c.l.b16 %v4107
        %v4179 = vunpack.c.l.b16 %v4108
        %v4180 = vunpack.c.l.b16 %v4109
        %v4181 = vunpack.c.l.b16 %v4110
        %v4182 = vunpack.c.l.b16 %v4111
        %v4183 = vpack.c.b16 %v4152, %v4151
        %v4184 = vpack.c.b16 %v4154, %v4153
        %v4185 = vpack.c.b16 %v4156, %v4155
        %v4186 = vpack.c.b16 %v4158, %v4157
        %v4187 = vpack.c.b16 %v4160, %v4159
        %v4188 = vpack.c.b16 %v4162, %v4161
        %v4189 = vpack.c.b16 %v4164, %v4163
        %v4190 = vpack.c.b16 %v4166, %v4165
        %v4191 = vpack.c.b16 %v4168, %v4167
        %v4192 = vpack.c.b16 %v4170, %v4169
        %v4193 = vpack.c.b16 %v4172, %v4171
        %v4194 = vpack.c.b16 %v4174, %v4173
        %v4195 = vpack.c.b16 %v4176, %v4175
        %v4196 = vpack.c.b16 %v4178, %v4177
        %v4197 = vpack.c.b16 %v4180, %v4179
        %v4198 = vpack.c.b16 %v4182, %v4181
        %4215 = vmatpush.bf16.msra.mxu0 %v4190
        %4216 = vmatpush.bf16.msra.mxu0 %v4189
        %4217 = vmatpush.bf16.msra.mxu0 %v4188
        %4218 = vmatpush.bf16.msra.mxu0 %v4187
        %4219 = vmatpush.bf16.msra.mxu0 %v4186
        %4220 = vmatpush.bf16.msra.mxu0 %v4185
        %4221 = vmatpush.bf16.msra.mxu0 %v4184
        %4222 = vmatpush.bf16.msra.mxu0 %v4183
        %4223 = vmatmul.bf16.gmra.mxu0 %v4114
        %v4224 = vpop.f32.mrf.mxu0
        %v4225 = vadd.f32 %v4117, %v4224
        %v4226 = vpop.f32.mrf.mxu0
        %4227 = vdwg.mxu0
        %4228 = vmatpush.bf16.msra.mxu0 %v4198
        %4229 = vmatpush.bf16.msra.mxu0 %v4197
        %4230 = vmatpush.bf16.msra.mxu0 %v4196
        %4231 = vmatpush.bf16.msra.mxu0 %v4195
        %4232 = vmatpush.bf16.msra.mxu0 %v4194
        %4233 = vmatpush.bf16.msra.mxu0 %v4193
        %4234 = vmatpush.bf16.msra.mxu0 %v4192
        %4235 = vmatpush.bf16.msra.mxu0 %v4191
        %4236 = vmatmul.bf16.gmra.mxu0 %v4115
        %v4237 = vpop.f32.mrf.mxu0
        %v4238 = vadd.f32 %v4225, %v4237
        %v4239 = vpop.f32.mrf.mxu0
        %4240 = vdwg.mxu0
        %v4241 = vadd.f32 %v3945, %v4238
        %s4242 = scalar_lea.vmem [#allocation14], 2
        %v4243 = vld [vmem:[%s4242] sm:$0x1]
        %s4244 = scalar_lea.vmem [#allocation16], 2
        %v4245 = vld [vmem:[%s4244] sm:$0x1]
        %4246 = vadd.xlane.f32.xlu0 %v4241
        %v4247 = vpop.xlane.xlu0 %4246
        %v4248 = vmul.f32 %v4247, %v1981
        %v4249 = vsub.f32 %v4241, %v4248
        %v4250 = vmul.f32 %v4249, %v4249
        %4251 = vadd.xlane.f32.xlu0 %v4250
        %v4252 = vpop.xlane.xlu0 %4251
        %v4253 = vmul.f32 %v4252, %v1981
        %v4254 = vadd.f32 %v4253, 1e-05
        %v4255 = vrsqrt.pop %v4254
        %v4256 = vmul.f32 %v4255, %v4254
        %v4257 = vmul.f32 %v4256, %v4255
        %v4258 = vmul.f32 0.5, %v4257
        %v4259 = vsub.f32 1.5, %v4258
        %v4260 = vmul.f32 %v4255, %v4259
        %vm4261 = vweird.f32 %v4254
        %vm4262 = vweird.f32 %v4255
        %vm4263 = vmor %vm4261, %vm4262
        %v4264 = vsel %vm4263, %v4255, %v4260
        %v4265 = vmul.f32 %v4249, %v4264
        %v4267 = vperm.slane %v4243, 0
        %v4269 = vmul.f32 %v4265, %v4267
        %v4271 = vperm.slane %v4245, 0
        %v4273 = vadd.f32 %v4269, %v4271
        %v4274 = vld [vmem:[%s15] sm:$0xf]
        %v4275 = vld [vmem:[%s15 + $0x4] sm:$0xf]
        %v4276 = vld [vmem:[%s15 + $0x8] sm:$0xf]
        %v4277 = vld [vmem:[%s15 + $0xc] sm:$0xf]
        %v4278 = vld [vmem:[%s15 + $0x10] sm:$0xf]
        %v4279 = vld [vmem:[%s15 + $0x14] sm:$0xf]
        %v4280 = vld [vmem:[%s15 + $0x18] sm:$0xf]
        %v4281 = vld [vmem:[%s15 + $0x1c] sm:$0xf]
        %v4282 = vld [vmem:[%s15 + $0x20] sm:$0xf]
        %v4283 = vld [vmem:[%s15 + $0x24] sm:$0xf]
        %v4284 = vld [vmem:[%s15 + $0x28] sm:$0xf]
        %v4285 = vld [vmem:[%s15 + $0x2c] sm:$0xf]
        %v4286 = vld [vmem:[%s15 + $0x30] sm:$0xf]
        %v4287 = vld [vmem:[%s15 + $0x34] sm:$0xf]
        %v4288 = vld [vmem:[%s15 + $0x38] sm:$0xf]
        %v4289 = vld [vmem:[%s15 + $0x3c] sm:$0xf]
        %v4290 = vld [vmem:[#allocation17] sm:$0x1]
        %v4291 = vpack.c.bf16 %v4273, %v4273
        %v4293 = vperm.slane %v4290, 0
        %v4311 = vunpack.c.l.b16 %v4274
        %v4312 = vunpack.c.l.b16 %v4275
        %v4313 = vunpack.c.l.b16 %v4276
        %v4314 = vunpack.c.l.b16 %v4277
        %v4315 = vunpack.c.l.b16 %v4278
        %v4316 = vunpack.c.l.b16 %v4279
        %v4317 = vunpack.c.l.b16 %v4280
        %v4318 = vunpack.c.l.b16 %v4281
        %v4319 = vunpack.c.l.b16 %v4282
        %v4320 = vunpack.c.l.b16 %v4283
        %v4321 = vunpack.c.l.b16 %v4284
        %v4322 = vunpack.c.l.b16 %v4285
        %v4323 = vunpack.c.l.b16 %v4286
        %v4324 = vunpack.c.l.b16 %v4287
        %v4325 = vunpack.c.l.b16 %v4288
        %v4326 = vunpack.c.l.b16 %v4289
        %v4327 = vpack.c.b16 %v4312, %v4311
        %v4328 = vpack.c.b16 %v4314, %v4313
        %v4329 = vpack.c.b16 %v4316, %v4315
        %v4330 = vpack.c.b16 %v4318, %v4317
        %v4331 = vpack.c.b16 %v4320, %v4319
        %v4332 = vpack.c.b16 %v4322, %v4321
        %v4333 = vpack.c.b16 %v4324, %v4323
        %v4334 = vpack.c.b16 %v4326, %v4325
        %4343 = vmatpush.bf16.msra.mxu0 %v4334
        %4344 = vmatpush.bf16.msra.mxu0 %v4333
        %4345 = vmatpush.bf16.msra.mxu0 %v4332
        %4346 = vmatpush.bf16.msra.mxu0 %v4331
        %4347 = vmatpush.bf16.msra.mxu0 %v4330
        %4348 = vmatpush.bf16.msra.mxu0 %v4329
        %4349 = vmatpush.bf16.msra.mxu0 %v4328
        %4350 = vmatpush.bf16.msra.mxu0 %v4327
        %4351 = vmatmul.bf16.gmra.mxu0 %v4291
        %v4352 = vpop.f32.mrf.mxu0
        %v4353 = vadd.f32 %v4293, %v4352
        %v4354 = vpop.f32.mrf.mxu0
        %4355 = vdwg.mxu0
        %v4356 = vrot.slane %v4353, 4
        %v4357 = vadd.f32 %v4353, %v4356
        %v4358 = vrot.slane %v4357, 2
        %v4359 = vadd.f32 %v4357, %v4358
        %v4360 = vrot.slane %v4359, 1
        %v4361 = vadd.f32 %v4359, %v4360
        %v4362 = vrcp.pop 8.0
        %v4363 = vmul.f32 8.0, %v4362
        %v4364 = vsub.f32 1.0, %v4363
        %v4365 = vmul.f32 %v4362, %v4364
        %v4366 = vadd.f32 %v4362, %v4365
        %vm4367 = vweird.f32 %v4362
        %v4368 = vsel %vm4367, %v4362, %v4366
        %v4369 = vmul.f32 %v4361, %v4368
        %4370 = vst [vmem:[%s702] sm:$0x1] %v4369
        %s4371 = sand.u32 %s407, 1
        %s4372 = scalar_lea.sflag [#allocation4], %s4371
        %s4373 = sand.u32 %s407, 1
        %s4374 = scalar_lea.vmem [#allocation19], %s4373
        // Predicated region
        $region129: #{observation_transformer_forward.1} parent=87 // pred_check
          %p4375 = pneg %p417
        $region130: #{observation_transformer_forward.1} parent=87 // pred_check_branch
          %4377 = sbr.rel (%p4375) target = $region132
        $region131: #{observation_transformer_forward.1} parent=87 // pred_region
          %4379 = vsyncadd %s4372, 0
          %s4380 = scalar_lea.hbm %s17, %s37
          %s4382 = sshll.u32 %s4374, 4
          %s4383 = int_to_ptr.vmem [resolvable:$true] %s4382
          %s4384 = sshll.u32 %s4380, 4
          %s4385 = int_to_ptr.hbm [resolvable:$true] %s4384
          %4387 = dma.vmem_to_hbm [thread:$0]  %s4383, 16, %s4385, %s4372
        $region132: #{observation_transformer_forward.1} parent=87 // pred_fallthru
          _
      $region88: #{observation_transformer_forward.1} parent=5 // pred_fallthru
        _
      %p4388 = scmp.le.s32.totalorder 2, %s32
      // Predicated region
      $region133: #{observation_transformer_forward.1} parent=5 // pred_check
        %p4389 = pneg %p4388
      $region134: #{observation_transformer_forward.1} parent=5 // pred_check_branch
        %4391 = sbr.rel (%p4389) target = $region136
      $region135: #{observation_transformer_forward.1} parent=5 // pred_region
        %s4392 = ssub.s32 %s32, 2
        // Predicated region
        $region137: #{observation_transformer_forward.1} parent=135 // pred_check
          %p4393 = pneg %p423
        $region138: #{observation_transformer_forward.1} parent=135 // pred_check_branch
          %4395 = sbr.rel (%p4393) target = $region140
        $region139: #{observation_transformer_forward.1} parent=135 // pred_region
          %s4396 = sand.u32 %s408, 1
          %s4397 = scalar_lea.sflag [#allocation4], %s4396
          %s4398 = sand.u32 %s408, 1
          %s4399 = scalar_lea.vmem [#allocation19], %s4398
          %4401 = dma.done %s4397, 16
        $region140: #{observation_transformer_forward.1} parent=135 // pred_fallthru
          _
      $region136: #{observation_transformer_forward.1} parent=5 // pred_fallthru
        _
    $region6: #{observation_transformer_forward.1} parent=1 // loop_footer
      %s36 = sadd.s32 1, %s32
    $region7: #{observation_transformer_forward.1} parent=1 // loop_footer_branch
      %31 = sbr.rel target = $region3
    $region8: #{observation_transformer_forward.1} parent=1 // loop_exit
      _
    %4402 = vsyncpa [#allocation3], 1
    %s4403 = scalar_lea.sflag [#allocation3], 1
    %4404 = vsyncpa %s4403, 1
    %4405 = vsyncpa [#allocation6], 1
    %4406 = vsyncpa [#allocation9], 1
    %4407 = vsyncpa [#allocation12], 1
    %4408 = vsyncpa [#allocation15], 1
    %4409 = vsyncpa [#allocation18], 1
    %4410 = vsyncpa [#allocation4], 1
    %s4411 = scalar_lea.sflag [#allocation4], 1
    %4412 = vsyncpa %s4411, 1

</llo_original>
